<compile_context>
chip_gen: v6e
topology: v6e:2x2x1
jax: 0.10.0
libtpu: 0.0.40
codegen_flags: <defaults>
</compile_context>

<pallas_src>
import numpy as np

import jax
import jax.numpy as jnp
from jax import lax
from jax.experimental import pallas as pl
from jax.experimental.pallas import tpu as pltpu


# --------------------------- fused conv + pool ------------------------------

def _conv5x5_pool_kernel(x_ref, w_ref, b_ref, o_ref, row_ref):
    """Fused 5x5 'same' conv + bias + 2x2 max-pool for ONE image (one grid step).

    x_ref  : (1, H+4, W+4, Cin)    bf16  spatially pre-padded NHWC input
    w_ref  : (25*Cin, Cout)        bf16  rows ordered (dy, dx, cin)
    b_ref  : (1, Cout)             f32
    o_ref  : (1, H//2, W//2, Cout) bf16  pooled output
    row_ref: (W, Cout)             f32   VMEM scratch (one conv-output row)
    """
    _, Hp, Wp, cin = x_ref.shape
    H, W = Hp - 4, Wp - 4
    _, Ho, Wo, cout = o_ref.shape

    def conv_row(h):
        # im2col for one output row, built entirely in VMEM: 25 shifted
        # (W, Cin) slices concatenated along the lane (channel) dim.
        taps = [x_ref[0, h + dy, dx:dx + W, :]
                for dy in range(5) for dx in range(5)]
        lhs = jnp.concatenate(taps, axis=-1)                  # (W, 25*Cin) bf16
        return jnp.dot(lhs, w_ref[...],
                       preferred_element_type=jnp.float32)    # (W, Cout) f32

    def body(ho, carry):
        h = 2 * ho
        # max over the two conv rows of this pooling window
        row_ref[...] = jnp.maximum(conv_row(h), conv_row(h + 1))
        # max over adjacent columns via strided VMEM reads, then add bias
        pooled = jnp.maximum(row_ref[pl.ds(0, Wo, stride=2), :],
                             row_ref[pl.ds(1, Wo, stride=2), :]) + b_ref[...]
        o_ref[0, ho, :, :] = pooled.astype(o_ref.dtype)
        return carry

    lax.fori_loop(0, Ho, body, 0)


def conv5x5_pool(x, w, b):
    """x: (B, H, W, Cin) bf16 NHWC; w: (Cout, Cin, 5, 5) (PyTorch layout); b: (Cout,).
    Returns maxpool2x2(conv2d(x, w, b, stride=1, padding=2)) as bf16 NHWC."""
    B, H, W, Cin = x.shape
    Cout = w.shape[0]
    assert H % 2 == 0 and W % 2 == 0, "even spatial dims required for 2x2 pool"
    Ho, Wo = H // 2, W // 2

    xp = jnp.pad(x, ((0, 0), (2, 2), (2, 2), (0, 0)))
    # (Cout, Cin, 5, 5) -> (KH, KW, Cin, Cout) -> (25*Cin, Cout); rows in (dy, dx, cin) order
    wmat = jnp.transpose(w, (2, 3, 1, 0)).reshape(25 * Cin, Cout).astype(jnp.bfloat16)
    bias = b.reshape(1, Cout).astype(jnp.float32)

    return pl.pallas_call(
        _conv5x5_pool_kernel,
        out_shape=jax.ShapeDtypeStruct((B, Ho, Wo, Cout), jnp.bfloat16),
        grid=(B,),
        in_specs=[
            pl.BlockSpec((1, H + 4, W + 4, Cin), lambda i: (i, 0, 0, 0)),
            pl.BlockSpec((25 * Cin, Cout), lambda i: (0, 0)),
            pl.BlockSpec((1, Cout), lambda i: (0, 0)),
        ],
        out_specs=pl.BlockSpec((1, Ho, Wo, Cout), lambda i: (i, 0, 0, 0)),
        scratch_shapes=[pltpu.VMEM((W, Cout), jnp.float32)],
        compiler_params=pltpu.CompilerParams(
            dimension_semantics=("parallel",)),
    )(xp, wmat, bias)


# ------------------------------ fused FC head -------------------------------

def _fc2_kernel(x_ref, w1_ref, b1_ref, w2_ref, b2_ref, o_ref):
    # x: (B, 1024) bf16, w1: (1024, 64) bf16, b1: (1, 64) f32,
    # w2: (64, 10) f32,  b2: (1, 10) f32   ->   o: (B, 10) f32
    h = jnp.dot(x_ref[...], w1_ref[...],
                preferred_element_type=jnp.float32) + b1_ref[...]
    o_ref[...] = jnp.dot(h, w2_ref[...],
                         preferred_element_type=jnp.float32) + b2_ref[...]


def fc_head(x, wl1, bl1, wl2, bl2):
    B = x.shape[0]
    return pl.pallas_call(
        _fc2_kernel,
        out_shape=jax.ShapeDtypeStruct((B, wl2.shape[1]), jnp.float32),
    )(x.astype(jnp.bfloat16),
      wl1.astype(jnp.bfloat16),
      bl1.reshape(1, -1).astype(jnp.float32),
      wl2.astype(jnp.float32),
      bl2.reshape(1, -1).astype(jnp.float32))


# ------------------------------- full model ---------------------------------

# permutation: NHWC-flatten index (h, w, c) -> PyTorch NCHW-flatten index (c, h, w)
_FC_PERM = np.transpose(
    np.arange(64 * 4 * 4).reshape(64, 4, 4), (1, 2, 0)).reshape(-1).astype(np.int32)


@jax.jit
def model_forward(x_nchw, params):
    # PyTorch-style NCHW in; compute in NHWC / bf16 (f32 accumulation in-kernel).
    x = jnp.transpose(x_nchw, (0, 2, 3, 1)).astype(jnp.bfloat16)
    x = conv5x5_pool(x, params["w1"], params["b1"])   # (B, 16, 16, 32)
    x = conv5x5_pool(x, params["w2"], params["b2"])   # (B, 8, 8, 32)
    x = conv5x5_pool(x, params["w3"], params["b3"])   # (B, 4, 4, 64)
    B = x.shape[0]
    flat = x.reshape(B, -1)                           # NHWC flatten: (h, w, c) order
    # wl1 rows are stored for PyTorch's NCHW flatten order; permute once (tiny gather)
    wl1_hwc = params["wl1"][_FC_PERM]
    return fc_head(flat, wl1_hwc, params["bl1"], params["wl2"], params["bl2"])


# -------------------------------- params ------------------------------------

def init_params(key):
    def uinit(k, shape, fan_in):
        bound = 1.0 / (fan_in ** 0.5)
        return jax.random.uniform(k, shape, jnp.float32, -bound, bound)

    ks = jax.random.split(key, 10)
    return {
        # conv weights in PyTorch layout [Cout, Cin, KH, KW]
        "w1": uinit(ks[0], (32, 3, 5, 5), 3 * 25),
        "b1": uinit(ks[1], (32,), 3 * 25),
        "w2": uinit(ks[2], (32, 32, 5, 5), 32 * 25),
        "b2": uinit(ks[3], (32,), 32 * 25),
        "w3": uinit(ks[4], (64, 32, 5, 5), 32 * 25),
        "b3": uinit(ks[5], (64,), 32 * 25),
        # linear weights stored as [in, out] (transpose of PyTorch [out, in]);
        # the "in" index follows PyTorch's NCHW flatten order (c, h, w).
        "wl1": uinit(ks[6], (64 * 4 * 4, 64), 64 * 4 * 4),
        "bl1": uinit(ks[7], (64,), 64 * 4 * 4),
        "wl2": uinit(ks[8], (64, 10), 64),
        "bl2": uinit(ks[9], (10,), 64),
    }


if __name__ == "__main__":
    key = jax.random.PRNGKey(0)
    kx, kp = jax.random.split(key)
    # the module implies 32x32 spatial input (3 pools: 32->16->8->4, Linear in = 64*4*4)
    x = jax.random.normal(kx, (2, 3, 32, 32), jnp.float32)
    params = init_params(kp)

    out = model_forward(x, params)
    jax.block_until_ready(out)
    assert out.shape == (2, 10), out.shape
    assert bool(jnp.all(jnp.isfinite(out)))
    print("KERNEL_OK")
</pallas_src>

<mosaic_0001>
module attributes {stable_mosaic.version = 11 : i64} {
  func.func @_conv5x5_pool_kernel(%arg0: i32, %arg1: memref<1x36x36x3xbf16, #tpu.memory_space<vmem>>, %arg2: memref<75x32xbf16, #tpu.memory_space<vmem>>, %arg3: memref<1x32xf32, #tpu.memory_space<vmem>>, %arg4: memref<1x16x16x32xbf16, #tpu.memory_space<vmem>>, %arg5: memref<32x32xf32, #tpu.memory_space<vmem>>) attributes {dimension_semantics = [#tpu.dimension_semantics<parallel>], iteration_bounds = array<i64: 2>, scalar_prefetch = 0 : i64, scratch_operands = 1 : i64, tpu.core_type = #tpu.core_type<tc>, window_params = [{transform_indices = @transform_0, window_bounds = array<i64: 1, 36, 36, 3>}, {pipeline_mode = #tpu.pipeline_mode<synchronous>, transform_indices = @transform_1, window_bounds = array<i64: 75, 32>}, {pipeline_mode = #tpu.pipeline_mode<synchronous>, transform_indices = @transform_2, window_bounds = array<i64: 1, 32>}, {transform_indices = @transform_3, window_bounds = array<i64: 1, 16, 16, 32>}]} {
    %c0_i32 = arith.constant 0 : i32
    %c16_i32 = arith.constant 16 : i32
    %0 = arith.addi %c0_i32, %c16_i32 : i32
    %c1_i32 = arith.constant 1 : i32
    scf.for %arg6 = %c0_i32 to %0 step %c1_i32  : i32 {
      %c2_i32 = arith.constant 2 : i32
      %1 = arith.muli %c2_i32, %arg6 : i32
      %c0_i32_1 = arith.constant 0 : i32
      %2 = arith.addi %1, %c0_i32_1 : i32
      %c0 = arith.constant 0 : index
      %3 = arith.index_cast %2 : i32 to index
      %c0_2 = arith.constant 0 : index
      %c0_3 = arith.constant 0 : index
      %4 = vector.load %arg1[%c0, %3, %c0_2, %c0_3] : memref<1x36x36x3xbf16, #tpu.memory_space<vmem>>, vector<1x1x32x3xbf16>
      %5 = vector.shape_cast %4 : vector<1x1x32x3xbf16> to vector<32x3xbf16>
      %c0_i32_4 = arith.constant 0 : i32
      %6 = arith.addi %1, %c0_i32_4 : i32
      %c0_5 = arith.constant 0 : index
      %7 = arith.index_cast %6 : i32 to index
      %c1 = arith.constant 1 : index
      %c0_6 = arith.constant 0 : index
      %8 = vector.load %arg1[%c0_5, %7, %c1, %c0_6] : memref<1x36x36x3xbf16, #tpu.memory_space<vmem>>, vector<1x1x32x3xbf16>
      %9 = vector.shape_cast %8 : vector<1x1x32x3xbf16> to vector<32x3xbf16>
      %c0_i32_7 = arith.constant 0 : i32
      %10 = arith.addi %1, %c0_i32_7 : i32
      %c0_8 = arith.constant 0 : index
      %11 = arith.index_cast %10 : i32 to index
      %c2 = arith.constant 2 : index
      %c0_9 = arith.constant 0 : index
      %12 = vector.load %arg1[%c0_8, %11, %c2, %c0_9] : memref<1x36x36x3xbf16, #tpu.memory_space<vmem>>, vector<1x1x32x3xbf16>
      %13 = vector.shape_cast %12 : vector<1x1x32x3xbf16> to vector<32x3xbf16>
      %c0_i32_10 = arith.constant 0 : i32
      %14 = arith.addi %1, %c0_i32_10 : i32
      %c0_11 = arith.constant 0 : index
      %15 = arith.index_cast %14 : i32 to index
      %c3 = arith.constant 3 : index
      %c0_12 = arith.constant 0 : index
      %16 = vector.load %arg1[%c0_11, %15, %c3, %c0_12] : memref<1x36x36x3xbf16, #tpu.memory_space<vmem>>, vector<1x1x32x3xbf16>
      %17 = vector.shape_cast %16 : vector<1x1x32x3xbf16> to vector<32x3xbf16>
      %c0_i32_13 = arith.constant 0 : i32
      %18 = arith.addi %1, %c0_i32_13 : i32
      %c0_14 = arith.constant 0 : index
      %19 = arith.index_cast %18 : i32 to index
      %c4 = arith.constant 4 : index
      %c0_15 = arith.constant 0 : index
      %20 = vector.load %arg1[%c0_14, %19, %c4, %c0_15] : memref<1x36x36x3xbf16, #tpu.memory_space<vmem>>, vector<1x1x32x3xbf16>
      %21 = vector.shape_cast %20 : vector<1x1x32x3xbf16> to vector<32x3xbf16>
      %c1_i32_16 = arith.constant 1 : i32
      %22 = arith.addi %1, %c1_i32_16 : i32
      %c0_17 = arith.constant 0 : index
      %23 = arith.index_cast %22 : i32 to index
      %c0_18 = arith.constant 0 : index
      %c0_19 = arith.constant 0 : index
      %24 = vector.load %arg1[%c0_17, %23, %c0_18, %c0_19] : memref<1x36x36x3xbf16, #tpu.memory_space<vmem>>, vector<1x1x32x3xbf16>
      %25 = vector.shape_cast %24 : vector<1x1x32x3xbf16> to vector<32x3xbf16>
      %c1_i32_20 = arith.constant 1 : i32
      %26 = arith.addi %1, %c1_i32_20 : i32
      %c0_21 = arith.constant 0 : index
      %27 = arith.index_cast %26 : i32 to index
      %c1_22 = arith.constant 1 : index
      %c0_23 = arith.constant 0 : index
      %28 = vector.load %arg1[%c0_21, %27, %c1_22, %c0_23] : memref<1x36x36x3xbf16, #tpu.memory_space<vmem>>, vector<1x1x32x3xbf16>
      %29 = vector.shape_cast %28 : vector<1x1x32x3xbf16> to vector<32x3xbf16>
      %c1_i32_24 = arith.constant 1 : i32
      %30 = arith.addi %1, %c1_i32_24 : i32
      %c0_25 = arith.constant 0 : index
      %31 = arith.index_cast %30 : i32 to index
      %c2_26 = arith.constant 2 : index
      %c0_27 = arith.constant 0 : index
      %32 = vector.load %arg1[%c0_25, %31, %c2_26, %c0_27] : memref<1x36x36x3xbf16, #tpu.memory_space<vmem>>, vector<1x1x32x3xbf16>
      %33 = vector.shape_cast %32 : vector<1x1x32x3xbf16> to vector<32x3xbf16>
      %c1_i32_28 = arith.constant 1 : i32
      %34 = arith.addi %1, %c1_i32_28 : i32
      %c0_29 = arith.constant 0 : index
      %35 = arith.index_cast %34 : i32 to index
      %c3_30 = arith.constant 3 : index
      %c0_31 = arith.constant 0 : index
      %36 = vector.load %arg1[%c0_29, %35, %c3_30, %c0_31] : memref<1x36x36x3xbf16, #tpu.memory_space<vmem>>, vector<1x1x32x3xbf16>
      %37 = vector.shape_cast %36 : vector<1x1x32x3xbf16> to vector<32x3xbf16>
      %c1_i32_32 = arith.constant 1 : i32
      %38 = arith.addi %1, %c1_i32_32 : i32
      %c0_33 = arith.constant 0 : index
      %39 = arith.index_cast %38 : i32 to index
      %c4_34 = arith.constant 4 : index
      %c0_35 = arith.constant 0 : index
      %40 = vector.load %arg1[%c0_33, %39, %c4_34, %c0_35] : memref<1x36x36x3xbf16, #tpu.memory_space<vmem>>, vector<1x1x32x3xbf16>
      %41 = vector.shape_cast %40 : vector<1x1x32x3xbf16> to vector<32x3xbf16>
      %c2_i32_36 = arith.constant 2 : i32
      %42 = arith.addi %1, %c2_i32_36 : i32
      %c0_37 = arith.constant 0 : index
      %43 = arith.index_cast %42 : i32 to index
      %c0_38 = arith.constant 0 : index
      %c0_39 = arith.constant 0 : index
      %44 = vector.load %arg1[%c0_37, %43, %c0_38, %c0_39] : memref<1x36x36x3xbf16, #tpu.memory_space<vmem>>, vector<1x1x32x3xbf16>
      %45 = vector.shape_cast %44 : vector<1x1x32x3xbf16> to vector<32x3xbf16>
      %c2_i32_40 = arith.constant 2 : i32
      %46 = arith.addi %1, %c2_i32_40 : i32
      %c0_41 = arith.constant 0 : index
      %47 = arith.index_cast %46 : i32 to index
      %c1_42 = arith.constant 1 : index
      %c0_43 = arith.constant 0 : index
      %48 = vector.load %arg1[%c0_41, %47, %c1_42, %c0_43] : memref<1x36x36x3xbf16, #tpu.memory_space<vmem>>, vector<1x1x32x3xbf16>
      %49 = vector.shape_cast %48 : vector<1x1x32x3xbf16> to vector<32x3xbf16>
      %c2_i32_44 = arith.constant 2 : i32
      %50 = arith.addi %1, %c2_i32_44 : i32
      %c0_45 = arith.constant 0 : index
      %51 = arith.index_cast %50 : i32 to index
      %c2_46 = arith.constant 2 : index
      %c0_47 = arith.constant 0 : index
      %52 = vector.load %arg1[%c0_45, %51, %c2_46, %c0_47] : memref<1x36x36x3xbf16, #tpu.memory_space<vmem>>, vector<1x1x32x3xbf16>
      %53 = vector.shape_cast %52 : vector<1x1x32x3xbf16> to vector<32x3xbf16>
      %c2_i32_48 = arith.constant 2 : i32
      %54 = arith.addi %1, %c2_i32_48 : i32
      %c0_49 = arith.constant 0 : index
      %55 = arith.index_cast %54 : i32 to index
      %c3_50 = arith.constant 3 : index
      %c0_51 = arith.constant 0 : index
      %56 = vector.load %arg1[%c0_49, %55, %c3_50, %c0_51] : memref<1x36x36x3xbf16, #tpu.memory_space<vmem>>, vector<1x1x32x3xbf16>
      %57 = vector.shape_cast %56 : vector<1x1x32x3xbf16> to vector<32x3xbf16>
      %c2_i32_52 = arith.constant 2 : i32
      %58 = arith.addi %1, %c2_i32_52 : i32
      %c0_53 = arith.constant 0 : index
      %59 = arith.index_cast %58 : i32 to index
      %c4_54 = arith.constant 4 : index
      %c0_55 = arith.constant 0 : index
      %60 = vector.load %arg1[%c0_53, %59, %c4_54, %c0_55] : memref<1x36x36x3xbf16, #tpu.memory_space<vmem>>, vector<1x1x32x3xbf16>
      %61 = vector.shape_cast %60 : vector<1x1x32x3xbf16> to vector<32x3xbf16>
      %c3_i32 = arith.constant 3 : i32
      %62 = arith.addi %1, %c3_i32 : i32
      %c0_56 = arith.constant 0 : index
      %63 = arith.index_cast %62 : i32 to index
      %c0_57 = arith.constant 0 : index
      %c0_58 = arith.constant 0 : index
      %64 = vector.load %arg1[%c0_56, %63, %c0_57, %c0_58] : memref<1x36x36x3xbf16, #tpu.memory_space<vmem>>, vector<1x1x32x3xbf16>
      %65 = vector.shape_cast %64 : vector<1x1x32x3xbf16> to vector<32x3xbf16>
      %c3_i32_59 = arith.constant 3 : i32
      %66 = arith.addi %1, %c3_i32_59 : i32
      %c0_60 = arith.constant 0 : index
      %67 = arith.index_cast %66 : i32 to index
      %c1_61 = arith.constant 1 : index
      %c0_62 = arith.constant 0 : index
      %68 = vector.load %arg1[%c0_60, %67, %c1_61, %c0_62] : memref<1x36x36x3xbf16, #tpu.memory_space<vmem>>, vector<1x1x32x3xbf16>
      %69 = vector.shape_cast %68 : vector<1x1x32x3xbf16> to vector<32x3xbf16>
      %c3_i32_63 = arith.constant 3 : i32
      %70 = arith.addi %1, %c3_i32_63 : i32
      %c0_64 = arith.constant 0 : index
      %71 = arith.index_cast %70 : i32 to index
      %c2_65 = arith.constant 2 : index
      %c0_66 = arith.constant 0 : index
      %72 = vector.load %arg1[%c0_64, %71, %c2_65, %c0_66] : memref<1x36x36x3xbf16, #tpu.memory_space<vmem>>, vector<1x1x32x3xbf16>
      %73 = vector.shape_cast %72 : vector<1x1x32x3xbf16> to vector<32x3xbf16>
      %c3_i32_67 = arith.constant 3 : i32
      %74 = arith.addi %1, %c3_i32_67 : i32
      %c0_68 = arith.constant 0 : index
      %75 = arith.index_cast %74 : i32 to index
      %c3_69 = arith.constant 3 : index
      %c0_70 = arith.constant 0 : index
      %76 = vector.load %arg1[%c0_68, %75, %c3_69, %c0_70] : memref<1x36x36x3xbf16, #tpu.memory_space<vmem>>, vector<1x1x32x3xbf16>
      %77 = vector.shape_cast %76 : vector<1x1x32x3xbf16> to vector<32x3xbf16>
      %c3_i32_71 = arith.constant 3 : i32
      %78 = arith.addi %1, %c3_i32_71 : i32
      %c0_72 = arith.constant 0 : index
      %79 = arith.index_cast %78 : i32 to index
      %c4_73 = arith.constant 4 : index
      %c0_74 = arith.constant 0 : index
      %80 = vector.load %arg1[%c0_72, %79, %c4_73, %c0_74] : memref<1x36x36x3xbf16, #tpu.memory_space<vmem>>, vector<1x1x32x3xbf16>
      %81 = vector.shape_cast %80 : vector<1x1x32x3xbf16> to vector<32x3xbf16>
      %c4_i32 = arith.constant 4 : i32
      %82 = arith.addi %1, %c4_i32 : i32
      %c0_75 = arith.constant 0 : index
      %83 = arith.index_cast %82 : i32 to index
      %c0_76 = arith.constant 0 : index
      %c0_77 = arith.constant 0 : index
      %84 = vector.load %arg1[%c0_75, %83, %c0_76, %c0_77] : memref<1x36x36x3xbf16, #tpu.memory_space<vmem>>, vector<1x1x32x3xbf16>
      %85 = vector.shape_cast %84 : vector<1x1x32x3xbf16> to vector<32x3xbf16>
      %c4_i32_78 = arith.constant 4 : i32
      %86 = arith.addi %1, %c4_i32_78 : i32
      %c0_79 = arith.constant 0 : index
      %87 = arith.index_cast %86 : i32 to index
      %c1_80 = arith.constant 1 : index
      %c0_81 = arith.constant 0 : index
      %88 = vector.load %arg1[%c0_79, %87, %c1_80, %c0_81] : memref<1x36x36x3xbf16, #tpu.memory_space<vmem>>, vector<1x1x32x3xbf16>
      %89 = vector.shape_cast %88 : vector<1x1x32x3xbf16> to vector<32x3xbf16>
      %c4_i32_82 = arith.constant 4 : i32
      %90 = arith.addi %1, %c4_i32_82 : i32
      %c0_83 = arith.constant 0 : index
      %91 = arith.index_cast %90 : i32 to index
      %c2_84 = arith.constant 2 : index
      %c0_85 = arith.constant 0 : index
      %92 = vector.load %arg1[%c0_83, %91, %c2_84, %c0_85] : memref<1x36x36x3xbf16, #tpu.memory_space<vmem>>, vector<1x1x32x3xbf16>
      %93 = vector.shape_cast %92 : vector<1x1x32x3xbf16> to vector<32x3xbf16>
      %c4_i32_86 = arith.constant 4 : i32
      %94 = arith.addi %1, %c4_i32_86 : i32
      %c0_87 = arith.constant 0 : index
      %95 = arith.index_cast %94 : i32 to index
      %c3_88 = arith.constant 3 : index
      %c0_89 = arith.constant 0 : index
      %96 = vector.load %arg1[%c0_87, %95, %c3_88, %c0_89] : memref<1x36x36x3xbf16, #tpu.memory_space<vmem>>, vector<1x1x32x3xbf16>
      %97 = vector.shape_cast %96 : vector<1x1x32x3xbf16> to vector<32x3xbf16>
      %c4_i32_90 = arith.constant 4 : i32
      %98 = arith.addi %1, %c4_i32_90 : i32
      %c0_91 = arith.constant 0 : index
      %99 = arith.index_cast %98 : i32 to index
      %c4_92 = arith.constant 4 : index
      %c0_93 = arith.constant 0 : index
      %100 = vector.load %arg1[%c0_91, %99, %c4_92, %c0_93] : memref<1x36x36x3xbf16, #tpu.memory_space<vmem>>, vector<1x1x32x3xbf16>
      %101 = vector.shape_cast %100 : vector<1x1x32x3xbf16> to vector<32x3xbf16>
      %102 = tpu.concatenate %5, %9, %13, %17, %21, %25, %29, %33, %37, %41, %45, %49, %53, %57, %61, %65 in 1 : vector<32x3xbf16>, vector<32x3xbf16>, vector<32x3xbf16>, vector<32x3xbf16>, vector<32x3xbf16>, vector<32x3xbf16>, vector<32x3xbf16>, vector<32x3xbf16>, vector<32x3xbf16>, vector<32x3xbf16>, vector<32x3xbf16>, vector<32x3xbf16>, vector<32x3xbf16>, vector<32x3xbf16>, vector<32x3xbf16>, vector<32x3xbf16> -> vector<32x48xbf16>
      %103 = tpu.concatenate %69, %73, %77, %81, %85, %89, %93, %97, %101 in 1 : vector<32x3xbf16>, vector<32x3xbf16>, vector<32x3xbf16>, vector<32x3xbf16>, vector<32x3xbf16>, vector<32x3xbf16>, vector<32x3xbf16>, vector<32x3xbf16>, vector<32x3xbf16> -> vector<32x27xbf16>
      %104 = tpu.concatenate %102, %103 in 1 : vector<32x48xbf16>, vector<32x27xbf16> -> vector<32x75xbf16>
      %c0_94 = arith.constant 0 : index
      %c0_95 = arith.constant 0 : index
      %105 = vector.load %arg2[%c0_94, %c0_95] : memref<75x32xbf16, #tpu.memory_space<vmem>>, vector<75x32xbf16>
      %cst = arith.constant dense<0.000000e+00> : vector<32x32xf32>
      %106 = tpu.matmul %104, %105, %cst {dimension_numbers = #tpu.dot_dimension_numbers<[1], [0], [0], [1], [0, 0, 1, 1], [], []>} : vector<32x75xbf16>, vector<75x32xbf16>, vector<32x32xf32> -> vector<32x32xf32>
      %c1_i32_96 = arith.constant 1 : i32
      %107 = arith.addi %1, %c1_i32_96 : i32
      %c0_i32_97 = arith.constant 0 : i32
      %108 = arith.addi %107, %c0_i32_97 : i32
      %c0_98 = arith.constant 0 : index
      %109 = arith.index_cast %108 : i32 to index
      %c0_99 = arith.constant 0 : index
      %c0_100 = arith.constant 0 : index
      %110 = vector.load %arg1[%c0_98, %109, %c0_99, %c0_100] : memref<1x36x36x3xbf16, #tpu.memory_space<vmem>>, vector<1x1x32x3xbf16>
      %111 = vector.shape_cast %110 : vector<1x1x32x3xbf16> to vector<32x3xbf16>
      %c0_i32_101 = arith.constant 0 : i32
      %112 = arith.addi %107, %c0_i32_101 : i32
      %c0_102 = arith.constant 0 : index
      %113 = arith.index_cast %112 : i32 to index
      %c1_103 = arith.constant 1 : index
      %c0_104 = arith.constant 0 : index
      %114 = vector.load %arg1[%c0_102, %113, %c1_103, %c0_104] : memref<1x36x36x3xbf16, #tpu.memory_space<vmem>>, vector<1x1x32x3xbf16>
      %115 = vector.shape_cast %114 : vector<1x1x32x3xbf16> to vector<32x3xbf16>
      %c0_i32_105 = arith.constant 0 : i32
      %116 = arith.addi %107, %c0_i32_105 : i32
      %c0_106 = arith.constant 0 : index
      %117 = arith.index_cast %116 : i32 to index
      %c2_107 = arith.constant 2 : index
      %c0_108 = arith.constant 0 : index
      %118 = vector.load %arg1[%c0_106, %117, %c2_107, %c0_108] : memref<1x36x36x3xbf16, #tpu.memory_space<vmem>>, vector<1x1x32x3xbf16>
      %119 = vector.shape_cast %118 : vector<1x1x32x3xbf16> to vector<32x3xbf16>
      %c0_i32_109 = arith.constant 0 : i32
      %120 = arith.addi %107, %c0_i32_109 : i32
      %c0_110 = arith.constant 0 : index
      %121 = arith.index_cast %120 : i32 to index
      %c3_111 = arith.constant 3 : index
      %c0_112 = arith.constant 0 : index
      %122 = vector.load %arg1[%c0_110, %121, %c3_111, %c0_112] : memref<1x36x36x3xbf16, #tpu.memory_space<vmem>>, vector<1x1x32x3xbf16>
      %123 = vector.shape_cast %122 : vector<1x1x32x3xbf16> to vector<32x3xbf16>
      %c0_i32_113 = arith.constant 0 : i32
      %124 = arith.addi %107, %c0_i32_113 : i32
      %c0_114 = arith.constant 0 : index
      %125 = arith.index_cast %124 : i32 to index
      %c4_115 = arith.constant 4 : index
      %c0_116 = arith.constant 0 : index
      %126 = vector.load %arg1[%c0_114, %125, %c4_115, %c0_116] : memref<1x36x36x3xbf16, #tpu.memory_space<vmem>>, vector<1x1x32x3xbf16>
      %127 = vector.shape_cast %126 : vector<1x1x32x3xbf16> to vector<32x3xbf16>
      %c1_i32_117 = arith.constant 1 : i32
      %128 = arith.addi %107, %c1_i32_117 : i32
      %c0_118 = arith.constant 0 : index
      %129 = arith.index_cast %128 : i32 to index
      %c0_119 = arith.constant 0 : index
      %c0_120 = arith.constant 0 : index
      %130 = vector.load %arg1[%c0_118, %129, %c0_119, %c0_120] : memref<1x36x36x3xbf16, #tpu.memory_space<vmem>>, vector<1x1x32x3xbf16>
      %131 = vector.shape_cast %130 : vector<1x1x32x3xbf16> to vector<32x3xbf16>
      %c1_i32_121 = arith.constant 1 : i32
      %132 = arith.addi %107, %c1_i32_121 : i32
      %c0_122 = arith.constant 0 : index
      %133 = arith.index_cast %132 : i32 to index
      %c1_123 = arith.constant 1 : index
      %c0_124 = arith.constant 0 : index
      %134 = vector.load %arg1[%c0_122, %133, %c1_123, %c0_124] : memref<1x36x36x3xbf16, #tpu.memory_space<vmem>>, vector<1x1x32x3xbf16>
      %135 = vector.shape_cast %134 : vector<1x1x32x3xbf16> to vector<32x3xbf16>
      %c1_i32_125 = arith.constant 1 : i32
      %136 = arith.addi %107, %c1_i32_125 : i32
      %c0_126 = arith.constant 0 : index
      %137 = arith.index_cast %136 : i32 to index
      %c2_127 = arith.constant 2 : index
      %c0_128 = arith.constant 0 : index
      %138 = vector.load %arg1[%c0_126, %137, %c2_127, %c0_128] : memref<1x36x36x3xbf16, #tpu.memory_space<vmem>>, vector<1x1x32x3xbf16>
      %139 = vector.shape_cast %138 : vector<1x1x32x3xbf16> to vector<32x3xbf16>
      %c1_i32_129 = arith.constant 1 : i32
      %140 = arith.addi %107, %c1_i32_129 : i32
      %c0_130 = arith.constant 0 : index
      %141 = arith.index_cast %140 : i32 to index
      %c3_131 = arith.constant 3 : index
      %c0_132 = arith.constant 0 : index
      %142 = vector.load %arg1[%c0_130, %141, %c3_131, %c0_132] : memref<1x36x36x3xbf16, #tpu.memory_space<vmem>>, vector<1x1x32x3xbf16>
      %143 = vector.shape_cast %142 : vector<1x1x32x3xbf16> to vector<32x3xbf16>
      %c1_i32_133 = arith.constant 1 : i32
      %144 = arith.addi %107, %c1_i32_133 : i32
      %c0_134 = arith.constant 0 : index
      %145 = arith.index_cast %144 : i32 to index
      %c4_135 = arith.constant 4 : index
      %c0_136 = arith.constant 0 : index
      %146 = vector.load %arg1[%c0_134, %145, %c4_135, %c0_136] : memref<1x36x36x3xbf16, #tpu.memory_space<vmem>>, vector<1x1x32x3xbf16>
      %147 = vector.shape_cast %146 : vector<1x1x32x3xbf16> to vector<32x3xbf16>
      %c2_i32_137 = arith.constant 2 : i32
      %148 = arith.addi %107, %c2_i32_137 : i32
      %c0_138 = arith.constant 0 : index
      %149 = arith.index_cast %148 : i32 to index
      %c0_139 = arith.constant 0 : index
      %c0_140 = arith.constant 0 : index
      %150 = vector.load %arg1[%c0_138, %149, %c0_139, %c0_140] : memref<1x36x36x3xbf16, #tpu.memory_space<vmem>>, vector<1x1x32x3xbf16>
      %151 = vector.shape_cast %150 : vector<1x1x32x3xbf16> to vector<32x3xbf16>
      %c2_i32_141 = arith.constant 2 : i32
      %152 = arith.addi %107, %c2_i32_141 : i32
      %c0_142 = arith.constant 0 : index
      %153 = arith.index_cast %152 : i32 to index
      %c1_143 = arith.constant 1 : index
      %c0_144 = arith.constant 0 : index
      %154 = vector.load %arg1[%c0_142, %153, %c1_143, %c0_144] : memref<1x36x36x3xbf16, #tpu.memory_space<vmem>>, vector<1x1x32x3xbf16>
      %155 = vector.shape_cast %154 : vector<1x1x32x3xbf16> to vector<32x3xbf16>
      %c2_i32_145 = arith.constant 2 : i32
      %156 = arith.addi %107, %c2_i32_145 : i32
      %c0_146 = arith.constant 0 : index
      %157 = arith.index_cast %156 : i32 to index
      %c2_147 = arith.constant 2 : index
      %c0_148 = arith.constant 0 : index
      %158 = vector.load %arg1[%c0_146, %157, %c2_147, %c0_148] : memref<1x36x36x3xbf16, #tpu.memory_space<vmem>>, vector<1x1x32x3xbf16>
      %159 = vector.shape_cast %158 : vector<1x1x32x3xbf16> to vector<32x3xbf16>
      %c2_i32_149 = arith.constant 2 : i32
      %160 = arith.addi %107, %c2_i32_149 : i32
      %c0_150 = arith.constant 0 : index
      %161 = arith.index_cast %160 : i32 to index
      %c3_151 = arith.constant 3 : index
      %c0_152 = arith.constant 0 : index
      %162 = vector.load %arg1[%c0_150, %161, %c3_151, %c0_152] : memref<1x36x36x3xbf16, #tpu.memory_space<vmem>>, vector<1x1x32x3xbf16>
      %163 = vector.shape_cast %162 : vector<1x1x32x3xbf16> to vector<32x3xbf16>
      %c2_i32_153 = arith.constant 2 : i32
      %164 = arith.addi %107, %c2_i32_153 : i32
      %c0_154 = arith.constant 0 : index
      %165 = arith.index_cast %164 : i32 to index
      %c4_155 = arith.constant 4 : index
      %c0_156 = arith.constant 0 : index
      %166 = vector.load %arg1[%c0_154, %165, %c4_155, %c0_156] : memref<1x36x36x3xbf16, #tpu.memory_space<vmem>>, vector<1x1x32x3xbf16>
      %167 = vector.shape_cast %166 : vector<1x1x32x3xbf16> to vector<32x3xbf16>
      %c3_i32_157 = arith.constant 3 : i32
      %168 = arith.addi %107, %c3_i32_157 : i32
      %c0_158 = arith.constant 0 : index
      %169 = arith.index_cast %168 : i32 to index
      %c0_159 = arith.constant 0 : index
      %c0_160 = arith.constant 0 : index
      %170 = vector.load %arg1[%c0_158, %169, %c0_159, %c0_160] : memref<1x36x36x3xbf16, #tpu.memory_space<vmem>>, vector<1x1x32x3xbf16>
      %171 = vector.shape_cast %170 : vector<1x1x32x3xbf16> to vector<32x3xbf16>
      %c3_i32_161 = arith.constant 3 : i32
      %172 = arith.addi %107, %c3_i32_161 : i32
      %c0_162 = arith.constant 0 : index
      %173 = arith.index_cast %172 : i32 to index
      %c1_163 = arith.constant 1 : index
      %c0_164 = arith.constant 0 : index
      %174 = vector.load %arg1[%c0_162, %173, %c1_163, %c0_164] : memref<1x36x36x3xbf16, #tpu.memory_space<vmem>>, vector<1x1x32x3xbf16>
      %175 = vector.shape_cast %174 : vector<1x1x32x3xbf16> to vector<32x3xbf16>
      %c3_i32_165 = arith.constant 3 : i32
      %176 = arith.addi %107, %c3_i32_165 : i32
      %c0_166 = arith.constant 0 : index
      %177 = arith.index_cast %176 : i32 to index
      %c2_167 = arith.constant 2 : index
      %c0_168 = arith.constant 0 : index
      %178 = vector.load %arg1[%c0_166, %177, %c2_167, %c0_168] : memref<1x36x36x3xbf16, #tpu.memory_space<vmem>>, vector<1x1x32x3xbf16>
      %179 = vector.shape_cast %178 : vector<1x1x32x3xbf16> to vector<32x3xbf16>
      %c3_i32_169 = arith.constant 3 : i32
      %180 = arith.addi %107, %c3_i32_169 : i32
      %c0_170 = arith.constant 0 : index
      %181 = arith.index_cast %180 : i32 to index
      %c3_171 = arith.constant 3 : index
      %c0_172 = arith.constant 0 : index
      %182 = vector.load %arg1[%c0_170, %181, %c3_171, %c0_172] : memref<1x36x36x3xbf16, #tpu.memory_space<vmem>>, vector<1x1x32x3xbf16>
      %183 = vector.shape_cast %182 : vector<1x1x32x3xbf16> to vector<32x3xbf16>
      %c3_i32_173 = arith.constant 3 : i32
      %184 = arith.addi %107, %c3_i32_173 : i32
      %c0_174 = arith.constant 0 : index
      %185 = arith.index_cast %184 : i32 to index
      %c4_175 = arith.constant 4 : index
      %c0_176 = arith.constant 0 : index
      %186 = vector.load %arg1[%c0_174, %185, %c4_175, %c0_176] : memref<1x36x36x3xbf16, #tpu.memory_space<vmem>>, vector<1x1x32x3xbf16>
      %187 = vector.shape_cast %186 : vector<1x1x32x3xbf16> to vector<32x3xbf16>
      %c4_i32_177 = arith.constant 4 : i32
      %188 = arith.addi %107, %c4_i32_177 : i32
      %c0_178 = arith.constant 0 : index
      %189 = arith.index_cast %188 : i32 to index
      %c0_179 = arith.constant 0 : index
      %c0_180 = arith.constant 0 : index
      %190 = vector.load %arg1[%c0_178, %189, %c0_179, %c0_180] : memref<1x36x36x3xbf16, #tpu.memory_space<vmem>>, vector<1x1x32x3xbf16>
      %191 = vector.shape_cast %190 : vector<1x1x32x3xbf16> to vector<32x3xbf16>
      %c4_i32_181 = arith.constant 4 : i32
      %192 = arith.addi %107, %c4_i32_181 : i32
      %c0_182 = arith.constant 0 : index
      %193 = arith.index_cast %192 : i32 to index
      %c1_183 = arith.constant 1 : index
      %c0_184 = arith.constant 0 : index
      %194 = vector.load %arg1[%c0_182, %193, %c1_183, %c0_184] : memref<1x36x36x3xbf16, #tpu.memory_space<vmem>>, vector<1x1x32x3xbf16>
      %195 = vector.shape_cast %194 : vector<1x1x32x3xbf16> to vector<32x3xbf16>
      %c4_i32_185 = arith.constant 4 : i32
      %196 = arith.addi %107, %c4_i32_185 : i32
      %c0_186 = arith.constant 0 : index
      %197 = arith.index_cast %196 : i32 to index
      %c2_187 = arith.constant 2 : index
      %c0_188 = arith.constant 0 : index
      %198 = vector.load %arg1[%c0_186, %197, %c2_187, %c0_188] : memref<1x36x36x3xbf16, #tpu.memory_space<vmem>>, vector<1x1x32x3xbf16>
      %199 = vector.shape_cast %198 : vector<1x1x32x3xbf16> to vector<32x3xbf16>
      %c4_i32_189 = arith.constant 4 : i32
      %200 = arith.addi %107, %c4_i32_189 : i32
      %c0_190 = arith.constant 0 : index
      %201 = arith.index_cast %200 : i32 to index
      %c3_191 = arith.constant 3 : index
      %c0_192 = arith.constant 0 : index
      %202 = vector.load %arg1[%c0_190, %201, %c3_191, %c0_192] : memref<1x36x36x3xbf16, #tpu.memory_space<vmem>>, vector<1x1x32x3xbf16>
      %203 = vector.shape_cast %202 : vector<1x1x32x3xbf16> to vector<32x3xbf16>
      %c4_i32_193 = arith.constant 4 : i32
      %204 = arith.addi %107, %c4_i32_193 : i32
      %c0_194 = arith.constant 0 : index
      %205 = arith.index_cast %204 : i32 to index
      %c4_195 = arith.constant 4 : index
      %c0_196 = arith.constant 0 : index
      %206 = vector.load %arg1[%c0_194, %205, %c4_195, %c0_196] : memref<1x36x36x3xbf16, #tpu.memory_space<vmem>>, vector<1x1x32x3xbf16>
      %207 = vector.shape_cast %206 : vector<1x1x32x3xbf16> to vector<32x3xbf16>
      %208 = tpu.concatenate %111, %115, %119, %123, %127, %131, %135, %139, %143, %147, %151, %155, %159, %163, %167, %171 in 1 : vector<32x3xbf16>, vector<32x3xbf16>, vector<32x3xbf16>, vector<32x3xbf16>, vector<32x3xbf16>, vector<32x3xbf16>, vector<32x3xbf16>, vector<32x3xbf16>, vector<32x3xbf16>, vector<32x3xbf16>, vector<32x3xbf16>, vector<32x3xbf16>, vector<32x3xbf16>, vector<32x3xbf16>, vector<32x3xbf16>, vector<32x3xbf16> -> vector<32x48xbf16>
      %209 = tpu.concatenate %175, %179, %183, %187, %191, %195, %199, %203, %207 in 1 : vector<32x3xbf16>, vector<32x3xbf16>, vector<32x3xbf16>, vector<32x3xbf16>, vector<32x3xbf16>, vector<32x3xbf16>, vector<32x3xbf16>, vector<32x3xbf16>, vector<32x3xbf16> -> vector<32x27xbf16>
      %210 = tpu.concatenate %208, %209 in 1 : vector<32x48xbf16>, vector<32x27xbf16> -> vector<32x75xbf16>
      %c0_197 = arith.constant 0 : index
      %c0_198 = arith.constant 0 : index
      %211 = vector.load %arg2[%c0_197, %c0_198] : memref<75x32xbf16, #tpu.memory_space<vmem>>, vector<75x32xbf16>
      %cst_199 = arith.constant dense<0.000000e+00> : vector<32x32xf32>
      %212 = tpu.matmul %210, %211, %cst_199 {dimension_numbers = #tpu.dot_dimension_numbers<[1], [0], [0], [1], [0, 0, 1, 1], [], []>} : vector<32x75xbf16>, vector<75x32xbf16>, vector<32x32xf32> -> vector<32x32xf32>
      %213 = arith.maximumf %106, %212 : vector<32x32xf32>
      %c0_200 = arith.constant 0 : index
      %c0_201 = arith.constant 0 : index
      %214 = vector.load %arg5[%c0_200, %c0_201] : memref<32x32xf32, #tpu.memory_space<vmem>>, vector<32x32xf32>
      tpu.vector_store %arg5[%c0_200, %c0_201], %213 {strides = array<i32>} : memref<32x32xf32, #tpu.memory_space<vmem>>, vector<32x32xf32>,
      %c0_202 = arith.constant 0 : index
      %c0_203 = arith.constant 0 : index
      %215 = tpu.strided_load %arg5[%c0_202, %c0_203] {strides = array<i32: 2, 1>} : memref<32x32xf32, #tpu.memory_space<vmem>>, vector<16x32xf32>
      %c1_204 = arith.constant 1 : index
      %c0_205 = arith.constant 0 : index
      %216 = tpu.strided_load %arg5[%c1_204, %c0_205] {strides = array<i32: 2, 1>} : memref<32x32xf32, #tpu.memory_space<vmem>>, vector<16x32xf32>
      %217 = arith.maximumf %215, %216 : vector<16x32xf32>
      %c0_206 = arith.constant 0 : index
      %c0_207 = arith.constant 0 : index
      %218 = vector.load %arg3[%c0_206, %c0_207] : memref<1x32xf32, #tpu.memory_space<vmem>>, vector<1x32xf32>
      %219 = vector.broadcast %218 : vector<1x32xf32> to vector<16x32xf32>
      %220 = arith.addf %217, %219 : vector<16x32xf32>
      %221 = arith.truncf %220 : vector<16x32xf32> to vector<16x32xbf16>
      %c0_208 = arith.constant 0 : index
      %222 = arith.index_cast %arg6 : i32 to index
      %c0_209 = arith.constant 0 : index
      %c0_210 = arith.constant 0 : index
      %223 = vector.load %arg4[%c0_208, %222, %c0_209, %c0_210] : memref<1x16x16x32xbf16, #tpu.memory_space<vmem>>, vector<1x1x16x32xbf16>
      %224 = vector.shape_cast %223 : vector<1x1x16x32xbf16> to vector<16x32xbf16>
      %225 = vector.shape_cast %221 : vector<16x32xbf16> to vector<1x1x16x32xbf16>
      tpu.vector_store %arg4[%c0_208, %222, %c0_209, %c0_210], %225 {strides = array<i32>} : memref<1x16x16x32xbf16, #tpu.memory_space<vmem>>, vector<1x1x16x32xbf16>,
    }
    %c16_i32_0 = arith.constant 16 : i32
    return
  }
  func.func @transform_0(%arg0: i32) -> (i32, i32, i32, i32) {
    %c0_i32 = arith.constant 0 : i32
    %c0_i32_0 = arith.constant 0 : i32
    %c0_i32_1 = arith.constant 0 : i32
    %c0_i32_2 = arith.constant 0 : i32
    return %arg0, %c0_i32, %c0_i32_0, %c0_i32_1 : i32, i32, i32, i32
  }
  func.func @transform_1(%arg0: i32) -> (i32, i32) {
    %c0_i32 = arith.constant 0 : i32
    %c0_i32_0 = arith.constant 0 : i32
    %c0_i32_1 = arith.constant 0 : i32
    return %c0_i32, %c0_i32_0 : i32, i32
  }
  func.func @transform_2(%arg0: i32) -> (i32, i32) {
    %c0_i32 = arith.constant 0 : i32
    %c0_i32_0 = arith.constant 0 : i32
    %c0_i32_1 = arith.constant 0 : i32
    return %c0_i32, %c0_i32_0 : i32, i32
  }
  func.func @transform_3(%arg0: i32) -> (i32, i32, i32, i32) {
    %c0_i32 = arith.constant 0 : i32
    %c0_i32_0 = arith.constant 0 : i32
    %c0_i32_1 = arith.constant 0 : i32
    %c0_i32_2 = arith.constant 0 : i32
    return %arg0, %c0_i32, %c0_i32_0, %c0_i32_1 : i32, i32, i32, i32
  }
}

module attributes {stable_mosaic.version = 11 : i64} {
  func.func @_conv5x5_pool_kernel(%arg0: i32, %arg1: memref<1x20x20x32xbf16, #tpu.memory_space<vmem>>, %arg2: memref<800x32xbf16, #tpu.memory_space<vmem>>, %arg3: memref<1x32xf32, #tpu.memory_space<vmem>>, %arg4: memref<1x8x8x32xbf16, #tpu.memory_space<vmem>>, %arg5: memref<16x32xf32, #tpu.memory_space<vmem>>) attributes {dimension_semantics = [#tpu.dimension_semantics<parallel>], iteration_bounds = array<i64: 2>, scalar_prefetch = 0 : i64, scratch_operands = 1 : i64, tpu.core_type = #tpu.core_type<tc>, window_params = [{transform_indices = @transform_0, window_bounds = array<i64: 1, 20, 20, 32>}, {pipeline_mode = #tpu.pipeline_mode<synchronous>, transform_indices = @transform_1, window_bounds = array<i64: 800, 32>}, {pipeline_mode = #tpu.pipeline_mode<synchronous>, transform_indices = @transform_2, window_bounds = array<i64: 1, 32>}, {transform_indices = @transform_3, window_bounds = array<i64: 1, 8, 8, 32>}]} {
    %c0_i32 = arith.constant 0 : i32
    %c8_i32 = arith.constant 8 : i32
    %0 = arith.addi %c0_i32, %c8_i32 : i32
    %c1_i32 = arith.constant 1 : i32
    scf.for %arg6 = %c0_i32 to %0 step %c1_i32  : i32 {
      %c2_i32 = arith.constant 2 : i32
      %1 = arith.muli %c2_i32, %arg6 : i32
      %c0_i32_1 = arith.constant 0 : i32
      %2 = arith.addi %1, %c0_i32_1 : i32
      %c0 = arith.constant 0 : index
      %3 = arith.index_cast %2 : i32 to index
      %c0_2 = arith.constant 0 : index
      %c0_3 = arith.constant 0 : index
      %4 = vector.load %arg1[%c0, %3, %c0_2, %c0_3] : memref<1x20x20x32xbf16, #tpu.memory_space<vmem>>, vector<1x1x16x32xbf16>
      %5 = vector.shape_cast %4 : vector<1x1x16x32xbf16> to vector<16x32xbf16>
      %c0_i32_4 = arith.constant 0 : i32
      %6 = arith.addi %1, %c0_i32_4 : i32
      %c0_5 = arith.constant 0 : index
      %7 = arith.index_cast %6 : i32 to index
      %c1 = arith.constant 1 : index
      %c0_6 = arith.constant 0 : index
      %8 = vector.load %arg1[%c0_5, %7, %c1, %c0_6] : memref<1x20x20x32xbf16, #tpu.memory_space<vmem>>, vector<1x1x16x32xbf16>
      %9 = vector.shape_cast %8 : vector<1x1x16x32xbf16> to vector<16x32xbf16>
      %c0_i32_7 = arith.constant 0 : i32
      %10 = arith.addi %1, %c0_i32_7 : i32
      %c0_8 = arith.constant 0 : index
      %11 = arith.index_cast %10 : i32 to index
      %c2 = arith.constant 2 : index
      %c0_9 = arith.constant 0 : index
      %12 = vector.load %arg1[%c0_8, %11, %c2, %c0_9] : memref<1x20x20x32xbf16, #tpu.memory_space<vmem>>, vector<1x1x16x32xbf16>
      %13 = vector.shape_cast %12 : vector<1x1x16x32xbf16> to vector<16x32xbf16>
      %c0_i32_10 = arith.constant 0 : i32
      %14 = arith.addi %1, %c0_i32_10 : i32
      %c0_11 = arith.constant 0 : index
      %15 = arith.index_cast %14 : i32 to index
      %c3 = arith.constant 3 : index
      %c0_12 = arith.constant 0 : index
      %16 = vector.load %arg1[%c0_11, %15, %c3, %c0_12] : memref<1x20x20x32xbf16, #tpu.memory_space<vmem>>, vector<1x1x16x32xbf16>
      %17 = vector.shape_cast %16 : vector<1x1x16x32xbf16> to vector<16x32xbf16>
      %c0_i32_13 = arith.constant 0 : i32
      %18 = arith.addi %1, %c0_i32_13 : i32
      %c0_14 = arith.constant 0 : index
      %19 = arith.index_cast %18 : i32 to index
      %c4 = arith.constant 4 : index
      %c0_15 = arith.constant 0 : index
      %20 = vector.load %arg1[%c0_14, %19, %c4, %c0_15] : memref<1x20x20x32xbf16, #tpu.memory_space<vmem>>, vector<1x1x16x32xbf16>
      %21 = vector.shape_cast %20 : vector<1x1x16x32xbf16> to vector<16x32xbf16>
      %c1_i32_16 = arith.constant 1 : i32
      %22 = arith.addi %1, %c1_i32_16 : i32
      %c0_17 = arith.constant 0 : index
      %23 = arith.index_cast %22 : i32 to index
      %c0_18 = arith.constant 0 : index
      %c0_19 = arith.constant 0 : index
      %24 = vector.load %arg1[%c0_17, %23, %c0_18, %c0_19] : memref<1x20x20x32xbf16, #tpu.memory_space<vmem>>, vector<1x1x16x32xbf16>
      %25 = vector.shape_cast %24 : vector<1x1x16x32xbf16> to vector<16x32xbf16>
      %c1_i32_20 = arith.constant 1 : i32
      %26 = arith.addi %1, %c1_i32_20 : i32
      %c0_21 = arith.constant 0 : index
      %27 = arith.index_cast %26 : i32 to index
      %c1_22 = arith.constant 1 : index
      %c0_23 = arith.constant 0 : index
      %28 = vector.load %arg1[%c0_21, %27, %c1_22, %c0_23] : memref<1x20x20x32xbf16, #tpu.memory_space<vmem>>, vector<1x1x16x32xbf16>
      %29 = vector.shape_cast %28 : vector<1x1x16x32xbf16> to vector<16x32xbf16>
      %c1_i32_24 = arith.constant 1 : i32
      %30 = arith.addi %1, %c1_i32_24 : i32
      %c0_25 = arith.constant 0 : index
      %31 = arith.index_cast %30 : i32 to index
      %c2_26 = arith.constant 2 : index
      %c0_27 = arith.constant 0 : index
      %32 = vector.load %arg1[%c0_25, %31, %c2_26, %c0_27] : memref<1x20x20x32xbf16, #tpu.memory_space<vmem>>, vector<1x1x16x32xbf16>
      %33 = vector.shape_cast %32 : vector<1x1x16x32xbf16> to vector<16x32xbf16>
      %c1_i32_28 = arith.constant 1 : i32
      %34 = arith.addi %1, %c1_i32_28 : i32
      %c0_29 = arith.constant 0 : index
      %35 = arith.index_cast %34 : i32 to index
      %c3_30 = arith.constant 3 : index
      %c0_31 = arith.constant 0 : index
      %36 = vector.load %arg1[%c0_29, %35, %c3_30, %c0_31] : memref<1x20x20x32xbf16, #tpu.memory_space<vmem>>, vector<1x1x16x32xbf16>
      %37 = vector.shape_cast %36 : vector<1x1x16x32xbf16> to vector<16x32xbf16>
      %c1_i32_32 = arith.constant 1 : i32
      %38 = arith.addi %1, %c1_i32_32 : i32
      %c0_33 = arith.constant 0 : index
      %39 = arith.index_cast %38 : i32 to index
      %c4_34 = arith.constant 4 : index
      %c0_35 = arith.constant 0 : index
      %40 = vector.load %arg1[%c0_33, %39, %c4_34, %c0_35] : memref<1x20x20x32xbf16, #tpu.memory_space<vmem>>, vector<1x1x16x32xbf16>
      %41 = vector.shape_cast %40 : vector<1x1x16x32xbf16> to vector<16x32xbf16>
      %c2_i32_36 = arith.constant 2 : i32
      %42 = arith.addi %1, %c2_i32_36 : i32
      %c0_37 = arith.constant 0 : index
      %43 = arith.index_cast %42 : i32 to index
      %c0_38 = arith.constant 0 : index
      %c0_39 = arith.constant 0 : index
      %44 = vector.load %arg1[%c0_37, %43, %c0_38, %c0_39] : memref<1x20x20x32xbf16, #tpu.memory_space<vmem>>, vector<1x1x16x32xbf16>
      %45 = vector.shape_cast %44 : vector<1x1x16x32xbf16> to vector<16x32xbf16>
      %c2_i32_40 = arith.constant 2 : i32
      %46 = arith.addi %1, %c2_i32_40 : i32
      %c0_41 = arith.constant 0 : index
      %47 = arith.index_cast %46 : i32 to index
      %c1_42 = arith.constant 1 : index
      %c0_43 = arith.constant 0 : index
      %48 = vector.load %arg1[%c0_41, %47, %c1_42, %c0_43] : memref<1x20x20x32xbf16, #tpu.memory_space<vmem>>, vector<1x1x16x32xbf16>
      %49 = vector.shape_cast %48 : vector<1x1x16x32xbf16> to vector<16x32xbf16>
      %c2_i32_44 = arith.constant 2 : i32
      %50 = arith.addi %1, %c2_i32_44 : i32
      %c0_45 = arith.constant 0 : index
      %51 = arith.index_cast %50 : i32 to index
      %c2_46 = arith.constant 2 : index
      %c0_47 = arith.constant 0 : index
      %52 = vector.load %arg1[%c0_45, %51, %c2_46, %c0_47] : memref<1x20x20x32xbf16, #tpu.memory_space<vmem>>, vector<1x1x16x32xbf16>
      %53 = vector.shape_cast %52 : vector<1x1x16x32xbf16> to vector<16x32xbf16>
      %c2_i32_48 = arith.constant 2 : i32
      %54 = arith.addi %1, %c2_i32_48 : i32
      %c0_49 = arith.constant 0 : index
      %55 = arith.index_cast %54 : i32 to index
      %c3_50 = arith.constant 3 : index
      %c0_51 = arith.constant 0 : index
      %56 = vector.load %arg1[%c0_49, %55, %c3_50, %c0_51] : memref<1x20x20x32xbf16, #tpu.memory_space<vmem>>, vector<1x1x16x32xbf16>
      %57 = vector.shape_cast %56 : vector<1x1x16x32xbf16> to vector<16x32xbf16>
      %c2_i32_52 = arith.constant 2 : i32
      %58 = arith.addi %1, %c2_i32_52 : i32
      %c0_53 = arith.constant 0 : index
      %59 = arith.index_cast %58 : i32 to index
      %c4_54 = arith.constant 4 : index
      %c0_55 = arith.constant 0 : index
      %60 = vector.load %arg1[%c0_53, %59, %c4_54, %c0_55] : memref<1x20x20x32xbf16, #tpu.memory_space<vmem>>, vector<1x1x16x32xbf16>
      %61 = vector.shape_cast %60 : vector<1x1x16x32xbf16> to vector<16x32xbf16>
      %c3_i32 = arith.constant 3 : i32
      %62 = arith.addi %1, %c3_i32 : i32
      %c0_56 = arith.constant 0 : index
      %63 = arith.index_cast %62 : i32 to index
      %c0_57 = arith.constant 0 : index
      %c0_58 = arith.constant 0 : index
      %64 = vector.load %arg1[%c0_56, %63, %c0_57, %c0_58] : memref<1x20x20x32xbf16, #tpu.memory_space<vmem>>, vector<1x1x16x32xbf16>
      %65 = vector.shape_cast %64 : vector<1x1x16x32xbf16> to vector<16x32xbf16>
      %c3_i32_59 = arith.constant 3 : i32
      %66 = arith.addi %1, %c3_i32_59 : i32
      %c0_60 = arith.constant 0 : index
      %67 = arith.index_cast %66 : i32 to index
      %c1_61 = arith.constant 1 : index
      %c0_62 = arith.constant 0 : index
      %68 = vector.load %arg1[%c0_60, %67, %c1_61, %c0_62] : memref<1x20x20x32xbf16, #tpu.memory_space<vmem>>, vector<1x1x16x32xbf16>
      %69 = vector.shape_cast %68 : vector<1x1x16x32xbf16> to vector<16x32xbf16>
      %c3_i32_63 = arith.constant 3 : i32
      %70 = arith.addi %1, %c3_i32_63 : i32
      %c0_64 = arith.constant 0 : index
      %71 = arith.index_cast %70 : i32 to index
      %c2_65 = arith.constant 2 : index
      %c0_66 = arith.constant 0 : index
      %72 = vector.load %arg1[%c0_64, %71, %c2_65, %c0_66] : memref<1x20x20x32xbf16, #tpu.memory_space<vmem>>, vector<1x1x16x32xbf16>
      %73 = vector.shape_cast %72 : vector<1x1x16x32xbf16> to vector<16x32xbf16>
      %c3_i32_67 = arith.constant 3 : i32
      %74 = arith.addi %1, %c3_i32_67 : i32
      %c0_68 = arith.constant 0 : index
      %75 = arith.index_cast %74 : i32 to index
      %c3_69 = arith.constant 3 : index
      %c0_70 = arith.constant 0 : index
      %76 = vector.load %arg1[%c0_68, %75, %c3_69, %c0_70] : memref<1x20x20x32xbf16, #tpu.memory_space<vmem>>, vector<1x1x16x32xbf16>
      %77 = vector.shape_cast %76 : vector<1x1x16x32xbf16> to vector<16x32xbf16>
      %c3_i32_71 = arith.constant 3 : i32
      %78 = arith.addi %1, %c3_i32_71 : i32
      %c0_72 = arith.constant 0 : index
      %79 = arith.index_cast %78 : i32 to index
      %c4_73 = arith.constant 4 : index
      %c0_74 = arith.constant 0 : index
      %80 = vector.load %arg1[%c0_72, %79, %c4_73, %c0_74] : memref<1x20x20x32xbf16, #tpu.memory_space<vmem>>, vector<1x1x16x32xbf16>
      %81 = vector.shape_cast %80 : vector<1x1x16x32xbf16> to vector<16x32xbf16>
      %c4_i32 = arith.constant 4 : i32
      %82 = arith.addi %1, %c4_i32 : i32
      %c0_75 = arith.constant 0 : index
      %83 = arith.index_cast %82 : i32 to index
      %c0_76 = arith.constant 0 : index
      %c0_77 = arith.constant 0 : index
      %84 = vector.load %arg1[%c0_75, %83, %c0_76, %c0_77] : memref<1x20x20x32xbf16, #tpu.memory_space<vmem>>, vector<1x1x16x32xbf16>
      %85 = vector.shape_cast %84 : vector<1x1x16x32xbf16> to vector<16x32xbf16>
      %c4_i32_78 = arith.constant 4 : i32
      %86 = arith.addi %1, %c4_i32_78 : i32
      %c0_79 = arith.constant 0 : index
      %87 = arith.index_cast %86 : i32 to index
      %c1_80 = arith.constant 1 : index
      %c0_81 = arith.constant 0 : index
      %88 = vector.load %arg1[%c0_79, %87, %c1_80, %c0_81] : memref<1x20x20x32xbf16, #tpu.memory_space<vmem>>, vector<1x1x16x32xbf16>
      %89 = vector.shape_cast %88 : vector<1x1x16x32xbf16> to vector<16x32xbf16>
      %c4_i32_82 = arith.constant 4 : i32
      %90 = arith.addi %1, %c4_i32_82 : i32
      %c0_83 = arith.constant 0 : index
      %91 = arith.index_cast %90 : i32 to index
      %c2_84 = arith.constant 2 : index
      %c0_85 = arith.constant 0 : index
      %92 = vector.load %arg1[%c0_83, %91, %c2_84, %c0_85] : memref<1x20x20x32xbf16, #tpu.memory_space<vmem>>, vector<1x1x16x32xbf16>
      %93 = vector.shape_cast %92 : vector<1x1x16x32xbf16> to vector<16x32xbf16>
      %c4_i32_86 = arith.constant 4 : i32
      %94 = arith.addi %1, %c4_i32_86 : i32
      %c0_87 = arith.constant 0 : index
      %95 = arith.index_cast %94 : i32 to index
      %c3_88 = arith.constant 3 : index
      %c0_89 = arith.constant 0 : index
      %96 = vector.load %arg1[%c0_87, %95, %c3_88, %c0_89] : memref<1x20x20x32xbf16, #tpu.memory_space<vmem>>, vector<1x1x16x32xbf16>
      %97 = vector.shape_cast %96 : vector<1x1x16x32xbf16> to vector<16x32xbf16>
      %c4_i32_90 = arith.constant 4 : i32
      %98 = arith.addi %1, %c4_i32_90 : i32
      %c0_91 = arith.constant 0 : index
      %99 = arith.index_cast %98 : i32 to index
      %c4_92 = arith.constant 4 : index
      %c0_93 = arith.constant 0 : index
      %100 = vector.load %arg1[%c0_91, %99, %c4_92, %c0_93] : memref<1x20x20x32xbf16, #tpu.memory_space<vmem>>, vector<1x1x16x32xbf16>
      %101 = vector.shape_cast %100 : vector<1x1x16x32xbf16> to vector<16x32xbf16>
      %102 = tpu.concatenate %5, %9, %13, %17, %21, %25, %29, %33, %37, %41, %45, %49, %53, %57, %61, %65 in 1 : vector<16x32xbf16>, vector<16x32xbf16>, vector<16x32xbf16>, vector<16x32xbf16>, vector<16x32xbf16>, vector<16x32xbf16>, vector<16x32xbf16>, vector<16x32xbf16>, vector<16x32xbf16>, vector<16x32xbf16>, vector<16x32xbf16>, vector<16x32xbf16>, vector<16x32xbf16>, vector<16x32xbf16>, vector<16x32xbf16>, vector<16x32xbf16> -> vector<16x512xbf16>
      %103 = tpu.concatenate %69, %73, %77, %81, %85, %89, %93, %97, %101 in 1 : vector<16x32xbf16>, vector<16x32xbf16>, vector<16x32xbf16>, vector<16x32xbf16>, vector<16x32xbf16>, vector<16x32xbf16>, vector<16x32xbf16>, vector<16x32xbf16>, vector<16x32xbf16> -> vector<16x288xbf16>
      %104 = tpu.concatenate %102, %103 in 1 : vector<16x512xbf16>, vector<16x288xbf16> -> vector<16x800xbf16>
      %c0_94 = arith.constant 0 : index
      %c0_95 = arith.constant 0 : index
      %105 = vector.load %arg2[%c0_94, %c0_95] : memref<800x32xbf16, #tpu.memory_space<vmem>>, vector<800x32xbf16>
      %cst = arith.constant dense<0.000000e+00> : vector<16x32xf32>
      %106 = tpu.matmul %104, %105, %cst {dimension_numbers = #tpu.dot_dimension_numbers<[1], [0], [0], [1], [0, 0, 1, 1], [], []>} : vector<16x800xbf16>, vector<800x32xbf16>, vector<16x32xf32> -> vector<16x32xf32>
      %c1_i32_96 = arith.constant 1 : i32
      %107 = arith.addi %1, %c1_i32_96 : i32
      %c0_i32_97 = arith.constant 0 : i32
      %108 = arith.addi %107, %c0_i32_97 : i32
      %c0_98 = arith.constant 0 : index
      %109 = arith.index_cast %108 : i32 to index
      %c0_99 = arith.constant 0 : index
      %c0_100 = arith.constant 0 : index
      %110 = vector.load %arg1[%c0_98, %109, %c0_99, %c0_100] : memref<1x20x20x32xbf16, #tpu.memory_space<vmem>>, vector<1x1x16x32xbf16>
      %111 = vector.shape_cast %110 : vector<1x1x16x32xbf16> to vector<16x32xbf16>
      %c0_i32_101 = arith.constant 0 : i32
      %112 = arith.addi %107, %c0_i32_101 : i32
      %c0_102 = arith.constant 0 : index
      %113 = arith.index_cast %112 : i32 to index
      %c1_103 = arith.constant 1 : index
      %c0_104 = arith.constant 0 : index
      %114 = vector.load %arg1[%c0_102, %113, %c1_103, %c0_104] : memref<1x20x20x32xbf16, #tpu.memory_space<vmem>>, vector<1x1x16x32xbf16>
      %115 = vector.shape_cast %114 : vector<1x1x16x32xbf16> to vector<16x32xbf16>
      %c0_i32_105 = arith.constant 0 : i32
      %116 = arith.addi %107, %c0_i32_105 : i32
      %c0_106 = arith.constant 0 : index
      %117 = arith.index_cast %116 : i32 to index
      %c2_107 = arith.constant 2 : index
      %c0_108 = arith.constant 0 : index
      %118 = vector.load %arg1[%c0_106, %117, %c2_107, %c0_108] : memref<1x20x20x32xbf16, #tpu.memory_space<vmem>>, vector<1x1x16x32xbf16>
      %119 = vector.shape_cast %118 : vector<1x1x16x32xbf16> to vector<16x32xbf16>
      %c0_i32_109 = arith.constant 0 : i32
      %120 = arith.addi %107, %c0_i32_109 : i32
      %c0_110 = arith.constant 0 : index
      %121 = arith.index_cast %120 : i32 to index
      %c3_111 = arith.constant 3 : index
      %c0_112 = arith.constant 0 : index
      %122 = vector.load %arg1[%c0_110, %121, %c3_111, %c0_112] : memref<1x20x20x32xbf16, #tpu.memory_space<vmem>>, vector<1x1x16x32xbf16>
      %123 = vector.shape_cast %122 : vector<1x1x16x32xbf16> to vector<16x32xbf16>
      %c0_i32_113 = arith.constant 0 : i32
      %124 = arith.addi %107, %c0_i32_113 : i32
      %c0_114 = arith.constant 0 : index
      %125 = arith.index_cast %124 : i32 to index
      %c4_115 = arith.constant 4 : index
      %c0_116 = arith.constant 0 : index
      %126 = vector.load %arg1[%c0_114, %125, %c4_115, %c0_116] : memref<1x20x20x32xbf16, #tpu.memory_space<vmem>>, vector<1x1x16x32xbf16>
      %127 = vector.shape_cast %126 : vector<1x1x16x32xbf16> to vector<16x32xbf16>
      %c1_i32_117 = arith.constant 1 : i32
      %128 = arith.addi %107, %c1_i32_117 : i32
      %c0_118 = arith.constant 0 : index
      %129 = arith.index_cast %128 : i32 to index
      %c0_119 = arith.constant 0 : index
      %c0_120 = arith.constant 0 : index
      %130 = vector.load %arg1[%c0_118, %129, %c0_119, %c0_120] : memref<1x20x20x32xbf16, #tpu.memory_space<vmem>>, vector<1x1x16x32xbf16>
      %131 = vector.shape_cast %130 : vector<1x1x16x32xbf16> to vector<16x32xbf16>
      %c1_i32_121 = arith.constant 1 : i32
      %132 = arith.addi %107, %c1_i32_121 : i32
      %c0_122 = arith.constant 0 : index
      %133 = arith.index_cast %132 : i32 to index
      %c1_123 = arith.constant 1 : index
      %c0_124 = arith.constant 0 : index
      %134 = vector.load %arg1[%c0_122, %133, %c1_123, %c0_124] : memref<1x20x20x32xbf16, #tpu.memory_space<vmem>>, vector<1x1x16x32xbf16>
      %135 = vector.shape_cast %134 : vector<1x1x16x32xbf16> to vector<16x32xbf16>
      %c1_i32_125 = arith.constant 1 : i32
      %136 = arith.addi %107, %c1_i32_125 : i32
      %c0_126 = arith.constant 0 : index
      %137 = arith.index_cast %136 : i32 to index
      %c2_127 = arith.constant 2 : index
      %c0_128 = arith.constant 0 : index
      %138 = vector.load %arg1[%c0_126, %137, %c2_127, %c0_128] : memref<1x20x20x32xbf16, #tpu.memory_space<vmem>>, vector<1x1x16x32xbf16>
      %139 = vector.shape_cast %138 : vector<1x1x16x32xbf16> to vector<16x32xbf16>
      %c1_i32_129 = arith.constant 1 : i32
      %140 = arith.addi %107, %c1_i32_129 : i32
      %c0_130 = arith.constant 0 : index
      %141 = arith.index_cast %140 : i32 to index
      %c3_131 = arith.constant 3 : index
      %c0_132 = arith.constant 0 : index
      %142 = vector.load %arg1[%c0_130, %141, %c3_131, %c0_132] : memref<1x20x20x32xbf16, #tpu.memory_space<vmem>>, vector<1x1x16x32xbf16>
      %143 = vector.shape_cast %142 : vector<1x1x16x32xbf16> to vector<16x32xbf16>
      %c1_i32_133 = arith.constant 1 : i32
      %144 = arith.addi %107, %c1_i32_133 : i32
      %c0_134 = arith.constant 0 : index
      %145 = arith.index_cast %144 : i32 to index
      %c4_135 = arith.constant 4 : index
      %c0_136 = arith.constant 0 : index
      %146 = vector.load %arg1[%c0_134, %145, %c4_135, %c0_136] : memref<1x20x20x32xbf16, #tpu.memory_space<vmem>>, vector<1x1x16x32xbf16>
      %147 = vector.shape_cast %146 : vector<1x1x16x32xbf16> to vector<16x32xbf16>
      %c2_i32_137 = arith.constant 2 : i32
      %148 = arith.addi %107, %c2_i32_137 : i32
      %c0_138 = arith.constant 0 : index
      %149 = arith.index_cast %148 : i32 to index
      %c0_139 = arith.constant 0 : index
      %c0_140 = arith.constant 0 : index
      %150 = vector.load %arg1[%c0_138, %149, %c0_139, %c0_140] : memref<1x20x20x32xbf16, #tpu.memory_space<vmem>>, vector<1x1x16x32xbf16>
      %151 = vector.shape_cast %150 : vector<1x1x16x32xbf16> to vector<16x32xbf16>
      %c2_i32_141 = arith.constant 2 : i32
      %152 = arith.addi %107, %c2_i32_141 : i32
      %c0_142 = arith.constant 0 : index
      %153 = arith.index_cast %152 : i32 to index
      %c1_143 = arith.constant 1 : index
      %c0_144 = arith.constant 0 : index
      %154 = vector.load %arg1[%c0_142, %153, %c1_143, %c0_144] : memref<1x20x20x32xbf16, #tpu.memory_space<vmem>>, vector<1x1x16x32xbf16>
      %155 = vector.shape_cast %154 : vector<1x1x16x32xbf16> to vector<16x32xbf16>
      %c2_i32_145 = arith.constant 2 : i32
      %156 = arith.addi %107, %c2_i32_145 : i32
      %c0_146 = arith.constant 0 : index
      %157 = arith.index_cast %156 : i32 to index
      %c2_147 = arith.constant 2 : index
      %c0_148 = arith.constant 0 : index
      %158 = vector.load %arg1[%c0_146, %157, %c2_147, %c0_148] : memref<1x20x20x32xbf16, #tpu.memory_space<vmem>>, vector<1x1x16x32xbf16>
      %159 = vector.shape_cast %158 : vector<1x1x16x32xbf16> to vector<16x32xbf16>
      %c2_i32_149 = arith.constant 2 : i32
      %160 = arith.addi %107, %c2_i32_149 : i32
      %c0_150 = arith.constant 0 : index
      %161 = arith.index_cast %160 : i32 to index
      %c3_151 = arith.constant 3 : index
      %c0_152 = arith.constant 0 : index
      %162 = vector.load %arg1[%c0_150, %161, %c3_151, %c0_152] : memref<1x20x20x32xbf16, #tpu.memory_space<vmem>>, vector<1x1x16x32xbf16>
      %163 = vector.shape_cast %162 : vector<1x1x16x32xbf16> to vector<16x32xbf16>
      %c2_i32_153 = arith.constant 2 : i32
      %164 = arith.addi %107, %c2_i32_153 : i32
      %c0_154 = arith.constant 0 : index
      %165 = arith.index_cast %164 : i32 to index
      %c4_155 = arith.constant 4 : index
      %c0_156 = arith.constant 0 : index
      %166 = vector.load %arg1[%c0_154, %165, %c4_155, %c0_156] : memref<1x20x20x32xbf16, #tpu.memory_space<vmem>>, vector<1x1x16x32xbf16>
      %167 = vector.shape_cast %166 : vector<1x1x16x32xbf16> to vector<16x32xbf16>
      %c3_i32_157 = arith.constant 3 : i32
      %168 = arith.addi %107, %c3_i32_157 : i32
      %c0_158 = arith.constant 0 : index
      %169 = arith.index_cast %168 : i32 to index
      %c0_159 = arith.constant 0 : index
      %c0_160 = arith.constant 0 : index
      %170 = vector.load %arg1[%c0_158, %169, %c0_159, %c0_160] : memref<1x20x20x32xbf16, #tpu.memory_space<vmem>>, vector<1x1x16x32xbf16>
      %171 = vector.shape_cast %170 : vector<1x1x16x32xbf16> to vector<16x32xbf16>
      %c3_i32_161 = arith.constant 3 : i32
      %172 = arith.addi %107, %c3_i32_161 : i32
      %c0_162 = arith.constant 0 : index
      %173 = arith.index_cast %172 : i32 to index
      %c1_163 = arith.constant 1 : index
      %c0_164 = arith.constant 0 : index
      %174 = vector.load %arg1[%c0_162, %173, %c1_163, %c0_164] : memref<1x20x20x32xbf16, #tpu.memory_space<vmem>>, vector<1x1x16x32xbf16>
      %175 = vector.shape_cast %174 : vector<1x1x16x32xbf16> to vector<16x32xbf16>
      %c3_i32_165 = arith.constant 3 : i32
      %176 = arith.addi %107, %c3_i32_165 : i32
      %c0_166 = arith.constant 0 : index
      %177 = arith.index_cast %176 : i32 to index
      %c2_167 = arith.constant 2 : index
      %c0_168 = arith.constant 0 : index
      %178 = vector.load %arg1[%c0_166, %177, %c2_167, %c0_168] : memref<1x20x20x32xbf16, #tpu.memory_space<vmem>>, vector<1x1x16x32xbf16>
      %179 = vector.shape_cast %178 : vector<1x1x16x32xbf16> to vector<16x32xbf16>
      %c3_i32_169 = arith.constant 3 : i32
      %180 = arith.addi %107, %c3_i32_169 : i32
      %c0_170 = arith.constant 0 : index
      %181 = arith.index_cast %180 : i32 to index
      %c3_171 = arith.constant 3 : index
      %c0_172 = arith.constant 0 : index
      %182 = vector.load %arg1[%c0_170, %181, %c3_171, %c0_172] : memref<1x20x20x32xbf16, #tpu.memory_space<vmem>>, vector<1x1x16x32xbf16>
      %183 = vector.shape_cast %182 : vector<1x1x16x32xbf16> to vector<16x32xbf16>
      %c3_i32_173 = arith.constant 3 : i32
      %184 = arith.addi %107, %c3_i32_173 : i32
      %c0_174 = arith.constant 0 : index
      %185 = arith.index_cast %184 : i32 to index
      %c4_175 = arith.constant 4 : index
      %c0_176 = arith.constant 0 : index
      %186 = vector.load %arg1[%c0_174, %185, %c4_175, %c0_176] : memref<1x20x20x32xbf16, #tpu.memory_space<vmem>>, vector<1x1x16x32xbf16>
      %187 = vector.shape_cast %186 : vector<1x1x16x32xbf16> to vector<16x32xbf16>
      %c4_i32_177 = arith.constant 4 : i32
      %188 = arith.addi %107, %c4_i32_177 : i32
      %c0_178 = arith.constant 0 : index
      %189 = arith.index_cast %188 : i32 to index
      %c0_179 = arith.constant 0 : index
      %c0_180 = arith.constant 0 : index
      %190 = vector.load %arg1[%c0_178, %189, %c0_179, %c0_180] : memref<1x20x20x32xbf16, #tpu.memory_space<vmem>>, vector<1x1x16x32xbf16>
      %191 = vector.shape_cast %190 : vector<1x1x16x32xbf16> to vector<16x32xbf16>
      %c4_i32_181 = arith.constant 4 : i32
      %192 = arith.addi %107, %c4_i32_181 : i32
      %c0_182 = arith.constant 0 : index
      %193 = arith.index_cast %192 : i32 to index
      %c1_183 = arith.constant 1 : index
      %c0_184 = arith.constant 0 : index
      %194 = vector.load %arg1[%c0_182, %193, %c1_183, %c0_184] : memref<1x20x20x32xbf16, #tpu.memory_space<vmem>>, vector<1x1x16x32xbf16>
      %195 = vector.shape_cast %194 : vector<1x1x16x32xbf16> to vector<16x32xbf16>
      %c4_i32_185 = arith.constant 4 : i32
      %196 = arith.addi %107, %c4_i32_185 : i32
      %c0_186 = arith.constant 0 : index
      %197 = arith.index_cast %196 : i32 to index
      %c2_187 = arith.constant 2 : index
      %c0_188 = arith.constant 0 : index
      %198 = vector.load %arg1[%c0_186, %197, %c2_187, %c0_188] : memref<1x20x20x32xbf16, #tpu.memory_space<vmem>>, vector<1x1x16x32xbf16>
      %199 = vector.shape_cast %198 : vector<1x1x16x32xbf16> to vector<16x32xbf16>
      %c4_i32_189 = arith.constant 4 : i32
      %200 = arith.addi %107, %c4_i32_189 : i32
      %c0_190 = arith.constant 0 : index
      %201 = arith.index_cast %200 : i32 to index
      %c3_191 = arith.constant 3 : index
      %c0_192 = arith.constant 0 : index
      %202 = vector.load %arg1[%c0_190, %201, %c3_191, %c0_192] : memref<1x20x20x32xbf16, #tpu.memory_space<vmem>>, vector<1x1x16x32xbf16>
      %203 = vector.shape_cast %202 : vector<1x1x16x32xbf16> to vector<16x32xbf16>
      %c4_i32_193 = arith.constant 4 : i32
      %204 = arith.addi %107, %c4_i32_193 : i32
      %c0_194 = arith.constant 0 : index
      %205 = arith.index_cast %204 : i32 to index
      %c4_195 = arith.constant 4 : index
      %c0_196 = arith.constant 0 : index
      %206 = vector.load %arg1[%c0_194, %205, %c4_195, %c0_196] : memref<1x20x20x32xbf16, #tpu.memory_space<vmem>>, vector<1x1x16x32xbf16>
      %207 = vector.shape_cast %206 : vector<1x1x16x32xbf16> to vector<16x32xbf16>
      %208 = tpu.concatenate %111, %115, %119, %123, %127, %131, %135, %139, %143, %147, %151, %155, %159, %163, %167, %171 in 1 : vector<16x32xbf16>, vector<16x32xbf16>, vector<16x32xbf16>, vector<16x32xbf16>, vector<16x32xbf16>, vector<16x32xbf16>, vector<16x32xbf16>, vector<16x32xbf16>, vector<16x32xbf16>, vector<16x32xbf16>, vector<16x32xbf16>, vector<16x32xbf16>, vector<16x32xbf16>, vector<16x32xbf16>, vector<16x32xbf16>, vector<16x32xbf16> -> vector<16x512xbf16>
      %209 = tpu.concatenate %175, %179, %183, %187, %191, %195, %199, %203, %207 in 1 : vector<16x32xbf16>, vector<16x32xbf16>, vector<16x32xbf16>, vector<16x32xbf16>, vector<16x32xbf16>, vector<16x32xbf16>, vector<16x32xbf16>, vector<16x32xbf16>, vector<16x32xbf16> -> vector<16x288xbf16>
      %210 = tpu.concatenate %208, %209 in 1 : vector<16x512xbf16>, vector<16x288xbf16> -> vector<16x800xbf16>
      %c0_197 = arith.constant 0 : index
      %c0_198 = arith.constant 0 : index
      %211 = vector.load %arg2[%c0_197, %c0_198] : memref<800x32xbf16, #tpu.memory_space<vmem>>, vector<800x32xbf16>
      %cst_199 = arith.constant dense<0.000000e+00> : vector<16x32xf32>
      %212 = tpu.matmul %210, %211, %cst_199 {dimension_numbers = #tpu.dot_dimension_numbers<[1], [0], [0], [1], [0, 0, 1, 1], [], []>} : vector<16x800xbf16>, vector<800x32xbf16>, vector<16x32xf32> -> vector<16x32xf32>
      %213 = arith.maximumf %106, %212 : vector<16x32xf32>
      %c0_200 = arith.constant 0 : index
      %c0_201 = arith.constant 0 : index
      %214 = vector.load %arg5[%c0_200, %c0_201] : memref<16x32xf32, #tpu.memory_space<vmem>>, vector<16x32xf32>
      tpu.vector_store %arg5[%c0_200, %c0_201], %213 {strides = array<i32>} : memref<16x32xf32, #tpu.memory_space<vmem>>, vector<16x32xf32>,
      %c0_202 = arith.constant 0 : index
      %c0_203 = arith.constant 0 : index
      %215 = tpu.strided_load %arg5[%c0_202, %c0_203] {strides = array<i32: 2, 1>} : memref<16x32xf32, #tpu.memory_space<vmem>>, vector<8x32xf32>
      %c1_204 = arith.constant 1 : index
      %c0_205 = arith.constant 0 : index
      %216 = tpu.strided_load %arg5[%c1_204, %c0_205] {strides = array<i32: 2, 1>} : memref<16x32xf32, #tpu.memory_space<vmem>>, vector<8x32xf32>
      %217 = arith.maximumf %215, %216 : vector<8x32xf32>
      %c0_206 = arith.constant 0 : index
      %c0_207 = arith.constant 0 : index
      %218 = vector.load %arg3[%c0_206, %c0_207] : memref<1x32xf32, #tpu.memory_space<vmem>>, vector<1x32xf32>
      %219 = vector.broadcast %218 : vector<1x32xf32> to vector<8x32xf32>
      %220 = arith.addf %217, %219 : vector<8x32xf32>
      %221 = arith.truncf %220 : vector<8x32xf32> to vector<8x32xbf16>
      %c0_208 = arith.constant 0 : index
      %222 = arith.index_cast %arg6 : i32 to index
      %c0_209 = arith.constant 0 : index
      %c0_210 = arith.constant 0 : index
      %223 = vector.load %arg4[%c0_208, %222, %c0_209, %c0_210] : memref<1x8x8x32xbf16, #tpu.memory_space<vmem>>, vector<1x1x8x32xbf16>
      %224 = vector.shape_cast %223 : vector<1x1x8x32xbf16> to vector<8x32xbf16>
      %225 = vector.shape_cast %221 : vector<8x32xbf16> to vector<1x1x8x32xbf16>
      tpu.vector_store %arg4[%c0_208, %222, %c0_209, %c0_210], %225 {strides = array<i32>} : memref<1x8x8x32xbf16, #tpu.memory_space<vmem>>, vector<1x1x8x32xbf16>,
    }
    %c8_i32_0 = arith.constant 8 : i32
    return
  }
  func.func @transform_0(%arg0: i32) -> (i32, i32, i32, i32) {
    %c0_i32 = arith.constant 0 : i32
    %c0_i32_0 = arith.constant 0 : i32
    %c0_i32_1 = arith.constant 0 : i32
    %c0_i32_2 = arith.constant 0 : i32
    return %arg0, %c0_i32, %c0_i32_0, %c0_i32_1 : i32, i32, i32, i32
  }
  func.func @transform_1(%arg0: i32) -> (i32, i32) {
    %c0_i32 = arith.constant 0 : i32
    %c0_i32_0 = arith.constant 0 : i32
    %c0_i32_1 = arith.constant 0 : i32
    return %c0_i32, %c0_i32_0 : i32, i32
  }
  func.func @transform_2(%arg0: i32) -> (i32, i32) {
    %c0_i32 = arith.constant 0 : i32
    %c0_i32_0 = arith.constant 0 : i32
    %c0_i32_1 = arith.constant 0 : i32
    return %c0_i32, %c0_i32_0 : i32, i32
  }
  func.func @transform_3(%arg0: i32) -> (i32, i32, i32, i32) {
    %c0_i32 = arith.constant 0 : i32
    %c0_i32_0 = arith.constant 0 : i32
    %c0_i32_1 = arith.constant 0 : i32
    %c0_i32_2 = arith.constant 0 : i32
    return %arg0, %c0_i32, %c0_i32_0, %c0_i32_1 : i32, i32, i32, i32
  }
}

module attributes {stable_mosaic.version = 11 : i64} {
  func.func @_conv5x5_pool_kernel(%arg0: i32, %arg1: memref<1x12x12x32xbf16, #tpu.memory_space<vmem>>, %arg2: memref<800x64xbf16, #tpu.memory_space<vmem>>, %arg3: memref<1x64xf32, #tpu.memory_space<vmem>>, %arg4: memref<1x4x4x64xbf16, #tpu.memory_space<vmem>>, %arg5: memref<8x64xf32, #tpu.memory_space<vmem>>) attributes {dimension_semantics = [#tpu.dimension_semantics<parallel>], iteration_bounds = array<i64: 2>, scalar_prefetch = 0 : i64, scratch_operands = 1 : i64, tpu.core_type = #tpu.core_type<tc>, window_params = [{transform_indices = @transform_0, window_bounds = array<i64: 1, 12, 12, 32>}, {pipeline_mode = #tpu.pipeline_mode<synchronous>, transform_indices = @transform_1, window_bounds = array<i64: 800, 64>}, {pipeline_mode = #tpu.pipeline_mode<synchronous>, transform_indices = @transform_2, window_bounds = array<i64: 1, 64>}, {transform_indices = @transform_3, window_bounds = array<i64: 1, 4, 4, 64>}]} {
    %c0_i32 = arith.constant 0 : i32
    %c4_i32 = arith.constant 4 : i32
    %0 = arith.addi %c0_i32, %c4_i32 : i32
    %c1_i32 = arith.constant 1 : i32
    scf.for %arg6 = %c0_i32 to %0 step %c1_i32  : i32 {
      %c2_i32 = arith.constant 2 : i32
      %1 = arith.muli %c2_i32, %arg6 : i32
      %c0_i32_1 = arith.constant 0 : i32
      %2 = arith.addi %1, %c0_i32_1 : i32
      %c0 = arith.constant 0 : index
      %3 = arith.index_cast %2 : i32 to index
      %c0_2 = arith.constant 0 : index
      %c0_3 = arith.constant 0 : index
      %4 = vector.load %arg1[%c0, %3, %c0_2, %c0_3] : memref<1x12x12x32xbf16, #tpu.memory_space<vmem>>, vector<1x1x8x32xbf16>
      %5 = vector.shape_cast %4 : vector<1x1x8x32xbf16> to vector<8x32xbf16>
      %c0_i32_4 = arith.constant 0 : i32
      %6 = arith.addi %1, %c0_i32_4 : i32
      %c0_5 = arith.constant 0 : index
      %7 = arith.index_cast %6 : i32 to index
      %c1 = arith.constant 1 : index
      %c0_6 = arith.constant 0 : index
      %8 = vector.load %arg1[%c0_5, %7, %c1, %c0_6] : memref<1x12x12x32xbf16, #tpu.memory_space<vmem>>, vector<1x1x8x32xbf16>
      %9 = vector.shape_cast %8 : vector<1x1x8x32xbf16> to vector<8x32xbf16>
      %c0_i32_7 = arith.constant 0 : i32
      %10 = arith.addi %1, %c0_i32_7 : i32
      %c0_8 = arith.constant 0 : index
      %11 = arith.index_cast %10 : i32 to index
      %c2 = arith.constant 2 : index
      %c0_9 = arith.constant 0 : index
      %12 = vector.load %arg1[%c0_8, %11, %c2, %c0_9] : memref<1x12x12x32xbf16, #tpu.memory_space<vmem>>, vector<1x1x8x32xbf16>
      %13 = vector.shape_cast %12 : vector<1x1x8x32xbf16> to vector<8x32xbf16>
      %c0_i32_10 = arith.constant 0 : i32
      %14 = arith.addi %1, %c0_i32_10 : i32
      %c0_11 = arith.constant 0 : index
      %15 = arith.index_cast %14 : i32 to index
      %c3 = arith.constant 3 : index
      %c0_12 = arith.constant 0 : index
      %16 = vector.load %arg1[%c0_11, %15, %c3, %c0_12] : memref<1x12x12x32xbf16, #tpu.memory_space<vmem>>, vector<1x1x8x32xbf16>
      %17 = vector.shape_cast %16 : vector<1x1x8x32xbf16> to vector<8x32xbf16>
      %c0_i32_13 = arith.constant 0 : i32
      %18 = arith.addi %1, %c0_i32_13 : i32
      %c0_14 = arith.constant 0 : index
      %19 = arith.index_cast %18 : i32 to index
      %c4 = arith.constant 4 : index
      %c0_15 = arith.constant 0 : index
      %20 = vector.load %arg1[%c0_14, %19, %c4, %c0_15] : memref<1x12x12x32xbf16, #tpu.memory_space<vmem>>, vector<1x1x8x32xbf16>
      %21 = vector.shape_cast %20 : vector<1x1x8x32xbf16> to vector<8x32xbf16>
      %c1_i32_16 = arith.constant 1 : i32
      %22 = arith.addi %1, %c1_i32_16 : i32
      %c0_17 = arith.constant 0 : index
      %23 = arith.index_cast %22 : i32 to index
      %c0_18 = arith.constant 0 : index
      %c0_19 = arith.constant 0 : index
      %24 = vector.load %arg1[%c0_17, %23, %c0_18, %c0_19] : memref<1x12x12x32xbf16, #tpu.memory_space<vmem>>, vector<1x1x8x32xbf16>
      %25 = vector.shape_cast %24 : vector<1x1x8x32xbf16> to vector<8x32xbf16>
      %c1_i32_20 = arith.constant 1 : i32
      %26 = arith.addi %1, %c1_i32_20 : i32
      %c0_21 = arith.constant 0 : index
      %27 = arith.index_cast %26 : i32 to index
      %c1_22 = arith.constant 1 : index
      %c0_23 = arith.constant 0 : index
      %28 = vector.load %arg1[%c0_21, %27, %c1_22, %c0_23] : memref<1x12x12x32xbf16, #tpu.memory_space<vmem>>, vector<1x1x8x32xbf16>
      %29 = vector.shape_cast %28 : vector<1x1x8x32xbf16> to vector<8x32xbf16>
      %c1_i32_24 = arith.constant 1 : i32
      %30 = arith.addi %1, %c1_i32_24 : i32
      %c0_25 = arith.constant 0 : index
      %31 = arith.index_cast %30 : i32 to index
      %c2_26 = arith.constant 2 : index
      %c0_27 = arith.constant 0 : index
      %32 = vector.load %arg1[%c0_25, %31, %c2_26, %c0_27] : memref<1x12x12x32xbf16, #tpu.memory_space<vmem>>, vector<1x1x8x32xbf16>
      %33 = vector.shape_cast %32 : vector<1x1x8x32xbf16> to vector<8x32xbf16>
      %c1_i32_28 = arith.constant 1 : i32
      %34 = arith.addi %1, %c1_i32_28 : i32
      %c0_29 = arith.constant 0 : index
      %35 = arith.index_cast %34 : i32 to index
      %c3_30 = arith.constant 3 : index
      %c0_31 = arith.constant 0 : index
      %36 = vector.load %arg1[%c0_29, %35, %c3_30, %c0_31] : memref<1x12x12x32xbf16, #tpu.memory_space<vmem>>, vector<1x1x8x32xbf16>
      %37 = vector.shape_cast %36 : vector<1x1x8x32xbf16> to vector<8x32xbf16>
      %c1_i32_32 = arith.constant 1 : i32
      %38 = arith.addi %1, %c1_i32_32 : i32
      %c0_33 = arith.constant 0 : index
      %39 = arith.index_cast %38 : i32 to index
      %c4_34 = arith.constant 4 : index
      %c0_35 = arith.constant 0 : index
      %40 = vector.load %arg1[%c0_33, %39, %c4_34, %c0_35] : memref<1x12x12x32xbf16, #tpu.memory_space<vmem>>, vector<1x1x8x32xbf16>
      %41 = vector.shape_cast %40 : vector<1x1x8x32xbf16> to vector<8x32xbf16>
      %c2_i32_36 = arith.constant 2 : i32
      %42 = arith.addi %1, %c2_i32_36 : i32
      %c0_37 = arith.constant 0 : index
      %43 = arith.index_cast %42 : i32 to index
      %c0_38 = arith.constant 0 : index
      %c0_39 = arith.constant 0 : index
      %44 = vector.load %arg1[%c0_37, %43, %c0_38, %c0_39] : memref<1x12x12x32xbf16, #tpu.memory_space<vmem>>, vector<1x1x8x32xbf16>
      %45 = vector.shape_cast %44 : vector<1x1x8x32xbf16> to vector<8x32xbf16>
      %c2_i32_40 = arith.constant 2 : i32
      %46 = arith.addi %1, %c2_i32_40 : i32
      %c0_41 = arith.constant 0 : index
      %47 = arith.index_cast %46 : i32 to index
      %c1_42 = arith.constant 1 : index
      %c0_43 = arith.constant 0 : index
      %48 = vector.load %arg1[%c0_41, %47, %c1_42, %c0_43] : memref<1x12x12x32xbf16, #tpu.memory_space<vmem>>, vector<1x1x8x32xbf16>
      %49 = vector.shape_cast %48 : vector<1x1x8x32xbf16> to vector<8x32xbf16>
      %c2_i32_44 = arith.constant 2 : i32
      %50 = arith.addi %1, %c2_i32_44 : i32
      %c0_45 = arith.constant 0 : index
      %51 = arith.index_cast %50 : i32 to index
      %c2_46 = arith.constant 2 : index
      %c0_47 = arith.constant 0 : index
      %52 = vector.load %arg1[%c0_45, %51, %c2_46, %c0_47] : memref<1x12x12x32xbf16, #tpu.memory_space<vmem>>, vector<1x1x8x32xbf16>
      %53 = vector.shape_cast %52 : vector<1x1x8x32xbf16> to vector<8x32xbf16>
      %c2_i32_48 = arith.constant 2 : i32
      %54 = arith.addi %1, %c2_i32_48 : i32
      %c0_49 = arith.constant 0 : index
      %55 = arith.index_cast %54 : i32 to index
      %c3_50 = arith.constant 3 : index
      %c0_51 = arith.constant 0 : index
      %56 = vector.load %arg1[%c0_49, %55, %c3_50, %c0_51] : memref<1x12x12x32xbf16, #tpu.memory_space<vmem>>, vector<1x1x8x32xbf16>
      %57 = vector.shape_cast %56 : vector<1x1x8x32xbf16> to vector<8x32xbf16>
      %c2_i32_52 = arith.constant 2 : i32
      %58 = arith.addi %1, %c2_i32_52 : i32
      %c0_53 = arith.constant 0 : index
      %59 = arith.index_cast %58 : i32 to index
      %c4_54 = arith.constant 4 : index
      %c0_55 = arith.constant 0 : index
      %60 = vector.load %arg1[%c0_53, %59, %c4_54, %c0_55] : memref<1x12x12x32xbf16, #tpu.memory_space<vmem>>, vector<1x1x8x32xbf16>
      %61 = vector.shape_cast %60 : vector<1x1x8x32xbf16> to vector<8x32xbf16>
      %c3_i32 = arith.constant 3 : i32
      %62 = arith.addi %1, %c3_i32 : i32
      %c0_56 = arith.constant 0 : index
      %63 = arith.index_cast %62 : i32 to index
      %c0_57 = arith.constant 0 : index
      %c0_58 = arith.constant 0 : index
      %64 = vector.load %arg1[%c0_56, %63, %c0_57, %c0_58] : memref<1x12x12x32xbf16, #tpu.memory_space<vmem>>, vector<1x1x8x32xbf16>
      %65 = vector.shape_cast %64 : vector<1x1x8x32xbf16> to vector<8x32xbf16>
      %c3_i32_59 = arith.constant 3 : i32
      %66 = arith.addi %1, %c3_i32_59 : i32
      %c0_60 = arith.constant 0 : index
      %67 = arith.index_cast %66 : i32 to index
      %c1_61 = arith.constant 1 : index
      %c0_62 = arith.constant 0 : index
      %68 = vector.load %arg1[%c0_60, %67, %c1_61, %c0_62] : memref<1x12x12x32xbf16, #tpu.memory_space<vmem>>, vector<1x1x8x32xbf16>
      %69 = vector.shape_cast %68 : vector<1x1x8x32xbf16> to vector<8x32xbf16>
      %c3_i32_63 = arith.constant 3 : i32
      %70 = arith.addi %1, %c3_i32_63 : i32
      %c0_64 = arith.constant 0 : index
      %71 = arith.index_cast %70 : i32 to index
      %c2_65 = arith.constant 2 : index
      %c0_66 = arith.constant 0 : index
      %72 = vector.load %arg1[%c0_64, %71, %c2_65, %c0_66] : memref<1x12x12x32xbf16, #tpu.memory_space<vmem>>, vector<1x1x8x32xbf16>
      %73 = vector.shape_cast %72 : vector<1x1x8x32xbf16> to vector<8x32xbf16>
      %c3_i32_67 = arith.constant 3 : i32
      %74 = arith.addi %1, %c3_i32_67 : i32
      %c0_68 = arith.constant 0 : index
      %75 = arith.index_cast %74 : i32 to index
      %c3_69 = arith.constant 3 : index
      %c0_70 = arith.constant 0 : index
      %76 = vector.load %arg1[%c0_68, %75, %c3_69, %c0_70] : memref<1x12x12x32xbf16, #tpu.memory_space<vmem>>, vector<1x1x8x32xbf16>
      %77 = vector.shape_cast %76 : vector<1x1x8x32xbf16> to vector<8x32xbf16>
      %c3_i32_71 = arith.constant 3 : i32
      %78 = arith.addi %1, %c3_i32_71 : i32
      %c0_72 = arith.constant 0 : index
      %79 = arith.index_cast %78 : i32 to index
      %c4_73 = arith.constant 4 : index
      %c0_74 = arith.constant 0 : index
      %80 = vector.load %arg1[%c0_72, %79, %c4_73, %c0_74] : memref<1x12x12x32xbf16, #tpu.memory_space<vmem>>, vector<1x1x8x32xbf16>
      %81 = vector.shape_cast %80 : vector<1x1x8x32xbf16> to vector<8x32xbf16>
      %c4_i32_75 = arith.constant 4 : i32
      %82 = arith.addi %1, %c4_i32_75 : i32
      %c0_76 = arith.constant 0 : index
      %83 = arith.index_cast %82 : i32 to index
      %c0_77 = arith.constant 0 : index
      %c0_78 = arith.constant 0 : index
      %84 = vector.load %arg1[%c0_76, %83, %c0_77, %c0_78] : memref<1x12x12x32xbf16, #tpu.memory_space<vmem>>, vector<1x1x8x32xbf16>
      %85 = vector.shape_cast %84 : vector<1x1x8x32xbf16> to vector<8x32xbf16>
      %c4_i32_79 = arith.constant 4 : i32
      %86 = arith.addi %1, %c4_i32_79 : i32
      %c0_80 = arith.constant 0 : index
      %87 = arith.index_cast %86 : i32 to index
      %c1_81 = arith.constant 1 : index
      %c0_82 = arith.constant 0 : index
      %88 = vector.load %arg1[%c0_80, %87, %c1_81, %c0_82] : memref<1x12x12x32xbf16, #tpu.memory_space<vmem>>, vector<1x1x8x32xbf16>
      %89 = vector.shape_cast %88 : vector<1x1x8x32xbf16> to vector<8x32xbf16>
      %c4_i32_83 = arith.constant 4 : i32
      %90 = arith.addi %1, %c4_i32_83 : i32
      %c0_84 = arith.constant 0 : index
      %91 = arith.index_cast %90 : i32 to index
      %c2_85 = arith.constant 2 : index
      %c0_86 = arith.constant 0 : index
      %92 = vector.load %arg1[%c0_84, %91, %c2_85, %c0_86] : memref<1x12x12x32xbf16, #tpu.memory_space<vmem>>, vector<1x1x8x32xbf16>
      %93 = vector.shape_cast %92 : vector<1x1x8x32xbf16> to vector<8x32xbf16>
      %c4_i32_87 = arith.constant 4 : i32
      %94 = arith.addi %1, %c4_i32_87 : i32
      %c0_88 = arith.constant 0 : index
      %95 = arith.index_cast %94 : i32 to index
      %c3_89 = arith.constant 3 : index
      %c0_90 = arith.constant 0 : index
      %96 = vector.load %arg1[%c0_88, %95, %c3_89, %c0_90] : memref<1x12x12x32xbf16, #tpu.memory_space<vmem>>, vector<1x1x8x32xbf16>
      %97 = vector.shape_cast %96 : vector<1x1x8x32xbf16> to vector<8x32xbf16>
      %c4_i32_91 = arith.constant 4 : i32
      %98 = arith.addi %1, %c4_i32_91 : i32
      %c0_92 = arith.constant 0 : index
      %99 = arith.index_cast %98 : i32 to index
      %c4_93 = arith.constant 4 : index
      %c0_94 = arith.constant 0 : index
      %100 = vector.load %arg1[%c0_92, %99, %c4_93, %c0_94] : memref<1x12x12x32xbf16, #tpu.memory_space<vmem>>, vector<1x1x8x32xbf16>
      %101 = vector.shape_cast %100 : vector<1x1x8x32xbf16> to vector<8x32xbf16>
      %102 = tpu.concatenate %5, %9, %13, %17, %21, %25, %29, %33, %37, %41, %45, %49, %53, %57, %61, %65 in 1 : vector<8x32xbf16>, vector<8x32xbf16>, vector<8x32xbf16>, vector<8x32xbf16>, vector<8x32xbf16>, vector<8x32xbf16>, vector<8x32xbf16>, vector<8x32xbf16>, vector<8x32xbf16>, vector<8x32xbf16>, vector<8x32xbf16>, vector<8x32xbf16>, vector<8x32xbf16>, vector<8x32xbf16>, vector<8x32xbf16>, vector<8x32xbf16> -> vector<8x512xbf16>
      %103 = tpu.concatenate %69, %73, %77, %81, %85, %89, %93, %97, %101 in 1 : vector<8x32xbf16>, vector<8x32xbf16>, vector<8x32xbf16>, vector<8x32xbf16>, vector<8x32xbf16>, vector<8x32xbf16>, vector<8x32xbf16>, vector<8x32xbf16>, vector<8x32xbf16> -> vector<8x288xbf16>
      %104 = tpu.concatenate %102, %103 in 1 : vector<8x512xbf16>, vector<8x288xbf16> -> vector<8x800xbf16>
      %c0_95 = arith.constant 0 : index
      %c0_96 = arith.constant 0 : index
      %105 = vector.load %arg2[%c0_95, %c0_96] : memref<800x64xbf16, #tpu.memory_space<vmem>>, vector<800x64xbf16>
      %cst = arith.constant dense<0.000000e+00> : vector<8x64xf32>
      %106 = tpu.matmul %104, %105, %cst {dimension_numbers = #tpu.dot_dimension_numbers<[1], [0], [0], [1], [0, 0, 1, 1], [], []>} : vector<8x800xbf16>, vector<800x64xbf16>, vector<8x64xf32> -> vector<8x64xf32>
      %c1_i32_97 = arith.constant 1 : i32
      %107 = arith.addi %1, %c1_i32_97 : i32
      %c0_i32_98 = arith.constant 0 : i32
      %108 = arith.addi %107, %c0_i32_98 : i32
      %c0_99 = arith.constant 0 : index
      %109 = arith.index_cast %108 : i32 to index
      %c0_100 = arith.constant 0 : index
      %c0_101 = arith.constant 0 : index
      %110 = vector.load %arg1[%c0_99, %109, %c0_100, %c0_101] : memref<1x12x12x32xbf16, #tpu.memory_space<vmem>>, vector<1x1x8x32xbf16>
      %111 = vector.shape_cast %110 : vector<1x1x8x32xbf16> to vector<8x32xbf16>
      %c0_i32_102 = arith.constant 0 : i32
      %112 = arith.addi %107, %c0_i32_102 : i32
      %c0_103 = arith.constant 0 : index
      %113 = arith.index_cast %112 : i32 to index
      %c1_104 = arith.constant 1 : index
      %c0_105 = arith.constant 0 : index
      %114 = vector.load %arg1[%c0_103, %113, %c1_104, %c0_105] : memref<1x12x12x32xbf16, #tpu.memory_space<vmem>>, vector<1x1x8x32xbf16>
      %115 = vector.shape_cast %114 : vector<1x1x8x32xbf16> to vector<8x32xbf16>
      %c0_i32_106 = arith.constant 0 : i32
      %116 = arith.addi %107, %c0_i32_106 : i32
      %c0_107 = arith.constant 0 : index
      %117 = arith.index_cast %116 : i32 to index
      %c2_108 = arith.constant 2 : index
      %c0_109 = arith.constant 0 : index
      %118 = vector.load %arg1[%c0_107, %117, %c2_108, %c0_109] : memref<1x12x12x32xbf16, #tpu.memory_space<vmem>>, vector<1x1x8x32xbf16>
      %119 = vector.shape_cast %118 : vector<1x1x8x32xbf16> to vector<8x32xbf16>
      %c0_i32_110 = arith.constant 0 : i32
      %120 = arith.addi %107, %c0_i32_110 : i32
      %c0_111 = arith.constant 0 : index
      %121 = arith.index_cast %120 : i32 to index
      %c3_112 = arith.constant 3 : index
      %c0_113 = arith.constant 0 : index
      %122 = vector.load %arg1[%c0_111, %121, %c3_112, %c0_113] : memref<1x12x12x32xbf16, #tpu.memory_space<vmem>>, vector<1x1x8x32xbf16>
      %123 = vector.shape_cast %122 : vector<1x1x8x32xbf16> to vector<8x32xbf16>
      %c0_i32_114 = arith.constant 0 : i32
      %124 = arith.addi %107, %c0_i32_114 : i32
      %c0_115 = arith.constant 0 : index
      %125 = arith.index_cast %124 : i32 to index
      %c4_116 = arith.constant 4 : index
      %c0_117 = arith.constant 0 : index
      %126 = vector.load %arg1[%c0_115, %125, %c4_116, %c0_117] : memref<1x12x12x32xbf16, #tpu.memory_space<vmem>>, vector<1x1x8x32xbf16>
      %127 = vector.shape_cast %126 : vector<1x1x8x32xbf16> to vector<8x32xbf16>
      %c1_i32_118 = arith.constant 1 : i32
      %128 = arith.addi %107, %c1_i32_118 : i32
      %c0_119 = arith.constant 0 : index
      %129 = arith.index_cast %128 : i32 to index
      %c0_120 = arith.constant 0 : index
      %c0_121 = arith.constant 0 : index
      %130 = vector.load %arg1[%c0_119, %129, %c0_120, %c0_121] : memref<1x12x12x32xbf16, #tpu.memory_space<vmem>>, vector<1x1x8x32xbf16>
      %131 = vector.shape_cast %130 : vector<1x1x8x32xbf16> to vector<8x32xbf16>
      %c1_i32_122 = arith.constant 1 : i32
      %132 = arith.addi %107, %c1_i32_122 : i32
      %c0_123 = arith.constant 0 : index
      %133 = arith.index_cast %132 : i32 to index
      %c1_124 = arith.constant 1 : index
      %c0_125 = arith.constant 0 : index
      %134 = vector.load %arg1[%c0_123, %133, %c1_124, %c0_125] : memref<1x12x12x32xbf16, #tpu.memory_space<vmem>>, vector<1x1x8x32xbf16>
      %135 = vector.shape_cast %134 : vector<1x1x8x32xbf16> to vector<8x32xbf16>
      %c1_i32_126 = arith.constant 1 : i32
      %136 = arith.addi %107, %c1_i32_126 : i32
      %c0_127 = arith.constant 0 : index
      %137 = arith.index_cast %136 : i32 to index
      %c2_128 = arith.constant 2 : index
      %c0_129 = arith.constant 0 : index
      %138 = vector.load %arg1[%c0_127, %137, %c2_128, %c0_129] : memref<1x12x12x32xbf16, #tpu.memory_space<vmem>>, vector<1x1x8x32xbf16>
      %139 = vector.shape_cast %138 : vector<1x1x8x32xbf16> to vector<8x32xbf16>
      %c1_i32_130 = arith.constant 1 : i32
      %140 = arith.addi %107, %c1_i32_130 : i32
      %c0_131 = arith.constant 0 : index
      %141 = arith.index_cast %140 : i32 to index
      %c3_132 = arith.constant 3 : index
      %c0_133 = arith.constant 0 : index
      %142 = vector.load %arg1[%c0_131, %141, %c3_132, %c0_133] : memref<1x12x12x32xbf16, #tpu.memory_space<vmem>>, vector<1x1x8x32xbf16>
      %143 = vector.shape_cast %142 : vector<1x1x8x32xbf16> to vector<8x32xbf16>
      %c1_i32_134 = arith.constant 1 : i32
      %144 = arith.addi %107, %c1_i32_134 : i32
      %c0_135 = arith.constant 0 : index
      %145 = arith.index_cast %144 : i32 to index
      %c4_136 = arith.constant 4 : index
      %c0_137 = arith.constant 0 : index
      %146 = vector.load %arg1[%c0_135, %145, %c4_136, %c0_137] : memref<1x12x12x32xbf16, #tpu.memory_space<vmem>>, vector<1x1x8x32xbf16>
      %147 = vector.shape_cast %146 : vector<1x1x8x32xbf16> to vector<8x32xbf16>
      %c2_i32_138 = arith.constant 2 : i32
      %148 = arith.addi %107, %c2_i32_138 : i32
      %c0_139 = arith.constant 0 : index
      %149 = arith.index_cast %148 : i32 to index
      %c0_140 = arith.constant 0 : index
      %c0_141 = arith.constant 0 : index
      %150 = vector.load %arg1[%c0_139, %149, %c0_140, %c0_141] : memref<1x12x12x32xbf16, #tpu.memory_space<vmem>>, vector<1x1x8x32xbf16>
      %151 = vector.shape_cast %150 : vector<1x1x8x32xbf16> to vector<8x32xbf16>
      %c2_i32_142 = arith.constant 2 : i32
      %152 = arith.addi %107, %c2_i32_142 : i32
      %c0_143 = arith.constant 0 : index
      %153 = arith.index_cast %152 : i32 to index
      %c1_144 = arith.constant 1 : index
      %c0_145 = arith.constant 0 : index
      %154 = vector.load %arg1[%c0_143, %153, %c1_144, %c0_145] : memref<1x12x12x32xbf16, #tpu.memory_space<vmem>>, vector<1x1x8x32xbf16>
      %155 = vector.shape_cast %154 : vector<1x1x8x32xbf16> to vector<8x32xbf16>
      %c2_i32_146 = arith.constant 2 : i32
      %156 = arith.addi %107, %c2_i32_146 : i32
      %c0_147 = arith.constant 0 : index
      %157 = arith.index_cast %156 : i32 to index
      %c2_148 = arith.constant 2 : index
      %c0_149 = arith.constant 0 : index
      %158 = vector.load %arg1[%c0_147, %157, %c2_148, %c0_149] : memref<1x12x12x32xbf16, #tpu.memory_space<vmem>>, vector<1x1x8x32xbf16>
      %159 = vector.shape_cast %158 : vector<1x1x8x32xbf16> to vector<8x32xbf16>
      %c2_i32_150 = arith.constant 2 : i32
      %160 = arith.addi %107, %c2_i32_150 : i32
      %c0_151 = arith.constant 0 : index
      %161 = arith.index_cast %160 : i32 to index
      %c3_152 = arith.constant 3 : index
      %c0_153 = arith.constant 0 : index
      %162 = vector.load %arg1[%c0_151, %161, %c3_152, %c0_153] : memref<1x12x12x32xbf16, #tpu.memory_space<vmem>>, vector<1x1x8x32xbf16>
      %163 = vector.shape_cast %162 : vector<1x1x8x32xbf16> to vector<8x32xbf16>
      %c2_i32_154 = arith.constant 2 : i32
      %164 = arith.addi %107, %c2_i32_154 : i32
      %c0_155 = arith.constant 0 : index
      %165 = arith.index_cast %164 : i32 to index
      %c4_156 = arith.constant 4 : index
      %c0_157 = arith.constant 0 : index
      %166 = vector.load %arg1[%c0_155, %165, %c4_156, %c0_157] : memref<1x12x12x32xbf16, #tpu.memory_space<vmem>>, vector<1x1x8x32xbf16>
      %167 = vector.shape_cast %166 : vector<1x1x8x32xbf16> to vector<8x32xbf16>
      %c3_i32_158 = arith.constant 3 : i32
      %168 = arith.addi %107, %c3_i32_158 : i32
      %c0_159 = arith.constant 0 : index
      %169 = arith.index_cast %168 : i32 to index
      %c0_160 = arith.constant 0 : index
      %c0_161 = arith.constant 0 : index
      %170 = vector.load %arg1[%c0_159, %169, %c0_160, %c0_161] : memref<1x12x12x32xbf16, #tpu.memory_space<vmem>>, vector<1x1x8x32xbf16>
      %171 = vector.shape_cast %170 : vector<1x1x8x32xbf16> to vector<8x32xbf16>
      %c3_i32_162 = arith.constant 3 : i32
      %172 = arith.addi %107, %c3_i32_162 : i32
      %c0_163 = arith.constant 0 : index
      %173 = arith.index_cast %172 : i32 to index
      %c1_164 = arith.constant 1 : index
      %c0_165 = arith.constant 0 : index
      %174 = vector.load %arg1[%c0_163, %173, %c1_164, %c0_165] : memref<1x12x12x32xbf16, #tpu.memory_space<vmem>>, vector<1x1x8x32xbf16>
      %175 = vector.shape_cast %174 : vector<1x1x8x32xbf16> to vector<8x32xbf16>
      %c3_i32_166 = arith.constant 3 : i32
      %176 = arith.addi %107, %c3_i32_166 : i32
      %c0_167 = arith.constant 0 : index
      %177 = arith.index_cast %176 : i32 to index
      %c2_168 = arith.constant 2 : index
      %c0_169 = arith.constant 0 : index
      %178 = vector.load %arg1[%c0_167, %177, %c2_168, %c0_169] : memref<1x12x12x32xbf16, #tpu.memory_space<vmem>>, vector<1x1x8x32xbf16>
      %179 = vector.shape_cast %178 : vector<1x1x8x32xbf16> to vector<8x32xbf16>
      %c3_i32_170 = arith.constant 3 : i32
      %180 = arith.addi %107, %c3_i32_170 : i32
      %c0_171 = arith.constant 0 : index
      %181 = arith.index_cast %180 : i32 to index
      %c3_172 = arith.constant 3 : index
      %c0_173 = arith.constant 0 : index
      %182 = vector.load %arg1[%c0_171, %181, %c3_172, %c0_173] : memref<1x12x12x32xbf16, #tpu.memory_space<vmem>>, vector<1x1x8x32xbf16>
      %183 = vector.shape_cast %182 : vector<1x1x8x32xbf16> to vector<8x32xbf16>
      %c3_i32_174 = arith.constant 3 : i32
      %184 = arith.addi %107, %c3_i32_174 : i32
      %c0_175 = arith.constant 0 : index
      %185 = arith.index_cast %184 : i32 to index
      %c4_176 = arith.constant 4 : index
      %c0_177 = arith.constant 0 : index
      %186 = vector.load %arg1[%c0_175, %185, %c4_176, %c0_177] : memref<1x12x12x32xbf16, #tpu.memory_space<vmem>>, vector<1x1x8x32xbf16>
      %187 = vector.shape_cast %186 : vector<1x1x8x32xbf16> to vector<8x32xbf16>
      %c4_i32_178 = arith.constant 4 : i32
      %188 = arith.addi %107, %c4_i32_178 : i32
      %c0_179 = arith.constant 0 : index
      %189 = arith.index_cast %188 : i32 to index
      %c0_180 = arith.constant 0 : index
      %c0_181 = arith.constant 0 : index
      %190 = vector.load %arg1[%c0_179, %189, %c0_180, %c0_181] : memref<1x12x12x32xbf16, #tpu.memory_space<vmem>>, vector<1x1x8x32xbf16>
      %191 = vector.shape_cast %190 : vector<1x1x8x32xbf16> to vector<8x32xbf16>
      %c4_i32_182 = arith.constant 4 : i32
      %192 = arith.addi %107, %c4_i32_182 : i32
      %c0_183 = arith.constant 0 : index
      %193 = arith.index_cast %192 : i32 to index
      %c1_184 = arith.constant 1 : index
      %c0_185 = arith.constant 0 : index
      %194 = vector.load %arg1[%c0_183, %193, %c1_184, %c0_185] : memref<1x12x12x32xbf16, #tpu.memory_space<vmem>>, vector<1x1x8x32xbf16>
      %195 = vector.shape_cast %194 : vector<1x1x8x32xbf16> to vector<8x32xbf16>
      %c4_i32_186 = arith.constant 4 : i32
      %196 = arith.addi %107, %c4_i32_186 : i32
      %c0_187 = arith.constant 0 : index
      %197 = arith.index_cast %196 : i32 to index
      %c2_188 = arith.constant 2 : index
      %c0_189 = arith.constant 0 : index
      %198 = vector.load %arg1[%c0_187, %197, %c2_188, %c0_189] : memref<1x12x12x32xbf16, #tpu.memory_space<vmem>>, vector<1x1x8x32xbf16>
      %199 = vector.shape_cast %198 : vector<1x1x8x32xbf16> to vector<8x32xbf16>
      %c4_i32_190 = arith.constant 4 : i32
      %200 = arith.addi %107, %c4_i32_190 : i32
      %c0_191 = arith.constant 0 : index
      %201 = arith.index_cast %200 : i32 to index
      %c3_192 = arith.constant 3 : index
      %c0_193 = arith.constant 0 : index
      %202 = vector.load %arg1[%c0_191, %201, %c3_192, %c0_193] : memref<1x12x12x32xbf16, #tpu.memory_space<vmem>>, vector<1x1x8x32xbf16>
      %203 = vector.shape_cast %202 : vector<1x1x8x32xbf16> to vector<8x32xbf16>
      %c4_i32_194 = arith.constant 4 : i32
      %204 = arith.addi %107, %c4_i32_194 : i32
      %c0_195 = arith.constant 0 : index
      %205 = arith.index_cast %204 : i32 to index
      %c4_196 = arith.constant 4 : index
      %c0_197 = arith.constant 0 : index
      %206 = vector.load %arg1[%c0_195, %205, %c4_196, %c0_197] : memref<1x12x12x32xbf16, #tpu.memory_space<vmem>>, vector<1x1x8x32xbf16>
      %207 = vector.shape_cast %206 : vector<1x1x8x32xbf16> to vector<8x32xbf16>
      %208 = tpu.concatenate %111, %115, %119, %123, %127, %131, %135, %139, %143, %147, %151, %155, %159, %163, %167, %171 in 1 : vector<8x32xbf16>, vector<8x32xbf16>, vector<8x32xbf16>, vector<8x32xbf16>, vector<8x32xbf16>, vector<8x32xbf16>, vector<8x32xbf16>, vector<8x32xbf16>, vector<8x32xbf16>, vector<8x32xbf16>, vector<8x32xbf16>, vector<8x32xbf16>, vector<8x32xbf16>, vector<8x32xbf16>, vector<8x32xbf16>, vector<8x32xbf16> -> vector<8x512xbf16>
      %209 = tpu.concatenate %175, %179, %183, %187, %191, %195, %199, %203, %207 in 1 : vector<8x32xbf16>, vector<8x32xbf16>, vector<8x32xbf16>, vector<8x32xbf16>, vector<8x32xbf16>, vector<8x32xbf16>, vector<8x32xbf16>, vector<8x32xbf16>, vector<8x32xbf16> -> vector<8x288xbf16>
      %210 = tpu.concatenate %208, %209 in 1 : vector<8x512xbf16>, vector<8x288xbf16> -> vector<8x800xbf16>
      %c0_198 = arith.constant 0 : index
      %c0_199 = arith.constant 0 : index
      %211 = vector.load %arg2[%c0_198, %c0_199] : memref<800x64xbf16, #tpu.memory_space<vmem>>, vector<800x64xbf16>
      %cst_200 = arith.constant dense<0.000000e+00> : vector<8x64xf32>
      %212 = tpu.matmul %210, %211, %cst_200 {dimension_numbers = #tpu.dot_dimension_numbers<[1], [0], [0], [1], [0, 0, 1, 1], [], []>} : vector<8x800xbf16>, vector<800x64xbf16>, vector<8x64xf32> -> vector<8x64xf32>
      %213 = arith.maximumf %106, %212 : vector<8x64xf32>
      %c0_201 = arith.constant 0 : index
      %c0_202 = arith.constant 0 : index
      %214 = vector.load %arg5[%c0_201, %c0_202] : memref<8x64xf32, #tpu.memory_space<vmem>>, vector<8x64xf32>
      tpu.vector_store %arg5[%c0_201, %c0_202], %213 {strides = array<i32>} : memref<8x64xf32, #tpu.memory_space<vmem>>, vector<8x64xf32>,
      %c0_203 = arith.constant 0 : index
      %c0_204 = arith.constant 0 : index
      %215 = tpu.strided_load %arg5[%c0_203, %c0_204] {strides = array<i32: 2, 1>} : memref<8x64xf32, #tpu.memory_space<vmem>>, vector<4x64xf32>
      %c1_205 = arith.constant 1 : index
      %c0_206 = arith.constant 0 : index
      %216 = tpu.strided_load %arg5[%c1_205, %c0_206] {strides = array<i32: 2, 1>} : memref<8x64xf32, #tpu.memory_space<vmem>>, vector<4x64xf32>
      %217 = arith.maximumf %215, %216 : vector<4x64xf32>
      %c0_207 = arith.constant 0 : index
      %c0_208 = arith.constant 0 : index
      %218 = vector.load %arg3[%c0_207, %c0_208] : memref<1x64xf32, #tpu.memory_space<vmem>>, vector<1x64xf32>
      %219 = vector.broadcast %218 : vector<1x64xf32> to vector<4x64xf32>
      %220 = arith.addf %217, %219 : vector<4x64xf32>
      %221 = arith.truncf %220 : vector<4x64xf32> to vector<4x64xbf16>
      %c0_209 = arith.constant 0 : index
      %222 = arith.index_cast %arg6 : i32 to index
      %c0_210 = arith.constant 0 : index
      %c0_211 = arith.constant 0 : index
      %223 = vector.load %arg4[%c0_209, %222, %c0_210, %c0_211] : memref<1x4x4x64xbf16, #tpu.memory_space<vmem>>, vector<1x1x4x64xbf16>
      %224 = vector.shape_cast %223 : vector<1x1x4x64xbf16> to vector<4x64xbf16>
      %225 = vector.shape_cast %221 : vector<4x64xbf16> to vector<1x1x4x64xbf16>
      tpu.vector_store %arg4[%c0_209, %222, %c0_210, %c0_211], %225 {strides = array<i32>} : memref<1x4x4x64xbf16, #tpu.memory_space<vmem>>, vector<1x1x4x64xbf16>,
    }
    %c4_i32_0 = arith.constant 4 : i32
    return
  }
  func.func @transform_0(%arg0: i32) -> (i32, i32, i32, i32) {
    %c0_i32 = arith.constant 0 : i32
    %c0_i32_0 = arith.constant 0 : i32
    %c0_i32_1 = arith.constant 0 : i32
    %c0_i32_2 = arith.constant 0 : i32
    return %arg0, %c0_i32, %c0_i32_0, %c0_i32_1 : i32, i32, i32, i32
  }
  func.func @transform_1(%arg0: i32) -> (i32, i32) {
    %c0_i32 = arith.constant 0 : i32
    %c0_i32_0 = arith.constant 0 : i32
    %c0_i32_1 = arith.constant 0 : i32
    return %c0_i32, %c0_i32_0 : i32, i32
  }
  func.func @transform_2(%arg0: i32) -> (i32, i32) {
    %c0_i32 = arith.constant 0 : i32
    %c0_i32_0 = arith.constant 0 : i32
    %c0_i32_1 = arith.constant 0 : i32
    return %c0_i32, %c0_i32_0 : i32, i32
  }
  func.func @transform_3(%arg0: i32) -> (i32, i32, i32, i32) {
    %c0_i32 = arith.constant 0 : i32
    %c0_i32_0 = arith.constant 0 : i32
    %c0_i32_1 = arith.constant 0 : i32
    %c0_i32_2 = arith.constant 0 : i32
    return %arg0, %c0_i32, %c0_i32_0, %c0_i32_1 : i32, i32, i32, i32
  }
}

module attributes {stable_mosaic.version = 11 : i64} {
  func.func @_fc2_kernel(%arg0: memref<2x1024xbf16, #tpu.memory_space<vmem>>, %arg1: memref<1024x64xbf16, #tpu.memory_space<vmem>>, %arg2: memref<1x64xf32, #tpu.memory_space<vmem>>, %arg3: memref<64x10xf32, #tpu.memory_space<vmem>>, %arg4: memref<1x10xf32, #tpu.memory_space<vmem>>, %arg5: memref<2x10xf32, #tpu.memory_space<vmem>>) attributes {dimension_semantics = [], scalar_prefetch = 0 : i64, scratch_operands = 0 : i64, tpu.core_type = #tpu.core_type<tc>} {
    %c0 = arith.constant 0 : index
    %c0_0 = arith.constant 0 : index
    %0 = vector.load %arg0[%c0, %c0_0] : memref<2x1024xbf16, #tpu.memory_space<vmem>>, vector<2x1024xbf16>
    %c0_1 = arith.constant 0 : index
    %c0_2 = arith.constant 0 : index
    %1 = vector.load %arg1[%c0_1, %c0_2] : memref<1024x64xbf16, #tpu.memory_space<vmem>>, vector<1024x64xbf16>
    %cst = arith.constant dense<0.000000e+00> : vector<2x64xf32>
    %2 = tpu.matmul %0, %1, %cst {dimension_numbers = #tpu.dot_dimension_numbers<[1], [0], [0], [1], [0, 0, 1, 1], [], []>} : vector<2x1024xbf16>, vector<1024x64xbf16>, vector<2x64xf32> -> vector<2x64xf32>
    %c0_3 = arith.constant 0 : index
    %c0_4 = arith.constant 0 : index
    %3 = vector.load %arg2[%c0_3, %c0_4] : memref<1x64xf32, #tpu.memory_space<vmem>>, vector<1x64xf32>
    %4 = vector.broadcast %3 : vector<1x64xf32> to vector<2x64xf32>
    %5 = arith.addf %2, %4 : vector<2x64xf32>
    %c0_5 = arith.constant 0 : index
    %c0_6 = arith.constant 0 : index
    %6 = vector.load %arg3[%c0_5, %c0_6] : memref<64x10xf32, #tpu.memory_space<vmem>>, vector<64x10xf32>
    %cst_7 = arith.constant dense<0.000000e+00> : vector<2x10xf32>
    %7 = tpu.matmul %5, %6, %cst_7 {dimension_numbers = #tpu.dot_dimension_numbers<[1], [0], [0], [1], [0, 0, 1, 1], [], []>} : vector<2x64xf32>, vector<64x10xf32>, vector<2x10xf32> -> vector<2x10xf32>
    %c0_8 = arith.constant 0 : index
    %c0_9 = arith.constant 0 : index
    %8 = vector.load %arg4[%c0_8, %c0_9] : memref<1x10xf32, #tpu.memory_space<vmem>>, vector<1x10xf32>
    %9 = vector.broadcast %8 : vector<1x10xf32> to vector<2x10xf32>
    %10 = arith.addf %7, %9 : vector<2x10xf32>
    %c0_10 = arith.constant 0 : index
    %c0_11 = arith.constant 0 : index
    %11 = vector.load %arg5[%c0_10, %c0_11] : memref<2x10xf32, #tpu.memory_space<vmem>>, vector<2x10xf32>
    tpu.vector_store %arg5[%c0_10, %c0_11], %10 {strides = array<i32>} : memref<2x10xf32, #tpu.memory_space<vmem>>, vector<2x10xf32>,
    return
  }
}

</mosaic_0001>

<llo_original>
// kernel: model_forward.4
$region0: #{model_forward.4}
  #allocation0 [shape = 'u32[]', space=smem, size = 0x4, offset = 0x4, fixed_abs, tag = 'smem constant byte address 0x4 - core index']
  #allocation1 [shape = 'u32[144,128]{1,0:T(1,128)}', space=vmem, size = 0x12000, scoped, tag = 'internal scratch']
  #allocation2 [shape = 'f32[32,32]{1,0:T(8,128)}', space=vmem, size = 0x4000, scoped, tag = 'scratch operand']
  %s0 = inlined_call_operand.vmem [shape: bf16[2,36,36,3], index: 0, kind: input, shape index: {}]
  %s1 = inlined_call_operand.vmem [shape: bf16[75,32], index: 1, kind: input, shape index: {}]
  %s2 = inlined_call_operand.vmem [shape: f32[1,32], index: 2, kind: input, shape index: {}]
  %s3 = inlined_call_operand.vmem [shape: bf16[2,16,16,32], index: 3, kind: output, shape index: {}]
  %s4 = sld [smem:[#allocation0]]
  $region52: #{model_forward.4} parent=0
    _
  %s6 = ssub.s32 1, %s4
  %s7 = scalar_select 0, %s6, %s4
  loop: start=0, step=1, limit=4
  $region2: #{model_forward.4} parent=0 // loop_pre_header
    _
  $region3: #{model_forward.4} parent=0 // loop_header
    %s9 = sphi 0, %s13
    %p10 = scmp.ge.s32.totalorder %s9, 4
    %s19 = sphi 0, %s21
    %s22 = sphi 0, %s19
    %s23 = sphi 0, %s22
    %s39 = sphi 0, %s23
    %s43 = sphi 0, %s43
    %s45 = sphi 0, %s43
    %s46 = sphi 0, %s45
    %s60 = sphi 0, %s46
    %s64 = sphi 0, %s64
    %s66 = sphi 0, %s64
    %s67 = sphi 0, %s66
    %s81 = sphi 0, %s67
    %s87 = sphi 0, %s89
    %s90 = sphi 0, %s87
    %s91 = sphi 0, %s90
    %s107 = sphi 0, %s91
  $region4: #{model_forward.4} parent=0 // loop_header_branch
    %12 = sbr.rel (%p10) target = $region8
  $region5: #{model_forward.4} parent=0 // loop_body
    %s14 = ssub.s32 %s9, 1
    %s15 = ssub.s32 %s9, 2
    %s16 = sadd.s32 %s9, 1
    %s17 = ssub.s32 %s9, %s16
    %p18 = scmp.eq.s32.totalorder %s17, 0
    %s20 = sadd.s32 %s19, 1
    %s21 = scalar_select %p18, %s19, %s20
    %p24 = pneg %p18
    %p25 = scmp.eq.s32.totalorder %s9, 1
    %p26 = por %p24, %p25
    %p27 = scmp.ne.s32.totalorder %s19, %s22
    %p28 = scmp.eq.s32.totalorder %s9, 0
    %p29 = por %p27, %p28
    %p30 = scmp.ne.s32.totalorder %s19, %s22
    %p31 = scmp.eq.s32.totalorder %s14, 1
    %p32 = por %p30, %p31
    %p33 = scmp.ne.s32.totalorder %s22, %s23
    %p34 = scmp.eq.s32.totalorder %s14, 0
    %p35 = por %p33, %p34
    %p36 = scmp.ne.s32.totalorder %s22, %s23
    %p37 = scmp.eq.s32.totalorder %s15, 1
    %p38 = por %p36, %p37
    %p40 = scmp.ne.s32.totalorder %s23, %s39
    %p41 = scmp.eq.s32.totalorder %s15, 0
    %p42 = por %p40, %p41
    %s44 = sadd.s32 %s43, 1
    %p47 = scmp.eq.s32.totalorder %s9, 1
    %p48 = scmp.ne.s32.totalorder %s43, %s45
    %p49 = scmp.eq.s32.totalorder %s9, 0
    %p50 = por %p48, %p49
    %p51 = scmp.ne.s32.totalorder %s43, %s45
    %p52 = scmp.eq.s32.totalorder %s14, 1
    %p53 = por %p51, %p52
    %p54 = scmp.ne.s32.totalorder %s45, %s46
    %p55 = scmp.eq.s32.totalorder %s14, 0
    %p56 = por %p54, %p55
    %p57 = scmp.ne.s32.totalorder %s45, %s46
    %p58 = scmp.eq.s32.totalorder %s15, 1
    %p59 = por %p57, %p58
    %p61 = scmp.ne.s32.totalorder %s46, %s60
    %p62 = scmp.eq.s32.totalorder %s15, 0
    %p63 = por %p61, %p62
    %s65 = sadd.s32 %s64, 1
    %p68 = scmp.eq.s32.totalorder %s9, 1
    %p69 = scmp.ne.s32.totalorder %s64, %s66
    %p70 = scmp.eq.s32.totalorder %s9, 0
    %p71 = por %p69, %p70
    %p72 = scmp.ne.s32.totalorder %s64, %s66
    %p73 = scmp.eq.s32.totalorder %s14, 1
    %p74 = por %p72, %p73
    %p75 = scmp.ne.s32.totalorder %s66, %s67
    %p76 = scmp.eq.s32.totalorder %s14, 0
    %p77 = por %p75, %p76
    %p78 = scmp.ne.s32.totalorder %s66, %s67
    %p79 = scmp.eq.s32.totalorder %s15, 1
    %p80 = por %p78, %p79
    %p82 = scmp.ne.s32.totalorder %s67, %s81
    %p83 = scmp.eq.s32.totalorder %s15, 0
    %p84 = por %p82, %p83
    %s85 = ssub.s32 %s9, %s16
    %p86 = scmp.eq.s32.totalorder %s85, 0
    %s88 = sadd.s32 %s87, 1
    %s89 = scalar_select %p86, %s87, %s88
    %p92 = pneg %p86
    %p93 = scmp.eq.s32.totalorder %s9, 1
    %p94 = por %p92, %p93
    %p95 = scmp.ne.s32.totalorder %s87, %s90
    %p96 = scmp.eq.s32.totalorder %s9, 0
    %p97 = por %p95, %p96
    %p98 = scmp.ne.s32.totalorder %s87, %s90
    %p99 = scmp.eq.s32.totalorder %s14, 1
    %p100 = por %p98, %p99
    %p101 = scmp.ne.s32.totalorder %s90, %s91
    %p102 = scmp.eq.s32.totalorder %s14, 0
    %p103 = por %p101, %p102
    %p104 = scmp.ne.s32.totalorder %s90, %s91
    %p105 = scmp.eq.s32.totalorder %s15, 1
    %p106 = por %p104, %p105
    %p108 = scmp.ne.s32.totalorder %s91, %s107
    %p109 = scmp.eq.s32.totalorder %s15, 0
    %p110 = por %p108, %p109
    %p111 = scmp.le.s32.totalorder 1, %s9
    %p112 = scmp.lt.s32.totalorder %s9, 3
    %p113 = pnand %p111, %p112
    %p114 = pneg %p113
    // Predicated region
    $region9: #{model_forward.4} parent=5 // pred_check
      _
    $region10: #{model_forward.4} parent=5 // pred_check_branch
      %116 = sbr.rel (%p113) target = $region12
    $region11: #{model_forward.4} parent=5 // pred_region
      %s117 = ssub.s32 %s9, 1
      // Predicated region
      $region13: #{model_forward.4} parent=11 // pred_check
        %p118 = pneg %p56
      $region14: #{model_forward.4} parent=11 // pred_check_branch
        %120 = sbr.rel (%p118) target = $region16
      $region15: #{model_forward.4} parent=11 // pred_region
        _
      $region16: #{model_forward.4} parent=11 // pred_fallthru
        _
      // Predicated region
      $region17: #{model_forward.4} parent=11 // pred_check
        %p121 = pneg %p77
      $region18: #{model_forward.4} parent=11 // pred_check_branch
        %123 = sbr.rel (%p121) target = $region20
      $region19: #{model_forward.4} parent=11 // pred_region
        _
      $region20: #{model_forward.4} parent=11 // pred_fallthru
        _
    $region12: #{model_forward.4} parent=5 // pred_fallthru
      _
    %p124 = scmp.lt.s32.totalorder %s9, 2
    // Predicated region
    $region21: #{model_forward.4} parent=5 // pred_check
      %p125 = pneg %p124
    $region22: #{model_forward.4} parent=5 // pred_check_branch
      %127 = sbr.rel (%p125) target = $region24
    $region23: #{model_forward.4} parent=5 // pred_region
      // Predicated region
      $region25: #{model_forward.4} parent=23 // pred_check
        %p128 = pneg %p29
      $region26: #{model_forward.4} parent=23 // pred_check_branch
        %130 = sbr.rel (%p128) target = $region28
      $region27: #{model_forward.4} parent=23 // pred_region
        %p131 = scmp.lt.s32.totalorder %s9, 1
        %s132 = scalar_select %p131, %s9, 1
        %s133 = smul.addr %s132, 180
        %s134 = smul.addr %s133, 4
        %s135 = scalar_lea.vmem %s0, %s134
      $region28: #{model_forward.4} parent=23 // pred_fallthru
        _
    $region24: #{model_forward.4} parent=5 // pred_fallthru
      _
    %p136 = scmp.le.s32.totalorder 1, %s9
    %p137 = scmp.lt.s32.totalorder %s9, 3
    %p138 = pnand %p136, %p137
    %p139 = pneg %p138
    // Predicated region
    $region29: #{model_forward.4} parent=5 // pred_check
      _
    $region30: #{model_forward.4} parent=5 // pred_check_branch
      %141 = sbr.rel (%p138) target = $region32
    $region31: #{model_forward.4} parent=5 // pred_region
      %s142 = ssub.s32 %s9, 1
      %p143 = scmp.lt.s32.totalorder %s14, 1
      %s144 = scalar_select %p143, %s14, 1
      %s145 = smul.addr %s144, 180
      %s146 = smul.addr %s145, 4
      %s147 = scalar_lea.vmem %s0, %s146
      %p148 = pneg %p35
      %p149 = pneg %p32
      %p150 = pneg %p56
      %p151 = pneg %p53
      %p152 = pneg %p77
      %p153 = pneg %p74
      %p154 = pneg %p103
      %p155 = pneg %p100
      %p156 = scmp.lt.s32.totalorder %s14, 1
      %s157 = scalar_select %p156, %s14, 1
      %s158 = smul.addr %s157, 32
      %s159 = smul.addr %s158, 4
      %s160 = scalar_lea.vmem %s3, %s159
      %p161 = scmp.lt.s32.totalorder %s14, 1
      %s162 = scalar_select %p161, %s14, 1
      %s163 = smul.addr %s162, 180
      %s164 = smul.addr %s163, 4
      %s165 = scalar_lea.vmem %s0, %s164
      %p166 = scmp.lt.s32.totalorder %s14, 1
      %s167 = scalar_select %p166, %s14, 1
      %s168 = smul.addr %s167, 32
      %s169 = smul.addr %s168, 4
      %s170 = scalar_lea.vmem %s3, %s169
      loop: start=0, step=1, limit=16
      $region33: #{model_forward.4} parent=31 // loop_pre_header
        _
      $region34: #{model_forward.4} parent=31 // loop_header
        %s173 = sphi 0, %s177
        %p174 = scmp.ge.s32.totalorder %s173, 16
      $region35: #{model_forward.4} parent=31 // loop_header_branch
        %176 = sbr.rel (%p174) target = $region39
      $region36: #{model_forward.4} parent=31 // loop_body
        %s178 = smul.u32 %s173, 2
        %s179 = smul.u32 %s178, 5
        %s180 = smul.addr %s179, 4
        %s181 = scalar_lea.vmem %s165, %s180
        %v182 = vld [vmem:[%s181] sm:$0xf]
        %v183 = vld [vmem:[%s181 + $0x4] sm:$0xf]
        %v184 = vld [vmem:[%s181 + $0x8] sm:$0xf]
        %v185 = vld [vmem:[%s181 + $0xc] sm:$0xf]
        %v186 = vld [vmem:[%s181 + $0x10] sm:$0x1]
        %v187 = vld [vmem:[%s181] sm:$0xe]
        %v188 = vld [vmem:[%s181 + $0x10] sm:$0x3]
        %v189 = vld [vmem:[%s181] sm:$0xc]
        %s190 = sadd.s32 %s178, 1
        %s191 = smul.u32 %s190, 5
        %s192 = smul.addr %s191, 4
        %s193 = scalar_lea.vmem %s165, %s192
        %v194 = vld [vmem:[%s193] sm:$0xf]
        %v195 = vld [vmem:[%s193 + $0x4] sm:$0xf]
        %v196 = vld [vmem:[%s193 + $0x8] sm:$0xf]
        %v197 = vld [vmem:[%s193 + $0xc] sm:$0xf]
        %v198 = vld [vmem:[%s193 + $0x10] sm:$0x1]
        %v199 = vld [vmem:[%s193] sm:$0xe]
        %v200 = vld [vmem:[%s193 + $0x10] sm:$0x3]
        %v201 = vld [vmem:[%s193] sm:$0xc]
        %s202 = sadd.s32 %s178, 2
        %s203 = smul.u32 %s202, 5
        %s204 = smul.addr %s203, 4
        %s205 = scalar_lea.vmem %s165, %s204
        %v206 = vld [vmem:[%s205] sm:$0xf]
        %v207 = vld [vmem:[%s205 + $0x4] sm:$0xf]
        %v208 = vld [vmem:[%s205 + $0x8] sm:$0xf]
        %v209 = vld [vmem:[%s205 + $0xc] sm:$0xf]
        %v210 = vld [vmem:[%s205 + $0x10] sm:$0x1]
        %v211 = vld [vmem:[%s205] sm:$0xe]
        %v212 = vld [vmem:[%s205 + $0x10] sm:$0x3]
        %v213 = vld [vmem:[%s205] sm:$0xc]
        %s214 = sadd.s32 %s178, 3
        %s215 = smul.u32 %s214, 5
        %s216 = smul.addr %s215, 4
        %s217 = scalar_lea.vmem %s165, %s216
        %v218 = vld [vmem:[%s217] sm:$0xf]
        %v219 = vld [vmem:[%s217 + $0x4] sm:$0xf]
        %v220 = vld [vmem:[%s217 + $0x8] sm:$0xf]
        %v221 = vld [vmem:[%s217 + $0xc] sm:$0xf]
        %v222 = vld [vmem:[%s217 + $0x10] sm:$0x1]
        %v223 = vld [vmem:[%s217] sm:$0xe]
        %v224 = vld [vmem:[%s217 + $0x10] sm:$0x3]
        %v225 = vld [vmem:[%s217] sm:$0xc]
        %s226 = sadd.s32 %s178, 4
        %s227 = smul.u32 %s226, 5
        %s228 = smul.addr %s227, 4
        %s229 = scalar_lea.vmem %s165, %s228
        %v230 = vld [vmem:[%s229] sm:$0xf]
        %v231 = vld [vmem:[%s229 + $0x4] sm:$0xf]
        %v232 = vld [vmem:[%s229 + $0x8] sm:$0xf]
        %v233 = vld [vmem:[%s229 + $0xc] sm:$0xf]
        %v234 = vld [vmem:[%s229 + $0x10] sm:$0x1]
        %v235 = vld [vmem:[%s229] sm:$0xe]
        %v236 = vld [vmem:[%s229 + $0x10] sm:$0x3]
        %v237 = vld [vmem:[%s229] sm:$0xc]
        %v242 = vunpack.c.l.b16 %v182
        %v243 = vunpack.c.l.b16 %v183
        %v244 = vunpack.c.l.b16 %v184
        %v245 = vunpack.c.l.b16 %v185
        %v246 = vpack.c.b16 %v243, %v242
        %v247 = vpack.c.b16 %v245, %v244
        %v249 = vunpack.c.l.b16 %v186
        %v250 = vpack.c.b16 %v249, %v249
        %vm251 = vsmask.f32 7424
        %v253 = vshrl.u32 %v246, 16
        %v255 = vshll.u32 %v246, 16
        %v257 = vrot.slane %v255, 1
        %v258 = vor.u32 %v253, %v257
        %v260 = vshll.u32 %v247, 16
        %v262 = vrot.slane %v260, 1
        %v263 = vsel %vm251, %v258, %v262
        %v264 = vshrl.u32 %v247, 16
        %v266 = vor.u32 %v264, %v262
        %v268 = vshll.u32 %v250, 16
        %v270 = vrot.slane %v268, 1
        %v271 = vsel %vm251, %v266, %v270
        %272 = vrot.lane.b32.xlu0 %v263, 3
        %v273 = vpop.permute.xlu0 %272
        %274 = vrot.lane.b32.xlu0 %v271, 3
        %v275 = vpop.permute.xlu0 %274
        %v277 = vunpack.c.l.b16 %v187
        %v278 = vpack.c.b16 %v243, %v277
        %vm279 = vcmask 1046528
        %v280 = vrot.slane %v278, 1
        %v281 = vrot.slane %v247, 1
        %v282 = vsel %vm279, %v280, %v281
        %v283 = vrot.slane %v250, 1
        %v284 = vsel %vm279, %v281, %v283
        %285 = vrot.lane.b32.xlu0 %v282, 6
        %v286 = vpop.permute.xlu0 %285
        %287 = vrot.lane.b32.xlu0 %v284, 6
        %v288 = vpop.permute.xlu0 %287
        %v290 = vunpack.c.l.b16 %v188
        %v291 = vpack.c.b16 %v290, %v290
        %vm292 = vsmask.f32 6400
        %v294 = vshrl.u32 %v278, 16
        %v296 = vrot.slane %v294, 1
        %v297 = vshll.u32 %v278, 16
        %v299 = vrot.slane %v297, 2
        %v300 = vor.u32 %v296, %v299
        %v301 = vrot.slane %v264, 1
        %v302 = vrot.slane %v260, 2
        %v303 = vor.u32 %v301, %v302
        %v304 = vsel %vm292, %v300, %v303
        %v306 = vshrl.u32 %v291, 16
        %v308 = vrot.slane %v306, 1
        %v309 = vshll.u32 %v291, 16
        %v311 = vrot.slane %v309, 2
        %v312 = vor.u32 %v308, %v311
        %v313 = vsel %vm292, %v303, %v312
        %314 = vrot.lane.b32.xlu0 %v304, 9
        %v315 = vpop.permute.xlu0 %314
        %316 = vrot.lane.b32.xlu0 %v313, 9
        %v317 = vpop.permute.xlu0 %316
        %v319 = vunpack.c.l.b16 %v189
        %v320 = vpack.c.b16 %v243, %v319
        %vm321 = vcmask 1045504
        %v322 = vrot.slane %v320, 2
        %v323 = vrot.slane %v247, 2
        %v324 = vsel %vm321, %v322, %v323
        %v325 = vrot.slane %v291, 2
        %v326 = vsel %vm321, %v323, %v325
        %327 = vrot.lane.b32.xlu0 %v324, 12
        %v328 = vpop.permute.xlu0 %327
        %329 = vrot.lane.b32.xlu0 %v326, 12
        %v330 = vpop.permute.xlu0 %329
        %v335 = vunpack.c.l.b16 %v194
        %v336 = vunpack.c.l.b16 %v195
        %v337 = vunpack.c.l.b16 %v196
        %v338 = vunpack.c.l.b16 %v197
        %v339 = vpack.c.b16 %v336, %v335
        %v340 = vpack.c.b16 %v338, %v337
        %341 = vrot.lane.b32.xlu0 %v339, 15
        %v342 = vpop.permute.xlu0 %341
        %343 = vrot.lane.b32.xlu0 %v340, 15
        %v344 = vpop.permute.xlu0 %343
        %v346 = vunpack.c.l.b16 %v198
        %v347 = vpack.c.b16 %v346, %v346
        %v349 = vshrl.u32 %v339, 16
        %v351 = vshll.u32 %v339, 16
        %v353 = vrot.slane %v351, 1
        %v354 = vor.u32 %v349, %v353
        %v356 = vshll.u32 %v340, 16
        %v358 = vrot.slane %v356, 1
        %v359 = vsel %vm251, %v354, %v358
        %v360 = vshrl.u32 %v340, 16
        %v362 = vor.u32 %v360, %v358
        %v364 = vshll.u32 %v347, 16
        %v366 = vrot.slane %v364, 1
        %v367 = vsel %vm251, %v362, %v366
        %368 = vrot.lane.b32.xlu0 %v359, 18
        %v369 = vpop.permute.xlu0 %368
        %370 = vrot.lane.b32.xlu0 %v367, 18
        %v371 = vpop.permute.xlu0 %370
        %v373 = vunpack.c.l.b16 %v199
        %v374 = vpack.c.b16 %v336, %v373
        %v375 = vrot.slane %v374, 1
        %v376 = vrot.slane %v340, 1
        %v377 = vsel %vm279, %v375, %v376
        %v378 = vrot.slane %v347, 1
        %v379 = vsel %vm279, %v376, %v378
        %380 = vrot.lane.b32.xlu0 %v377, 21
        %v381 = vpop.permute.xlu0 %380
        %382 = vrot.lane.b32.xlu0 %v379, 21
        %v383 = vpop.permute.xlu0 %382
        %v385 = vunpack.c.l.b16 %v200
        %v386 = vpack.c.b16 %v385, %v385
        %v388 = vshrl.u32 %v374, 16
        %v390 = vrot.slane %v388, 1
        %v391 = vshll.u32 %v374, 16
        %v393 = vrot.slane %v391, 2
        %v394 = vor.u32 %v390, %v393
        %v395 = vrot.slane %v360, 1
        %v396 = vrot.slane %v356, 2
        %v397 = vor.u32 %v395, %v396
        %v398 = vsel %vm292, %v394, %v397
        %v400 = vshrl.u32 %v386, 16
        %v402 = vrot.slane %v400, 1
        %v403 = vshll.u32 %v386, 16
        %v405 = vrot.slane %v403, 2
        %v406 = vor.u32 %v402, %v405
        %v407 = vsel %vm292, %v397, %v406
        %408 = vrot.lane.b32.xlu0 %v398, 24
        %v409 = vpop.permute.xlu0 %408
        %410 = vrot.lane.b32.xlu0 %v407, 24
        %v411 = vpop.permute.xlu0 %410
        %v413 = vunpack.c.l.b16 %v201
        %v414 = vpack.c.b16 %v336, %v413
        %v415 = vrot.slane %v414, 2
        %v416 = vrot.slane %v340, 2
        %v417 = vsel %vm321, %v415, %v416
        %v418 = vrot.slane %v386, 2
        %v419 = vsel %vm321, %v416, %v418
        %420 = vrot.lane.b32.xlu0 %v417, 27
        %v421 = vpop.permute.xlu0 %420
        %422 = vrot.lane.b32.xlu0 %v419, 27
        %v423 = vpop.permute.xlu0 %422
        %v428 = vunpack.c.l.b16 %v206
        %v429 = vunpack.c.l.b16 %v207
        %v430 = vunpack.c.l.b16 %v208
        %v431 = vunpack.c.l.b16 %v209
        %v432 = vpack.c.b16 %v429, %v428
        %v433 = vpack.c.b16 %v431, %v430
        %434 = vrot.lane.b32.xlu0 %v432, 30
        %v435 = vpop.permute.xlu0 %434
        %436 = vrot.lane.b32.xlu0 %v433, 30
        %v437 = vpop.permute.xlu0 %436
        %v439 = vunpack.c.l.b16 %v210
        %v440 = vpack.c.b16 %v439, %v439
        %v442 = vshrl.u32 %v432, 16
        %v444 = vshll.u32 %v432, 16
        %v446 = vrot.slane %v444, 1
        %v447 = vor.u32 %v442, %v446
        %v449 = vshll.u32 %v433, 16
        %v451 = vrot.slane %v449, 1
        %v452 = vsel %vm251, %v447, %v451
        %v453 = vshrl.u32 %v433, 16
        %v455 = vor.u32 %v453, %v451
        %v457 = vshll.u32 %v440, 16
        %v459 = vrot.slane %v457, 1
        %v460 = vsel %vm251, %v455, %v459
        %461 = vrot.lane.b32.xlu0 %v452, 33
        %v462 = vpop.permute.xlu0 %461
        %463 = vrot.lane.b32.xlu0 %v460, 33
        %v464 = vpop.permute.xlu0 %463
        %v466 = vunpack.c.l.b16 %v211
        %v467 = vpack.c.b16 %v429, %v466
        %v468 = vrot.slane %v467, 1
        %v469 = vrot.slane %v433, 1
        %v470 = vsel %vm279, %v468, %v469
        %v471 = vrot.slane %v440, 1
        %v472 = vsel %vm279, %v469, %v471
        %473 = vrot.lane.b32.xlu0 %v470, 36
        %v474 = vpop.permute.xlu0 %473
        %475 = vrot.lane.b32.xlu0 %v472, 36
        %v476 = vpop.permute.xlu0 %475
        %v478 = vunpack.c.l.b16 %v212
        %v479 = vpack.c.b16 %v478, %v478
        %v481 = vshrl.u32 %v467, 16
        %v483 = vrot.slane %v481, 1
        %v484 = vshll.u32 %v467, 16
        %v486 = vrot.slane %v484, 2
        %v487 = vor.u32 %v483, %v486
        %v488 = vrot.slane %v453, 1
        %v489 = vrot.slane %v449, 2
        %v490 = vor.u32 %v488, %v489
        %v491 = vsel %vm292, %v487, %v490
        %v493 = vshrl.u32 %v479, 16
        %v495 = vrot.slane %v493, 1
        %v496 = vshll.u32 %v479, 16
        %v498 = vrot.slane %v496, 2
        %v499 = vor.u32 %v495, %v498
        %v500 = vsel %vm292, %v490, %v499
        %501 = vrot.lane.b32.xlu0 %v491, 39
        %v502 = vpop.permute.xlu0 %501
        %503 = vrot.lane.b32.xlu0 %v500, 39
        %v504 = vpop.permute.xlu0 %503
        %v506 = vunpack.c.l.b16 %v213
        %v507 = vpack.c.b16 %v429, %v506
        %v508 = vrot.slane %v507, 2
        %v509 = vrot.slane %v433, 2
        %v510 = vsel %vm321, %v508, %v509
        %v511 = vrot.slane %v479, 2
        %v512 = vsel %vm321, %v509, %v511
        %513 = vrot.lane.b32.xlu0 %v510, 42
        %v514 = vpop.permute.xlu0 %513
        %515 = vrot.lane.b32.xlu0 %v512, 42
        %v516 = vpop.permute.xlu0 %515
        %v521 = vunpack.c.l.b16 %v218
        %v522 = vunpack.c.l.b16 %v219
        %v523 = vunpack.c.l.b16 %v220
        %v524 = vunpack.c.l.b16 %v221
        %v525 = vpack.c.b16 %v522, %v521
        %v526 = vpack.c.b16 %v524, %v523
        %527 = vrot.lane.b32.xlu0 %v525, 45
        %v528 = vpop.permute.xlu0 %527
        %529 = vrot.lane.b32.xlu0 %v526, 45
        %v530 = vpop.permute.xlu0 %529
        %vm531 = vcmask 23552
        %v533 = vsel %vm531, %v246, %v273
        %v535 = vsel %vm531, %v247, %v275
        %vm536 = vcmask 48128
        %v538 = vsel %vm536, %v533, %v286
        %v540 = vsel %vm536, %v535, %v288
        %vm541 = vcmask 72704
        %v543 = vsel %vm541, %v538, %v315
        %v545 = vsel %vm541, %v540, %v317
        %vm546 = vcmask 97280
        %v548 = vsel %vm546, %v543, %v328
        %v550 = vsel %vm546, %v545, %v330
        %vm551 = vcmask 121856
        %v553 = vsel %vm551, %v548, %v342
        %v555 = vsel %vm551, %v550, %v344
        %vm556 = vcmask 146432
        %v558 = vsel %vm556, %v553, %v369
        %v560 = vsel %vm556, %v555, %v371
        %vm561 = vcmask 171008
        %v563 = vsel %vm561, %v558, %v381
        %v565 = vsel %vm561, %v560, %v383
        %vm566 = vcmask 195584
        %v568 = vsel %vm566, %v563, %v409
        %v570 = vsel %vm566, %v565, %v411
        %vm571 = vcmask 220160
        %v573 = vsel %vm571, %v568, %v421
        %v575 = vsel %vm571, %v570, %v423
        %vm576 = vcmask 244736
        %v578 = vsel %vm576, %v573, %v435
        %v580 = vsel %vm576, %v575, %v437
        %vm581 = vcmask 269312
        %v583 = vsel %vm581, %v578, %v462
        %v585 = vsel %vm581, %v580, %v464
        %vm586 = vcmask 293888
        %v588 = vsel %vm586, %v583, %v474
        %v590 = vsel %vm586, %v585, %v476
        %vm591 = vcmask 318464
        %v593 = vsel %vm591, %v588, %v502
        %v595 = vsel %vm591, %v590, %v504
        %vm596 = vcmask 343040
        %v598 = vsel %vm596, %v593, %v514
        %v600 = vsel %vm596, %v595, %v516
        %vm601 = vcmask 367616
        %v603 = vsel %vm601, %v598, %v528
        %v605 = vsel %vm601, %v600, %v530
        %v607 = vunpack.c.l.b16 %v222
        %v608 = vpack.c.b16 %v607, %v607
        %v610 = vunpack.c.l.b16 %v223
        %v611 = vpack.c.b16 %v522, %v610
        %v613 = vshrl.u32 %v611, 16
        %v615 = vshll.u32 %v611, 16
        %v617 = vrot.slane %v615, 1
        %v618 = vor.u32 %v613, %v617
        %v620 = vshll.u32 %v526, 16
        %v622 = vrot.slane %v620, 1
        %v623 = vsel %vm251, %v618, %v622
        %v624 = vshrl.u32 %v526, 16
        %v626 = vor.u32 %v624, %v622
        %v628 = vshll.u32 %v608, 16
        %v630 = vrot.slane %v628, 1
        %v631 = vsel %vm251, %v626, %v630
        %v632 = vshrl.u32 %v608, 16
        %634 = vrot.lane.b32.xlu0 %v623, 3
        %v635 = vpop.permute.xlu0 %634
        %636 = vrot.lane.b32.xlu0 %v631, 3
        %v637 = vpop.permute.xlu0 %636
        %638 = vrot.lane.b32.xlu0 %v632, 3
        %v639 = vpop.permute.xlu0 %638
        %v641 = vunpack.c.l.b16 %v224
        %v642 = vpack.c.b16 %v641, %v641
        %v643 = vrot.slane %v611, 1
        %v644 = vrot.slane %v526, 1
        %v645 = vsel %vm279, %v643, %v644
        %v646 = vrot.slane %v642, 1
        %v647 = vsel %vm279, %v644, %v646
        %648 = vrot.lane.b32.xlu0 %v645, 6
        %v649 = vpop.permute.xlu0 %648
        %650 = vrot.lane.b32.xlu0 %v647, 6
        %v651 = vpop.permute.xlu0 %650
        %652 = vrot.lane.b32.xlu0 %v646, 6
        %v653 = vpop.permute.xlu0 %652
        %v655 = vunpack.c.l.b16 %v225
        %v656 = vpack.c.b16 %v522, %v655
        %v658 = vshrl.u32 %v656, 16
        %v660 = vrot.slane %v658, 1
        %v661 = vshll.u32 %v656, 16
        %v663 = vrot.slane %v661, 2
        %v664 = vor.u32 %v660, %v663
        %v665 = vrot.slane %v624, 1
        %v666 = vrot.slane %v620, 2
        %v667 = vor.u32 %v665, %v666
        %v668 = vsel %vm292, %v664, %v667
        %v670 = vshrl.u32 %v642, 16
        %v672 = vrot.slane %v670, 1
        %v673 = vshll.u32 %v642, 16
        %v675 = vrot.slane %v673, 2
        %v676 = vor.u32 %v672, %v675
        %v677 = vsel %vm292, %v667, %v676
        %678 = vrot.lane.b32.xlu0 %v668, 9
        %v679 = vpop.permute.xlu0 %678
        %680 = vrot.lane.b32.xlu0 %v677, 9
        %v681 = vpop.permute.xlu0 %680
        %682 = vrot.lane.b32.xlu0 %v672, 9
        %v683 = vpop.permute.xlu0 %682
        %v688 = vunpack.c.l.b16 %v230
        %v689 = vunpack.c.l.b16 %v231
        %v690 = vunpack.c.l.b16 %v232
        %v691 = vunpack.c.l.b16 %v233
        %v692 = vpack.c.b16 %v689, %v688
        %v693 = vpack.c.b16 %v691, %v690
        %vm694 = vsmask.f32 256
        %v696 = vshrl.u32 %v692, 16
        %v698 = vrot.slane %v696, 7
        %v699 = vshll.u32 %v692, 16
        %v701 = vor.u32 %v698, %v699
        %v703 = vshrl.u32 %v693, 16
        %v705 = vrot.slane %v703, 7
        %v706 = vshll.u32 %v693, 16
        %v708 = vor.u32 %v705, %v706
        %v709 = vsel %vm694, %v698, %v708
        %710 = vrot.lane.b32.xlu0 %v701, 12
        %v711 = vpop.permute.xlu0 %710
        %712 = vrot.lane.b32.xlu0 %v709, 12
        %v713 = vpop.permute.xlu0 %712
        %714 = vrot.lane.b32.xlu0 %v705, 12
        %v715 = vpop.permute.xlu0 %714
        %v717 = vunpack.c.l.b16 %v234
        %v718 = vpack.c.b16 %v717, %v717
        %719 = vrot.lane.b32.xlu0 %v692, 15
        %v720 = vpop.permute.xlu0 %719
        %721 = vrot.lane.b32.xlu0 %v693, 15
        %v722 = vpop.permute.xlu0 %721
        %723 = vrot.lane.b32.xlu0 %v718, 15
        %v724 = vpop.permute.xlu0 %723
        %v726 = vunpack.c.l.b16 %v235
        %v727 = vpack.c.b16 %v689, %v726
        %v729 = vshrl.u32 %v727, 16
        %v731 = vshll.u32 %v727, 16
        %v733 = vrot.slane %v731, 1
        %v734 = vor.u32 %v729, %v733
        %v735 = vrot.slane %v706, 1
        %v736 = vsel %vm251, %v734, %v735
        %v737 = vor.u32 %v703, %v735
        %v739 = vshll.u32 %v718, 16
        %v741 = vrot.slane %v739, 1
        %v742 = vsel %vm251, %v737, %v741
        %v743 = vshrl.u32 %v718, 16
        %745 = vrot.lane.b32.xlu0 %v736, 18
        %v746 = vpop.permute.xlu0 %745
        %747 = vrot.lane.b32.xlu0 %v742, 18
        %v748 = vpop.permute.xlu0 %747
        %749 = vrot.lane.b32.xlu0 %v743, 18
        %v750 = vpop.permute.xlu0 %749
        %v752 = vunpack.c.l.b16 %v236
        %v753 = vpack.c.b16 %v752, %v752
        %v754 = vrot.slane %v727, 1
        %v755 = vrot.slane %v693, 1
        %v756 = vsel %vm279, %v754, %v755
        %v757 = vrot.slane %v753, 1
        %v758 = vsel %vm279, %v755, %v757
        %759 = vrot.lane.b32.xlu0 %v756, 21
        %v760 = vpop.permute.xlu0 %759
        %761 = vrot.lane.b32.xlu0 %v758, 21
        %v762 = vpop.permute.xlu0 %761
        %763 = vrot.lane.b32.xlu0 %v757, 21
        %v764 = vpop.permute.xlu0 %763
        %v766 = vunpack.c.l.b16 %v237
        %v767 = vpack.c.b16 %v689, %v766
        %v769 = vshrl.u32 %v767, 16
        %v771 = vrot.slane %v769, 1
        %v772 = vshll.u32 %v767, 16
        %v774 = vrot.slane %v772, 2
        %v775 = vor.u32 %v771, %v774
        %v776 = vrot.slane %v703, 1
        %v777 = vrot.slane %v706, 2
        %v778 = vor.u32 %v776, %v777
        %v779 = vsel %vm292, %v775, %v778
        %v781 = vshrl.u32 %v753, 16
        %v783 = vrot.slane %v781, 1
        %v784 = vshll.u32 %v753, 16
        %v786 = vrot.slane %v784, 2
        %v787 = vor.u32 %v783, %v786
        %v788 = vsel %vm292, %v778, %v787
        %789 = vrot.lane.b32.xlu0 %v779, 24
        %v790 = vpop.permute.xlu0 %789
        %791 = vrot.lane.b32.xlu0 %v788, 24
        %v792 = vpop.permute.xlu0 %791
        %793 = vrot.lane.b32.xlu0 %v783, 24
        %v794 = vpop.permute.xlu0 %793
        %v797 = vsel %vm531, %v525, %v635
        %v799 = vsel %vm531, %v526, %v637
        %v801 = vsel %vm531, %v608, %v639
        %v803 = vsel %vm536, %v797, %v649
        %v805 = vsel %vm536, %v799, %v651
        %v807 = vsel %vm536, %v801, %v653
        %v809 = vsel %vm541, %v803, %v679
        %v811 = vsel %vm541, %v805, %v681
        %v813 = vsel %vm541, %v807, %v683
        %v815 = vsel %vm546, %v809, %v711
        %v817 = vsel %vm546, %v811, %v713
        %v819 = vsel %vm546, %v813, %v715
        %v821 = vsel %vm551, %v815, %v720
        %v823 = vsel %vm551, %v817, %v722
        %v825 = vsel %vm551, %v819, %v724
        %v827 = vsel %vm556, %v821, %v746
        %v829 = vsel %vm556, %v823, %v748
        %v831 = vsel %vm556, %v825, %v750
        %v833 = vsel %vm561, %v827, %v760
        %v835 = vsel %vm561, %v829, %v762
        %v837 = vsel %vm561, %v831, %v764
        %v839 = vsel %vm566, %v833, %v790
        %v841 = vsel %vm566, %v835, %v792
        %v843 = vsel %vm566, %v837, %v794
        %v844 = vshrl.u32 %v839, 16
        %v846 = vshll.u32 %v839, 16
        %v848 = vrot.slane %v846, 1
        %v849 = vor.u32 %v844, %v848
        %v850 = vshll.u32 %v841, 16
        %v852 = vrot.slane %v850, 1
        %v853 = vsel %vm251, %v849, %v852
        %v854 = vshrl.u32 %v841, 16
        %v856 = vor.u32 %v854, %v852
        %v857 = vshll.u32 %v843, 16
        %v859 = vrot.slane %v857, 1
        %v860 = vsel %vm251, %v856, %v859
        %861 = vrot.lane.b32.xlu0 %v853, 48
        %v862 = vpop.permute.xlu0 %861
        %863 = vrot.lane.b32.xlu0 %v860, 48
        %v864 = vpop.permute.xlu0 %863
        %vm865 = vcmask 392192
        %v867 = vsel %vm865, %v603, %v862
        %v869 = vsel %vm865, %v605, %v864
        %v870 = vld [vmem:[%s1] sm:$0xf]
        %v871 = vld [vmem:[%s1 + $0x4] sm:$0xf]
        %v872 = vld [vmem:[%s1 + $0x8] sm:$0xf]
        %v873 = vld [vmem:[%s1 + $0xc] sm:$0xf]
        %v874 = vld [vmem:[%s1 + $0x10] sm:$0xf]
        %v875 = vld [vmem:[%s1 + $0x14] sm:$0xf]
        %v876 = vld [vmem:[%s1 + $0x18] sm:$0xf]
        %v877 = vld [vmem:[%s1 + $0x1c] sm:$0xf]
        %v878 = vld [vmem:[%s1 + $0x20] sm:$0xf]
        %v879 = vld [vmem:[%s1 + $0x24] sm:$0x3]
        %v890 = vunpack.c.l.b16 %v870
        %v891 = vunpack.c.l.b16 %v871
        %v892 = vunpack.c.l.b16 %v872
        %v893 = vunpack.c.l.b16 %v873
        %v894 = vunpack.c.l.b16 %v874
        %v895 = vunpack.c.l.b16 %v875
        %v896 = vunpack.c.l.b16 %v876
        %v897 = vunpack.c.l.b16 %v877
        %v898 = vunpack.c.l.b16 %v878
        %v899 = vunpack.c.l.b16 %v879
        %v900 = vpack.c.b16 %v891, %v890
        %v901 = vpack.c.b16 %v893, %v892
        %v902 = vpack.c.b16 %v895, %v894
        %v903 = vpack.c.b16 %v897, %v896
        %v904 = vpack.c.b16 %v899, %v898
        %vm909 = vcmask 613376
        %v910 = vsel %vm909, %v867, 0
        %v912 = vsel %vm909, %v869, 0
        %vm914 = vcmask 1044480
        %vm915 = vcmask 1045504
        %v916 = vsel %vm914, 4294967295, 65535
        %v917 = vsel %vm915, %v916, 0
        %v919 = vand.u32 %v904, %v917
        %921 = vmatprep.subr.bf16.mxu0 0
        %922 = vmatpush1.bf16.msra.mxu0 0
        %923 = vmatprep.subr.bf16.mxu0 0
        %924 = vmatpush1.bf16.msra.mxu0 0
        %925 = vmatprep.subr.bf16.mxu0 0
        %926 = vmatpush1.bf16.msra.mxu0 0
        %927 = vmatprep.subr.bf16.mxu0 0
        %928 = vmatpush1.bf16.msra.mxu0 %v919
        %929 = vmatprep.subr.bf16.mxu0 0
        %930 = vmatpush1.bf16.msra.mxu0 %v903
        %931 = vmatprep.subr.bf16.mxu0 0
        %932 = vmatpush1.bf16.msra.mxu0 %v902
        %933 = vmatprep.subr.bf16.mxu0 0
        %934 = vmatpush1.bf16.msra.mxu0 %v901
        %935 = vmatprep.subr.bf16.mxu0 0
        %936 = vmatpush1.bf16.msra.mxu0 %v900
        %937 = vmatprep.subr.bf16.mxu0 0
        %938 = vmatpush2.bf16.msra.mxu0 0
        %939 = vmatprep.subr.bf16.mxu0 0
        %940 = vmatpush2.bf16.msra.mxu0 0
        %941 = vmatprep.subr.bf16.mxu0 0
        %942 = vmatpush2.bf16.msra.mxu0 0
        %943 = vmatprep.subr.bf16.mxu0 0
        %944 = vmatpush2.bf16.msra.mxu0 0
        %945 = vmatprep.subr.bf16.mxu0 0
        %946 = vmatpush2.bf16.msra.mxu0 0
        %947 = vmatprep.subr.bf16.mxu0 0
        %948 = vmatpush2.bf16.msra.mxu0 0
        %949 = vmatprep.subr.bf16.mxu0 0
        %950 = vmatpush2.bf16.msra.mxu0 0
        %951 = vmatprep.subr.bf16.mxu0 0
        %952 = vmatpush2.bf16.msra.mxu0 0
        %953 = vmatprep.mubr.bf16.mxu0 0
        %954 = vmatmul.mubr.bf16.gmra.mxu0 %v910
        %v955 = vpop.f32.mrf.mxu0
        %v956 = vadd.f32 0.0, %v955
        %v957 = vpop.f32.mrf.mxu0
        %v958 = vpop.f32.mrf.mxu0
        %v959 = vadd.f32 0.0, %v958
        %v960 = vpop.f32.mrf.mxu0
        %961 = vmatprep.mubr.bf16.mxu0 0
        %962 = vmatmul.mubr.bf16.gmra.mxu0 %v912
        %v963 = vpop.f32.mrf.mxu0
        %v964 = vadd.f32 0.0, %v963
        %v965 = vpop.f32.mrf.mxu0
        %v966 = vpop.f32.mrf.mxu0
        %v967 = vadd.f32 0.0, %v966
        %v968 = vpop.f32.mrf.mxu0
        %969 = vdwg.mxu0
        %s970 = sadd.s32 %s178, 5
        %s971 = smul.u32 %s970, 5
        %s972 = smul.addr %s971, 4
        %s973 = scalar_lea.vmem %s165, %s972
        %v974 = vld [vmem:[%s973] sm:$0xf]
        %v975 = vld [vmem:[%s973 + $0x4] sm:$0xf]
        %v976 = vld [vmem:[%s973 + $0x8] sm:$0xf]
        %v977 = vld [vmem:[%s973 + $0xc] sm:$0xf]
        %v978 = vld [vmem:[%s973 + $0x10] sm:$0x1]
        %v979 = vld [vmem:[%s973] sm:$0xe]
        %v980 = vld [vmem:[%s973 + $0x10] sm:$0x3]
        %v981 = vld [vmem:[%s973] sm:$0xc]
        %982 = vrot.lane.b32.xlu0 %v359, 3
        %v983 = vpop.permute.xlu0 %982
        %984 = vrot.lane.b32.xlu0 %v367, 3
        %v985 = vpop.permute.xlu0 %984
        %986 = vrot.lane.b32.xlu0 %v377, 6
        %v987 = vpop.permute.xlu0 %986
        %988 = vrot.lane.b32.xlu0 %v379, 6
        %v989 = vpop.permute.xlu0 %988
        %990 = vrot.lane.b32.xlu0 %v398, 9
        %v991 = vpop.permute.xlu0 %990
        %992 = vrot.lane.b32.xlu0 %v407, 9
        %v993 = vpop.permute.xlu0 %992
        %994 = vrot.lane.b32.xlu0 %v417, 12
        %v995 = vpop.permute.xlu0 %994
        %996 = vrot.lane.b32.xlu0 %v419, 12
        %v997 = vpop.permute.xlu0 %996
        %998 = vrot.lane.b32.xlu0 %v432, 15
        %v999 = vpop.permute.xlu0 %998
        %1000 = vrot.lane.b32.xlu0 %v433, 15
        %v1001 = vpop.permute.xlu0 %1000
        %1002 = vrot.lane.b32.xlu0 %v452, 18
        %v1003 = vpop.permute.xlu0 %1002
        %1004 = vrot.lane.b32.xlu0 %v460, 18
        %v1005 = vpop.permute.xlu0 %1004
        %1006 = vrot.lane.b32.xlu0 %v470, 21
        %v1007 = vpop.permute.xlu0 %1006
        %1008 = vrot.lane.b32.xlu0 %v472, 21
        %v1009 = vpop.permute.xlu0 %1008
        %1010 = vrot.lane.b32.xlu0 %v491, 24
        %v1011 = vpop.permute.xlu0 %1010
        %1012 = vrot.lane.b32.xlu0 %v500, 24
        %v1013 = vpop.permute.xlu0 %1012
        %1014 = vrot.lane.b32.xlu0 %v510, 27
        %v1015 = vpop.permute.xlu0 %1014
        %1016 = vrot.lane.b32.xlu0 %v512, 27
        %v1017 = vpop.permute.xlu0 %1016
        %1018 = vrot.lane.b32.xlu0 %v525, 30
        %v1019 = vpop.permute.xlu0 %1018
        %1020 = vrot.lane.b32.xlu0 %v526, 30
        %v1021 = vpop.permute.xlu0 %1020
        %v1022 = vshrl.u32 %v525, 16
        %v1024 = vshll.u32 %v525, 16
        %v1026 = vrot.slane %v1024, 1
        %v1027 = vor.u32 %v1022, %v1026
        %v1028 = vsel %vm251, %v1027, %v622
        %1029 = vrot.lane.b32.xlu0 %v1028, 33
        %v1030 = vpop.permute.xlu0 %1029
        %1031 = vrot.lane.b32.xlu0 %v631, 33
        %v1032 = vpop.permute.xlu0 %1031
        %v1033 = vrot.slane %v608, 1
        %v1034 = vsel %vm279, %v644, %v1033
        %1035 = vrot.lane.b32.xlu0 %v645, 36
        %v1036 = vpop.permute.xlu0 %1035
        %1037 = vrot.lane.b32.xlu0 %v1034, 36
        %v1038 = vpop.permute.xlu0 %1037
        %v1039 = vrot.slane %v613, 1
        %v1040 = vrot.slane %v615, 2
        %v1041 = vor.u32 %v1039, %v1040
        %v1042 = vsel %vm292, %v1041, %v667
        %1043 = vrot.lane.b32.xlu0 %v1042, 39
        %v1044 = vpop.permute.xlu0 %1043
        %1045 = vrot.lane.b32.xlu0 %v677, 39
        %v1046 = vpop.permute.xlu0 %1045
        %v1047 = vrot.slane %v656, 2
        %v1048 = vrot.slane %v526, 2
        %v1049 = vsel %vm321, %v1047, %v1048
        %v1050 = vrot.slane %v642, 2
        %v1051 = vsel %vm321, %v1048, %v1050
        %1052 = vrot.lane.b32.xlu0 %v1049, 42
        %v1053 = vpop.permute.xlu0 %1052
        %1054 = vrot.lane.b32.xlu0 %v1051, 42
        %v1055 = vpop.permute.xlu0 %1054
        %1056 = vrot.lane.b32.xlu0 %v692, 45
        %v1057 = vpop.permute.xlu0 %1056
        %1058 = vrot.lane.b32.xlu0 %v693, 45
        %v1059 = vpop.permute.xlu0 %1058
        %v1061 = vsel %vm531, %v339, %v983
        %v1063 = vsel %vm531, %v340, %v985
        %v1065 = vsel %vm536, %v1061, %v987
        %v1067 = vsel %vm536, %v1063, %v989
        %v1069 = vsel %vm541, %v1065, %v991
        %v1071 = vsel %vm541, %v1067, %v993
        %v1073 = vsel %vm546, %v1069, %v995
        %v1075 = vsel %vm546, %v1071, %v997
        %v1077 = vsel %vm551, %v1073, %v999
        %v1079 = vsel %vm551, %v1075, %v1001
        %v1081 = vsel %vm556, %v1077, %v1003
        %v1083 = vsel %vm556, %v1079, %v1005
        %v1085 = vsel %vm561, %v1081, %v1007
        %v1087 = vsel %vm561, %v1083, %v1009
        %v1089 = vsel %vm566, %v1085, %v1011
        %v1091 = vsel %vm566, %v1087, %v1013
        %v1093 = vsel %vm571, %v1089, %v1015
        %v1095 = vsel %vm571, %v1091, %v1017
        %v1097 = vsel %vm576, %v1093, %v1019
        %v1099 = vsel %vm576, %v1095, %v1021
        %v1101 = vsel %vm581, %v1097, %v1030
        %v1103 = vsel %vm581, %v1099, %v1032
        %v1105 = vsel %vm586, %v1101, %v1036
        %v1107 = vsel %vm586, %v1103, %v1038
        %v1109 = vsel %vm591, %v1105, %v1044
        %v1111 = vsel %vm591, %v1107, %v1046
        %v1113 = vsel %vm596, %v1109, %v1053
        %v1115 = vsel %vm596, %v1111, %v1055
        %v1117 = vsel %vm601, %v1113, %v1057
        %v1119 = vsel %vm601, %v1115, %v1059
        %1120 = vrot.lane.b32.xlu0 %v736, 3
        %v1121 = vpop.permute.xlu0 %1120
        %1122 = vrot.lane.b32.xlu0 %v742, 3
        %v1123 = vpop.permute.xlu0 %1122
        %1124 = vrot.lane.b32.xlu0 %v743, 3
        %v1125 = vpop.permute.xlu0 %1124
        %1126 = vrot.lane.b32.xlu0 %v756, 6
        %v1127 = vpop.permute.xlu0 %1126
        %1128 = vrot.lane.b32.xlu0 %v758, 6
        %v1129 = vpop.permute.xlu0 %1128
        %1130 = vrot.lane.b32.xlu0 %v757, 6
        %v1131 = vpop.permute.xlu0 %1130
        %1132 = vrot.lane.b32.xlu0 %v779, 9
        %v1133 = vpop.permute.xlu0 %1132
        %1134 = vrot.lane.b32.xlu0 %v788, 9
        %v1135 = vpop.permute.xlu0 %1134
        %1136 = vrot.lane.b32.xlu0 %v783, 9
        %v1137 = vpop.permute.xlu0 %1136
        %v1142 = vunpack.c.l.b16 %v974
        %v1143 = vunpack.c.l.b16 %v975
        %v1144 = vunpack.c.l.b16 %v976
        %v1145 = vunpack.c.l.b16 %v977
        %v1146 = vpack.c.b16 %v1143, %v1142
        %v1147 = vpack.c.b16 %v1145, %v1144
        %v1149 = vshrl.u32 %v1146, 16
        %v1151 = vrot.slane %v1149, 7
        %v1152 = vshll.u32 %v1146, 16
        %v1154 = vor.u32 %v1151, %v1152
        %v1156 = vshrl.u32 %v1147, 16
        %v1158 = vrot.slane %v1156, 7
        %v1159 = vshll.u32 %v1147, 16
        %v1161 = vor.u32 %v1158, %v1159
        %v1162 = vsel %vm694, %v1151, %v1161
        %1163 = vrot.lane.b32.xlu0 %v1154, 12
        %v1164 = vpop.permute.xlu0 %1163
        %1165 = vrot.lane.b32.xlu0 %v1162, 12
        %v1166 = vpop.permute.xlu0 %1165
        %1167 = vrot.lane.b32.xlu0 %v1158, 12
        %v1168 = vpop.permute.xlu0 %1167
        %v1170 = vunpack.c.l.b16 %v978
        %v1171 = vpack.c.b16 %v1170, %v1170
        %1172 = vrot.lane.b32.xlu0 %v1146, 15
        %v1173 = vpop.permute.xlu0 %1172
        %1174 = vrot.lane.b32.xlu0 %v1147, 15
        %v1175 = vpop.permute.xlu0 %1174
        %1176 = vrot.lane.b32.xlu0 %v1171, 15
        %v1177 = vpop.permute.xlu0 %1176
        %v1179 = vunpack.c.l.b16 %v979
        %v1180 = vpack.c.b16 %v1143, %v1179
        %v1182 = vshrl.u32 %v1180, 16
        %v1184 = vshll.u32 %v1180, 16
        %v1186 = vrot.slane %v1184, 1
        %v1187 = vor.u32 %v1182, %v1186
        %v1188 = vrot.slane %v1159, 1
        %v1189 = vsel %vm251, %v1187, %v1188
        %v1190 = vor.u32 %v1156, %v1188
        %v1192 = vshll.u32 %v1171, 16
        %v1194 = vrot.slane %v1192, 1
        %v1195 = vsel %vm251, %v1190, %v1194
        %v1196 = vshrl.u32 %v1171, 16
        %1198 = vrot.lane.b32.xlu0 %v1189, 18
        %v1199 = vpop.permute.xlu0 %1198
        %1200 = vrot.lane.b32.xlu0 %v1195, 18
        %v1201 = vpop.permute.xlu0 %1200
        %1202 = vrot.lane.b32.xlu0 %v1196, 18
        %v1203 = vpop.permute.xlu0 %1202
        %v1205 = vunpack.c.l.b16 %v980
        %v1206 = vpack.c.b16 %v1205, %v1205
        %v1207 = vrot.slane %v1180, 1
        %v1208 = vrot.slane %v1147, 1
        %v1209 = vsel %vm279, %v1207, %v1208
        %v1210 = vrot.slane %v1206, 1
        %v1211 = vsel %vm279, %v1208, %v1210
        %1212 = vrot.lane.b32.xlu0 %v1209, 21
        %v1213 = vpop.permute.xlu0 %1212
        %1214 = vrot.lane.b32.xlu0 %v1211, 21
        %v1215 = vpop.permute.xlu0 %1214
        %1216 = vrot.lane.b32.xlu0 %v1210, 21
        %v1217 = vpop.permute.xlu0 %1216
        %v1219 = vunpack.c.l.b16 %v981
        %v1220 = vpack.c.b16 %v1143, %v1219
        %v1222 = vshrl.u32 %v1220, 16
        %v1224 = vrot.slane %v1222, 1
        %v1225 = vshll.u32 %v1220, 16
        %v1227 = vrot.slane %v1225, 2
        %v1228 = vor.u32 %v1224, %v1227
        %v1229 = vrot.slane %v1156, 1
        %v1230 = vrot.slane %v1159, 2
        %v1231 = vor.u32 %v1229, %v1230
        %v1232 = vsel %vm292, %v1228, %v1231
        %v1234 = vshrl.u32 %v1206, 16
        %v1236 = vrot.slane %v1234, 1
        %v1237 = vshll.u32 %v1206, 16
        %v1239 = vrot.slane %v1237, 2
        %v1240 = vor.u32 %v1236, %v1239
        %v1241 = vsel %vm292, %v1231, %v1240
        %1242 = vrot.lane.b32.xlu0 %v1232, 24
        %v1243 = vpop.permute.xlu0 %1242
        %1244 = vrot.lane.b32.xlu0 %v1241, 24
        %v1245 = vpop.permute.xlu0 %1244
        %1246 = vrot.lane.b32.xlu0 %v1236, 24
        %v1247 = vpop.permute.xlu0 %1246
        %v1249 = vsel %vm531, %v692, %v1121
        %v1251 = vsel %vm531, %v693, %v1123
        %v1253 = vsel %vm531, %v718, %v1125
        %v1255 = vsel %vm536, %v1249, %v1127
        %v1257 = vsel %vm536, %v1251, %v1129
        %v1259 = vsel %vm536, %v1253, %v1131
        %v1261 = vsel %vm541, %v1255, %v1133
        %v1263 = vsel %vm541, %v1257, %v1135
        %v1265 = vsel %vm541, %v1259, %v1137
        %v1267 = vsel %vm546, %v1261, %v1164
        %v1269 = vsel %vm546, %v1263, %v1166
        %v1271 = vsel %vm546, %v1265, %v1168
        %v1273 = vsel %vm551, %v1267, %v1173
        %v1275 = vsel %vm551, %v1269, %v1175
        %v1277 = vsel %vm551, %v1271, %v1177
        %v1279 = vsel %vm556, %v1273, %v1199
        %v1281 = vsel %vm556, %v1275, %v1201
        %v1283 = vsel %vm556, %v1277, %v1203
        %v1285 = vsel %vm561, %v1279, %v1213
        %v1287 = vsel %vm561, %v1281, %v1215
        %v1289 = vsel %vm561, %v1283, %v1217
        %v1291 = vsel %vm566, %v1285, %v1243
        %v1293 = vsel %vm566, %v1287, %v1245
        %v1295 = vsel %vm566, %v1289, %v1247
        %v1296 = vshrl.u32 %v1291, 16
        %v1298 = vshll.u32 %v1291, 16
        %v1300 = vrot.slane %v1298, 1
        %v1301 = vor.u32 %v1296, %v1300
        %v1302 = vshll.u32 %v1293, 16
        %v1304 = vrot.slane %v1302, 1
        %v1305 = vsel %vm251, %v1301, %v1304
        %v1306 = vshrl.u32 %v1293, 16
        %v1308 = vor.u32 %v1306, %v1304
        %v1309 = vshll.u32 %v1295, 16
        %v1311 = vrot.slane %v1309, 1
        %v1312 = vsel %vm251, %v1308, %v1311
        %1313 = vrot.lane.b32.xlu0 %v1305, 48
        %v1314 = vpop.permute.xlu0 %1313
        %1315 = vrot.lane.b32.xlu0 %v1312, 48
        %v1316 = vpop.permute.xlu0 %1315
        %v1318 = vsel %vm865, %v1117, %v1314
        %v1320 = vsel %vm865, %v1119, %v1316
        %v1321 = vsel %vm909, %v1318, 0
        %v1323 = vsel %vm909, %v1320, 0
        %1325 = vmatprep.subr.bf16.mxu0 0
        %1326 = vmatpush1.bf16.msra.mxu0 0
        %1327 = vmatprep.subr.bf16.mxu0 0
        %1328 = vmatpush1.bf16.msra.mxu0 0
        %1329 = vmatprep.subr.bf16.mxu0 0
        %1330 = vmatpush1.bf16.msra.mxu0 0
        %1331 = vmatprep.subr.bf16.mxu0 0
        %1332 = vmatpush1.bf16.msra.mxu0 %v919
        %1333 = vmatprep.subr.bf16.mxu0 0
        %1334 = vmatpush1.bf16.msra.mxu0 %v903
        %1335 = vmatprep.subr.bf16.mxu0 0
        %1336 = vmatpush1.bf16.msra.mxu0 %v902
        %1337 = vmatprep.subr.bf16.mxu0 0
        %1338 = vmatpush1.bf16.msra.mxu0 %v901
        %1339 = vmatprep.subr.bf16.mxu0 0
        %1340 = vmatpush1.bf16.msra.mxu0 %v900
        %1341 = vmatprep.subr.bf16.mxu0 0
        %1342 = vmatpush2.bf16.msra.mxu0 0
        %1343 = vmatprep.subr.bf16.mxu0 0
        %1344 = vmatpush2.bf16.msra.mxu0 0
        %1345 = vmatprep.subr.bf16.mxu0 0
        %1346 = vmatpush2.bf16.msra.mxu0 0
        %1347 = vmatprep.subr.bf16.mxu0 0
        %1348 = vmatpush2.bf16.msra.mxu0 0
        %1349 = vmatprep.subr.bf16.mxu0 0
        %1350 = vmatpush2.bf16.msra.mxu0 0
        %1351 = vmatprep.subr.bf16.mxu0 0
        %1352 = vmatpush2.bf16.msra.mxu0 0
        %1353 = vmatprep.subr.bf16.mxu0 0
        %1354 = vmatpush2.bf16.msra.mxu0 0
        %1355 = vmatprep.subr.bf16.mxu0 0
        %1356 = vmatpush2.bf16.msra.mxu0 0
        %1357 = vmatprep.mubr.bf16.mxu0 0
        %1358 = vmatmul.mubr.bf16.gmra.mxu0 %v1321
        %v1359 = vpop.f32.mrf.mxu0
        %v1360 = vadd.f32 0.0, %v1359
        %v1361 = vpop.f32.mrf.mxu0
        %v1362 = vpop.f32.mrf.mxu0
        %v1363 = vadd.f32 0.0, %v1362
        %v1364 = vpop.f32.mrf.mxu0
        %1365 = vmatprep.mubr.bf16.mxu0 0
        %1366 = vmatmul.mubr.bf16.gmra.mxu0 %v1323
        %v1367 = vpop.f32.mrf.mxu0
        %v1368 = vadd.f32 0.0, %v1367
        %v1369 = vpop.f32.mrf.mxu0
        %v1370 = vpop.f32.mrf.mxu0
        %v1371 = vadd.f32 0.0, %v1370
        %v1372 = vpop.f32.mrf.mxu0
        %1373 = vdwg.mxu0
        %v1374 = vmax.f32 %v956, %v1360
        %v1375 = vmax.f32 %v959, %v1363
        %v1376 = vmax.f32 %v964, %v1368
        %v1377 = vmax.f32 %v967, %v1371
        %vm1378 = vcmask 261120
        %1379 = vst.msk [vmem:[#allocation2] sm:$0xff] %vm1378, %v1374
        %1380 = vst.msk [vmem:[#allocation2 + $0x8] sm:$0xff] %vm1378, %v1375
        %1381 = vst.msk [vmem:[#allocation2 + $0x10] sm:$0xff] %vm1378, %v1376
        %1382 = vst.msk [vmem:[#allocation2 + $0x18] sm:$0xff] %vm1378, %v1377
        %v1383 = vld [vmem:[#allocation2] ss:$2 sm:$0xff]
        %s1384 = scalar_lea.vmem [#allocation2], 16
        %v1385 = vld [vmem:[%s1384] ss:$2 sm:$0xff]
        %s1386 = scalar_lea.vmem [#allocation2], 1
        %v1387 = vld [vmem:[%s1386] ss:$2 sm:$0xff]
        %s1388 = scalar_lea.vmem [#allocation2], 17
        %v1389 = vld [vmem:[%s1388] ss:$2 sm:$0xff]
        %v1390 = vmax.f32 %v1383, %v1387
        %v1391 = vmax.f32 %v1385, %v1389
        %v1392 = vld [vmem:[%s2] sm:$0x1]
        %v1394 = vlaneseq
        %v1395 = vshrl.u32 %v1394, 7
        %v1396 = vsub.s32 0, %v1395
        %v1397 = vrot.slane %v1392, %v1396
        %v1399 = vadd.f32 %v1390, %v1397
        %v1400 = vadd.f32 %v1391, %v1397
        %v1401 = vpack.c.bf16 %v1400, %v1399
        %v1403 = vunpack.c.l.b16 %v1401
        %v1404 = vunpack.c.h.b16 %v1401
        %v1405 = vpack.c.b16 %v1403, %v1403
        %v1406 = vpack.c.b16 %v1404, %v1404
        %s1409 = smul.addr %s178, 4
        %s1410 = scalar_lea.vmem %s170, %s1409
        %vm1411 = vcmask 257024
        %1412 = vst.msk [vmem:[%s1410] sm:$0xf] %vm1411, %v1405
        %1413 = vst.msk [vmem:[%s1410 + $0x4] sm:$0xf] %vm1411, %v1406
      $region37: #{model_forward.4} parent=31 // loop_footer
        %s177 = sadd.s32 1, %s173
      $region38: #{model_forward.4} parent=31 // loop_footer_branch
        %172 = sbr.rel target = $region34
      $region39: #{model_forward.4} parent=31 // loop_exit
        _
      %p1414 = scmp.lt.s32.totalorder %s14, 1
      %s1415 = scalar_select %p1414, %s14, 1
      %s1416 = smul.addr %s1415, 32
      %s1417 = smul.addr %s1416, 4
      %s1418 = scalar_lea.vmem %s3, %s1417
      // Predicated region
      $region40: #{model_forward.4} parent=31 // pred_check
        %p1419 = pneg %p100
      $region41: #{model_forward.4} parent=31 // pred_check_branch
        %1421 = sbr.rel (%p1419) target = $region43
      $region42: #{model_forward.4} parent=31 // pred_region
        _
      $region43: #{model_forward.4} parent=31 // pred_fallthru
        _
    $region32: #{model_forward.4} parent=5 // pred_fallthru
      _
    %p1422 = scmp.le.s32.totalorder 2, %s9
    // Predicated region
    $region44: #{model_forward.4} parent=5 // pred_check
      %p1423 = pneg %p1422
    $region45: #{model_forward.4} parent=5 // pred_check_branch
      %1425 = sbr.rel (%p1423) target = $region47
    $region46: #{model_forward.4} parent=5 // pred_region
      %s1426 = ssub.s32 %s9, 2
      // Predicated region
      $region48: #{model_forward.4} parent=46 // pred_check
        %p1427 = pneg %p106
      $region49: #{model_forward.4} parent=46 // pred_check_branch
        %1429 = sbr.rel (%p1427) target = $region51
      $region50: #{model_forward.4} parent=46 // pred_region
        %p1430 = scmp.lt.s32.totalorder %s15, 1
        %s1431 = scalar_select %p1430, %s15, 1
        %s1432 = smul.addr %s1431, 32
        %s1433 = smul.addr %s1432, 4
        %s1434 = scalar_lea.vmem %s3, %s1433
      $region51: #{model_forward.4} parent=46 // pred_fallthru
        _
    $region47: #{model_forward.4} parent=5 // pred_fallthru
      _
  $region6: #{model_forward.4} parent=0 // loop_footer
    %s13 = sadd.s32 1, %s9
  $region7: #{model_forward.4} parent=0 // loop_footer_branch
    %8 = sbr.rel target = $region3
  $region8: #{model_forward.4} parent=0 // loop_exit
    _

// kernel: model_forward.5
$region0: #{model_forward.5}
  #allocation0 [shape = 'u32[]', space=smem, size = 0x4, offset = 0x4, fixed_abs, tag = 'smem constant byte address 0x4 - core index']
  #allocation1 [shape = 'u32[144,128]{1,0:T(1,128)}', space=vmem, size = 0x12000, scoped, tag = 'internal scratch']
  #allocation2 [shape = 'f32[16,32]{1,0:T(8,128)}', space=vmem, size = 0x2000, scoped, tag = 'scratch operand']
  %s0 = inlined_call_operand.vmem [shape: bf16[2,20,20,32], index: 0, kind: input, shape index: {}]
  %s1 = inlined_call_operand.vmem [shape: bf16[800,32], index: 1, kind: input, shape index: {}]
  %s2 = inlined_call_operand.vmem [shape: f32[1,32], index: 2, kind: input, shape index: {}]
  %s3 = inlined_call_operand.vmem [shape: bf16[2,8,8,32], index: 3, kind: output, shape index: {}]
  %s4 = sld [smem:[#allocation0]]
  $region52: #{model_forward.5} parent=0
    _
  %s6 = ssub.s32 1, %s4
  %s7 = scalar_select 0, %s6, %s4
  loop: start=0, step=1, limit=4
  $region2: #{model_forward.5} parent=0 // loop_pre_header
    _
  $region3: #{model_forward.5} parent=0 // loop_header
    %s9 = sphi 0, %s13
    %p10 = scmp.ge.s32.totalorder %s9, 4
    %s19 = sphi 0, %s21
    %s22 = sphi 0, %s19
    %s23 = sphi 0, %s22
    %s39 = sphi 0, %s23
    %s43 = sphi 0, %s43
    %s45 = sphi 0, %s43
    %s46 = sphi 0, %s45
    %s60 = sphi 0, %s46
    %s64 = sphi 0, %s64
    %s66 = sphi 0, %s64
    %s67 = sphi 0, %s66
    %s81 = sphi 0, %s67
    %s87 = sphi 0, %s89
    %s90 = sphi 0, %s87
    %s91 = sphi 0, %s90
    %s107 = sphi 0, %s91
  $region4: #{model_forward.5} parent=0 // loop_header_branch
    %12 = sbr.rel (%p10) target = $region8
  $region5: #{model_forward.5} parent=0 // loop_body
    %s14 = ssub.s32 %s9, 1
    %s15 = ssub.s32 %s9, 2
    %s16 = sadd.s32 %s9, 1
    %s17 = ssub.s32 %s9, %s16
    %p18 = scmp.eq.s32.totalorder %s17, 0
    %s20 = sadd.s32 %s19, 1
    %s21 = scalar_select %p18, %s19, %s20
    %p24 = pneg %p18
    %p25 = scmp.eq.s32.totalorder %s9, 1
    %p26 = por %p24, %p25
    %p27 = scmp.ne.s32.totalorder %s19, %s22
    %p28 = scmp.eq.s32.totalorder %s9, 0
    %p29 = por %p27, %p28
    %p30 = scmp.ne.s32.totalorder %s19, %s22
    %p31 = scmp.eq.s32.totalorder %s14, 1
    %p32 = por %p30, %p31
    %p33 = scmp.ne.s32.totalorder %s22, %s23
    %p34 = scmp.eq.s32.totalorder %s14, 0
    %p35 = por %p33, %p34
    %p36 = scmp.ne.s32.totalorder %s22, %s23
    %p37 = scmp.eq.s32.totalorder %s15, 1
    %p38 = por %p36, %p37
    %p40 = scmp.ne.s32.totalorder %s23, %s39
    %p41 = scmp.eq.s32.totalorder %s15, 0
    %p42 = por %p40, %p41
    %s44 = sadd.s32 %s43, 1
    %p47 = scmp.eq.s32.totalorder %s9, 1
    %p48 = scmp.ne.s32.totalorder %s43, %s45
    %p49 = scmp.eq.s32.totalorder %s9, 0
    %p50 = por %p48, %p49
    %p51 = scmp.ne.s32.totalorder %s43, %s45
    %p52 = scmp.eq.s32.totalorder %s14, 1
    %p53 = por %p51, %p52
    %p54 = scmp.ne.s32.totalorder %s45, %s46
    %p55 = scmp.eq.s32.totalorder %s14, 0
    %p56 = por %p54, %p55
    %p57 = scmp.ne.s32.totalorder %s45, %s46
    %p58 = scmp.eq.s32.totalorder %s15, 1
    %p59 = por %p57, %p58
    %p61 = scmp.ne.s32.totalorder %s46, %s60
    %p62 = scmp.eq.s32.totalorder %s15, 0
    %p63 = por %p61, %p62
    %s65 = sadd.s32 %s64, 1
    %p68 = scmp.eq.s32.totalorder %s9, 1
    %p69 = scmp.ne.s32.totalorder %s64, %s66
    %p70 = scmp.eq.s32.totalorder %s9, 0
    %p71 = por %p69, %p70
    %p72 = scmp.ne.s32.totalorder %s64, %s66
    %p73 = scmp.eq.s32.totalorder %s14, 1
    %p74 = por %p72, %p73
    %p75 = scmp.ne.s32.totalorder %s66, %s67
    %p76 = scmp.eq.s32.totalorder %s14, 0
    %p77 = por %p75, %p76
    %p78 = scmp.ne.s32.totalorder %s66, %s67
    %p79 = scmp.eq.s32.totalorder %s15, 1
    %p80 = por %p78, %p79
    %p82 = scmp.ne.s32.totalorder %s67, %s81
    %p83 = scmp.eq.s32.totalorder %s15, 0
    %p84 = por %p82, %p83
    %s85 = ssub.s32 %s9, %s16
    %p86 = scmp.eq.s32.totalorder %s85, 0
    %s88 = sadd.s32 %s87, 1
    %s89 = scalar_select %p86, %s87, %s88
    %p92 = pneg %p86
    %p93 = scmp.eq.s32.totalorder %s9, 1
    %p94 = por %p92, %p93
    %p95 = scmp.ne.s32.totalorder %s87, %s90
    %p96 = scmp.eq.s32.totalorder %s9, 0
    %p97 = por %p95, %p96
    %p98 = scmp.ne.s32.totalorder %s87, %s90
    %p99 = scmp.eq.s32.totalorder %s14, 1
    %p100 = por %p98, %p99
    %p101 = scmp.ne.s32.totalorder %s90, %s91
    %p102 = scmp.eq.s32.totalorder %s14, 0
    %p103 = por %p101, %p102
    %p104 = scmp.ne.s32.totalorder %s90, %s91
    %p105 = scmp.eq.s32.totalorder %s15, 1
    %p106 = por %p104, %p105
    %p108 = scmp.ne.s32.totalorder %s91, %s107
    %p109 = scmp.eq.s32.totalorder %s15, 0
    %p110 = por %p108, %p109
    %p111 = scmp.le.s32.totalorder 1, %s9
    %p112 = scmp.lt.s32.totalorder %s9, 3
    %p113 = pnand %p111, %p112
    %p114 = pneg %p113
    // Predicated region
    $region9: #{model_forward.5} parent=5 // pred_check
      _
    $region10: #{model_forward.5} parent=5 // pred_check_branch
      %116 = sbr.rel (%p113) target = $region12
    $region11: #{model_forward.5} parent=5 // pred_region
      %s117 = ssub.s32 %s9, 1
      // Predicated region
      $region13: #{model_forward.5} parent=11 // pred_check
        %p118 = pneg %p56
      $region14: #{model_forward.5} parent=11 // pred_check_branch
        %120 = sbr.rel (%p118) target = $region16
      $region15: #{model_forward.5} parent=11 // pred_region
        _
      $region16: #{model_forward.5} parent=11 // pred_fallthru
        _
      // Predicated region
      $region17: #{model_forward.5} parent=11 // pred_check
        %p121 = pneg %p77
      $region18: #{model_forward.5} parent=11 // pred_check_branch
        %123 = sbr.rel (%p121) target = $region20
      $region19: #{model_forward.5} parent=11 // pred_region
        _
      $region20: #{model_forward.5} parent=11 // pred_fallthru
        _
    $region12: #{model_forward.5} parent=5 // pred_fallthru
      _
    %p124 = scmp.lt.s32.totalorder %s9, 2
    // Predicated region
    $region21: #{model_forward.5} parent=5 // pred_check
      %p125 = pneg %p124
    $region22: #{model_forward.5} parent=5 // pred_check_branch
      %127 = sbr.rel (%p125) target = $region24
    $region23: #{model_forward.5} parent=5 // pred_region
      // Predicated region
      $region25: #{model_forward.5} parent=23 // pred_check
        %p128 = pneg %p29
      $region26: #{model_forward.5} parent=23 // pred_check_branch
        %130 = sbr.rel (%p128) target = $region28
      $region27: #{model_forward.5} parent=23 // pred_region
        %p131 = scmp.lt.s32.totalorder %s9, 1
        %s132 = scalar_select %p131, %s9, 1
        %s133 = smul.addr %s132, 60
        %s134 = smul.addr %s133, 4
        %s135 = scalar_lea.vmem %s0, %s134
      $region28: #{model_forward.5} parent=23 // pred_fallthru
        _
    $region24: #{model_forward.5} parent=5 // pred_fallthru
      _
    %p136 = scmp.le.s32.totalorder 1, %s9
    %p137 = scmp.lt.s32.totalorder %s9, 3
    %p138 = pnand %p136, %p137
    %p139 = pneg %p138
    // Predicated region
    $region29: #{model_forward.5} parent=5 // pred_check
      _
    $region30: #{model_forward.5} parent=5 // pred_check_branch
      %141 = sbr.rel (%p138) target = $region32
    $region31: #{model_forward.5} parent=5 // pred_region
      %s142 = ssub.s32 %s9, 1
      %p143 = scmp.lt.s32.totalorder %s14, 1
      %s144 = scalar_select %p143, %s14, 1
      %s145 = smul.addr %s144, 60
      %s146 = smul.addr %s145, 4
      %s147 = scalar_lea.vmem %s0, %s146
      %p148 = pneg %p35
      %p149 = pneg %p32
      %p150 = pneg %p56
      %p151 = pneg %p53
      %p152 = pneg %p77
      %p153 = pneg %p74
      %p154 = pneg %p103
      %p155 = pneg %p100
      %p156 = scmp.lt.s32.totalorder %s14, 1
      %s157 = scalar_select %p156, %s14, 1
      %s158 = smul.addr %s157, 8
      %s159 = smul.addr %s158, 4
      %s160 = scalar_lea.vmem %s3, %s159
      %p161 = scmp.lt.s32.totalorder %s14, 1
      %s162 = scalar_select %p161, %s14, 1
      %s163 = smul.addr %s162, 60
      %s164 = smul.addr %s163, 4
      %s165 = scalar_lea.vmem %s0, %s164
      %p166 = scmp.lt.s32.totalorder %s14, 1
      %s167 = scalar_select %p166, %s14, 1
      %s168 = smul.addr %s167, 8
      %s169 = smul.addr %s168, 4
      %s170 = scalar_lea.vmem %s3, %s169
      loop: start=0, step=1, limit=8
      $region33: #{model_forward.5} parent=31 // loop_pre_header
        _
      $region34: #{model_forward.5} parent=31 // loop_header
        %s173 = sphi 0, %s177
        %p174 = scmp.ge.s32.totalorder %s173, 8
      $region35: #{model_forward.5} parent=31 // loop_header_branch
        %176 = sbr.rel (%p174) target = $region39
      $region36: #{model_forward.5} parent=31 // loop_body
        %s178 = smul.u32 %s173, 2
        %s179 = smul.u32 %s178, 3
        %s180 = smul.addr %s179, 4
        %s181 = scalar_lea.vmem %s165, %s180
        %v182 = vld [vmem:[%s181] sm:$0xf]
        %v183 = vld [vmem:[%s181 + $0x4] sm:$0xf]
        %v184 = vld [vmem:[%s181 + $0x8] sm:$0x1]
        %v185 = vld [vmem:[%s181] sm:$0xe]
        %v186 = vld [vmem:[%s181 + $0x8] sm:$0x3]
        %v187 = vld [vmem:[%s181] sm:$0xc]
        %s188 = sadd.s32 %s178, 1
        %s189 = smul.u32 %s188, 3
        %s190 = smul.addr %s189, 4
        %s191 = scalar_lea.vmem %s165, %s190
        %v192 = vld [vmem:[%s191] sm:$0xf]
        %v193 = vld [vmem:[%s191 + $0x4] sm:$0xf]
        %v194 = vld [vmem:[%s191 + $0x8] sm:$0x1]
        %v195 = vld [vmem:[%s191] sm:$0xe]
        %v196 = vld [vmem:[%s191 + $0x8] sm:$0x3]
        %v197 = vld [vmem:[%s191] sm:$0xc]
        %s198 = sadd.s32 %s178, 2
        %s199 = smul.u32 %s198, 3
        %s200 = smul.addr %s199, 4
        %s201 = scalar_lea.vmem %s165, %s200
        %v202 = vld [vmem:[%s201] sm:$0xf]
        %v203 = vld [vmem:[%s201 + $0x4] sm:$0xf]
        %v204 = vld [vmem:[%s201 + $0x8] sm:$0x1]
        %v205 = vld [vmem:[%s201] sm:$0xe]
        %v206 = vld [vmem:[%s201 + $0x8] sm:$0x3]
        %v207 = vld [vmem:[%s201] sm:$0xc]
        %s208 = sadd.s32 %s178, 3
        %s209 = smul.u32 %s208, 3
        %s210 = smul.addr %s209, 4
        %s211 = scalar_lea.vmem %s165, %s210
        %v212 = vld [vmem:[%s211] sm:$0xf]
        %v213 = vld [vmem:[%s211 + $0x4] sm:$0xf]
        %v214 = vld [vmem:[%s211 + $0x8] sm:$0x1]
        %v215 = vld [vmem:[%s211] sm:$0xe]
        %v216 = vld [vmem:[%s211 + $0x8] sm:$0x3]
        %v217 = vld [vmem:[%s211] sm:$0xc]
        %s218 = sadd.s32 %s178, 4
        %s219 = smul.u32 %s218, 3
        %s220 = smul.addr %s219, 4
        %s221 = scalar_lea.vmem %s165, %s220
        %v222 = vld [vmem:[%s221] sm:$0xf]
        %v223 = vld [vmem:[%s221 + $0x4] sm:$0xf]
        %v224 = vld [vmem:[%s221 + $0x8] sm:$0x1]
        %v225 = vld [vmem:[%s221] sm:$0xe]
        %v226 = vld [vmem:[%s221 + $0x8] sm:$0x3]
        %v227 = vld [vmem:[%s221] sm:$0xc]
        %v230 = vunpack.c.l.b16 %v182
        %v231 = vunpack.c.l.b16 %v183
        %v232 = vpack.c.b16 %v231, %v230
        %v234 = vunpack.c.l.b16 %v184
        %v235 = vpack.c.b16 %v234, %v234
        %vm236 = vsmask.f32 7424
        %v238 = vshrl.u32 %v232, 16
        %v240 = vshll.u32 %v232, 16
        %v242 = vrot.slane %v240, 1
        %v243 = vor.u32 %v238, %v242
        %v245 = vshll.u32 %v235, 16
        %v247 = vrot.slane %v245, 1
        %v248 = vsel %vm236, %v243, %v247
        %249 = vrot.lane.b32.xlu0 %v248, 32
        %v250 = vpop.permute.xlu0 %249
        %v252 = vunpack.c.l.b16 %v185
        %v253 = vpack.c.b16 %v231, %v252
        %vm254 = vcmask 1046528
        %v255 = vrot.slane %v253, 1
        %v256 = vrot.slane %v235, 1
        %v257 = vsel %vm254, %v255, %v256
        %258 = vrot.lane.b32.xlu0 %v257, 64
        %v259 = vpop.permute.xlu0 %258
        %v261 = vunpack.c.l.b16 %v186
        %v262 = vpack.c.b16 %v261, %v261
        %vm263 = vsmask.f32 6400
        %v265 = vshrl.u32 %v253, 16
        %v267 = vrot.slane %v265, 1
        %v268 = vshll.u32 %v253, 16
        %v270 = vrot.slane %v268, 2
        %v271 = vor.u32 %v267, %v270
        %v273 = vshrl.u32 %v262, 16
        %v275 = vrot.slane %v273, 1
        %v276 = vshll.u32 %v262, 16
        %v278 = vrot.slane %v276, 2
        %v279 = vor.u32 %v275, %v278
        %v280 = vsel %vm263, %v271, %v279
        %281 = vrot.lane.b32.xlu0 %v280, 96
        %v282 = vpop.permute.xlu0 %281
        %v284 = vunpack.c.l.b16 %v187
        %v285 = vpack.c.b16 %v231, %v284
        %vm286 = vcmask 1045504
        %v287 = vrot.slane %v285, 2
        %v288 = vrot.slane %v262, 2
        %v289 = vsel %vm286, %v287, %v288
        %v292 = vunpack.c.l.b16 %v192
        %v293 = vunpack.c.l.b16 %v193
        %v294 = vpack.c.b16 %v293, %v292
        %295 = vrot.lane.b32.xlu0 %v294, 32
        %v296 = vpop.permute.xlu0 %295
        %v298 = vunpack.c.l.b16 %v194
        %v299 = vpack.c.b16 %v298, %v298
        %v301 = vshrl.u32 %v294, 16
        %v303 = vshll.u32 %v294, 16
        %v305 = vrot.slane %v303, 1
        %v306 = vor.u32 %v301, %v305
        %v308 = vshll.u32 %v299, 16
        %v310 = vrot.slane %v308, 1
        %v311 = vsel %vm236, %v306, %v310
        %312 = vrot.lane.b32.xlu0 %v311, 64
        %v313 = vpop.permute.xlu0 %312
        %v315 = vunpack.c.l.b16 %v195
        %v316 = vpack.c.b16 %v293, %v315
        %v317 = vrot.slane %v316, 1
        %v318 = vrot.slane %v299, 1
        %v319 = vsel %vm254, %v317, %v318
        %320 = vrot.lane.b32.xlu0 %v319, 96
        %v321 = vpop.permute.xlu0 %320
        %v323 = vunpack.c.l.b16 %v196
        %v324 = vpack.c.b16 %v323, %v323
        %v326 = vshrl.u32 %v316, 16
        %v328 = vrot.slane %v326, 1
        %v329 = vshll.u32 %v316, 16
        %v331 = vrot.slane %v329, 2
        %v332 = vor.u32 %v328, %v331
        %v334 = vshrl.u32 %v324, 16
        %v336 = vrot.slane %v334, 1
        %v337 = vshll.u32 %v324, 16
        %v339 = vrot.slane %v337, 2
        %v340 = vor.u32 %v336, %v339
        %v341 = vsel %vm263, %v332, %v340
        %v343 = vunpack.c.l.b16 %v197
        %v344 = vpack.c.b16 %v293, %v343
        %v345 = vrot.slane %v344, 2
        %v346 = vrot.slane %v324, 2
        %v347 = vsel %vm286, %v345, %v346
        %348 = vrot.lane.b32.xlu0 %v347, 32
        %v349 = vpop.permute.xlu0 %348
        %v352 = vunpack.c.l.b16 %v202
        %v353 = vunpack.c.l.b16 %v203
        %v354 = vpack.c.b16 %v353, %v352
        %355 = vrot.lane.b32.xlu0 %v354, 64
        %v356 = vpop.permute.xlu0 %355
        %v358 = vunpack.c.l.b16 %v204
        %v359 = vpack.c.b16 %v358, %v358
        %v361 = vshrl.u32 %v354, 16
        %v363 = vshll.u32 %v354, 16
        %v365 = vrot.slane %v363, 1
        %v366 = vor.u32 %v361, %v365
        %v368 = vshll.u32 %v359, 16
        %v370 = vrot.slane %v368, 1
        %v371 = vsel %vm236, %v366, %v370
        %372 = vrot.lane.b32.xlu0 %v371, 96
        %v373 = vpop.permute.xlu0 %372
        %v375 = vunpack.c.l.b16 %v205
        %v376 = vpack.c.b16 %v353, %v375
        %v377 = vrot.slane %v376, 1
        %v378 = vrot.slane %v359, 1
        %v379 = vsel %vm254, %v377, %v378
        %v381 = vunpack.c.l.b16 %v206
        %v382 = vpack.c.b16 %v381, %v381
        %v384 = vshrl.u32 %v376, 16
        %v386 = vrot.slane %v384, 1
        %v387 = vshll.u32 %v376, 16
        %v389 = vrot.slane %v387, 2
        %v390 = vor.u32 %v386, %v389
        %v392 = vshrl.u32 %v382, 16
        %v394 = vrot.slane %v392, 1
        %v395 = vshll.u32 %v382, 16
        %v397 = vrot.slane %v395, 2
        %v398 = vor.u32 %v394, %v397
        %v399 = vsel %vm263, %v390, %v398
        %400 = vrot.lane.b32.xlu0 %v399, 32
        %v401 = vpop.permute.xlu0 %400
        %v403 = vunpack.c.l.b16 %v207
        %v404 = vpack.c.b16 %v353, %v403
        %v405 = vrot.slane %v404, 2
        %v406 = vrot.slane %v382, 2
        %v407 = vsel %vm286, %v405, %v406
        %408 = vrot.lane.b32.xlu0 %v407, 64
        %v409 = vpop.permute.xlu0 %408
        %v412 = vunpack.c.l.b16 %v212
        %v413 = vunpack.c.l.b16 %v213
        %v414 = vpack.c.b16 %v413, %v412
        %415 = vrot.lane.b32.xlu0 %v414, 96
        %v416 = vpop.permute.xlu0 %415
        %vm417 = vcmask 261120
        %v419 = vsel %vm417, %v232, %v250
        %vm420 = vcmask 523264
        %v422 = vsel %vm420, %v419, %v259
        %vm423 = vcmask 785408
        %v425 = vsel %vm423, %v422, %v282
        %v429 = vsel %vm417, %v289, %v296
        %v431 = vsel %vm420, %v429, %v313
        %v433 = vsel %vm423, %v431, %v321
        %v437 = vsel %vm417, %v341, %v349
        %v439 = vsel %vm420, %v437, %v356
        %v441 = vsel %vm423, %v439, %v373
        %v445 = vsel %vm417, %v379, %v401
        %v447 = vsel %vm420, %v445, %v409
        %v449 = vsel %vm423, %v447, %v416
        %v452 = vunpack.c.l.b16 %v214
        %v453 = vpack.c.b16 %v452, %v452
        %v455 = vunpack.c.l.b16 %v215
        %v456 = vpack.c.b16 %v413, %v455
        %v458 = vshrl.u32 %v456, 16
        %v460 = vshll.u32 %v456, 16
        %v462 = vrot.slane %v460, 1
        %v463 = vor.u32 %v458, %v462
        %v465 = vshll.u32 %v453, 16
        %v467 = vrot.slane %v465, 1
        %v468 = vsel %vm236, %v463, %v467
        %v469 = vshrl.u32 %v453, 16
        %471 = vrot.lane.b32.xlu0 %v468, 32
        %v472 = vpop.permute.xlu0 %471
        %473 = vrot.lane.b32.xlu0 %v469, 32
        %v474 = vpop.permute.xlu0 %473
        %v476 = vunpack.c.l.b16 %v216
        %v477 = vpack.c.b16 %v476, %v476
        %v478 = vrot.slane %v456, 1
        %v479 = vrot.slane %v477, 1
        %v480 = vsel %vm254, %v478, %v479
        %481 = vrot.lane.b32.xlu0 %v480, 64
        %v482 = vpop.permute.xlu0 %481
        %483 = vrot.lane.b32.xlu0 %v479, 64
        %v484 = vpop.permute.xlu0 %483
        %v486 = vunpack.c.l.b16 %v217
        %v487 = vpack.c.b16 %v413, %v486
        %v489 = vshrl.u32 %v487, 16
        %v491 = vrot.slane %v489, 1
        %v492 = vshll.u32 %v487, 16
        %v494 = vrot.slane %v492, 2
        %v495 = vor.u32 %v491, %v494
        %v497 = vshrl.u32 %v477, 16
        %v499 = vrot.slane %v497, 1
        %v500 = vshll.u32 %v477, 16
        %v502 = vrot.slane %v500, 2
        %v503 = vor.u32 %v499, %v502
        %v504 = vsel %vm263, %v495, %v503
        %505 = vrot.lane.b32.xlu0 %v504, 96
        %v506 = vpop.permute.xlu0 %505
        %507 = vrot.lane.b32.xlu0 %v499, 96
        %v508 = vpop.permute.xlu0 %507
        %v511 = vunpack.c.l.b16 %v222
        %v512 = vunpack.c.l.b16 %v223
        %v513 = vpack.c.b16 %v512, %v511
        %v515 = vshrl.u32 %v513, 16
        %v517 = vrot.slane %v515, 7
        %v518 = vshll.u32 %v513, 16
        %v520 = vor.u32 %v517, %v518
        %v522 = vunpack.c.l.b16 %v224
        %v523 = vpack.c.b16 %v522, %v522
        %524 = vrot.lane.b32.xlu0 %v513, 32
        %v525 = vpop.permute.xlu0 %524
        %526 = vrot.lane.b32.xlu0 %v523, 32
        %v527 = vpop.permute.xlu0 %526
        %v529 = vunpack.c.l.b16 %v225
        %v530 = vpack.c.b16 %v512, %v529
        %v532 = vshrl.u32 %v530, 16
        %v534 = vshll.u32 %v530, 16
        %v536 = vrot.slane %v534, 1
        %v537 = vor.u32 %v532, %v536
        %v539 = vshll.u32 %v523, 16
        %v541 = vrot.slane %v539, 1
        %v542 = vsel %vm236, %v537, %v541
        %v543 = vshrl.u32 %v523, 16
        %545 = vrot.lane.b32.xlu0 %v542, 64
        %v546 = vpop.permute.xlu0 %545
        %547 = vrot.lane.b32.xlu0 %v543, 64
        %v548 = vpop.permute.xlu0 %547
        %v550 = vunpack.c.l.b16 %v226
        %v551 = vpack.c.b16 %v550, %v550
        %v552 = vrot.slane %v530, 1
        %v553 = vrot.slane %v551, 1
        %v554 = vsel %vm254, %v552, %v553
        %555 = vrot.lane.b32.xlu0 %v554, 96
        %v556 = vpop.permute.xlu0 %555
        %557 = vrot.lane.b32.xlu0 %v553, 96
        %v558 = vpop.permute.xlu0 %557
        %v560 = vunpack.c.l.b16 %v227
        %v561 = vpack.c.b16 %v512, %v560
        %v563 = vshrl.u32 %v561, 16
        %v565 = vrot.slane %v563, 1
        %v566 = vshll.u32 %v561, 16
        %v568 = vrot.slane %v566, 2
        %v569 = vor.u32 %v565, %v568
        %v571 = vshrl.u32 %v551, 16
        %v573 = vrot.slane %v571, 1
        %v574 = vshll.u32 %v551, 16
        %v576 = vrot.slane %v574, 2
        %v577 = vor.u32 %v573, %v576
        %v578 = vsel %vm263, %v569, %v577
        %v581 = vsel %vm417, %v414, %v472
        %v583 = vsel %vm417, %v453, %v474
        %v585 = vsel %vm420, %v581, %v482
        %v587 = vsel %vm420, %v583, %v484
        %v589 = vsel %vm423, %v585, %v506
        %v591 = vsel %vm423, %v587, %v508
        %v594 = vsel %vm417, %v520, %v525
        %v597 = vsel %vm417, %v517, %v527
        %v599 = vsel %vm420, %v594, %v546
        %v601 = vsel %vm420, %v597, %v548
        %v603 = vsel %vm423, %v599, %v556
        %v605 = vsel %vm423, %v601, %v558
        %v606 = vshrl.u32 %v589, 16
        %v608 = vshll.u32 %v589, 16
        %v610 = vrot.slane %v608, 1
        %v611 = vor.u32 %v606, %v610
        %v612 = vshll.u32 %v591, 16
        %v614 = vrot.slane %v612, 1
        %v615 = vsel %vm236, %v611, %v614
        %v616 = vshrl.u32 %v603, 16
        %v618 = vshll.u32 %v603, 16
        %v620 = vrot.slane %v618, 1
        %v621 = vor.u32 %v616, %v620
        %v622 = vshll.u32 %v605, 16
        %v624 = vrot.slane %v622, 1
        %v625 = vsel %vm236, %v621, %v624
        %v627 = vshrl.u32 %v578, 16
        %v629 = vshll.u32 %v578, 16
        %v631 = vrot.slane %v629, 1
        %v632 = vor.u32 %v627, %v631
        %v634 = vshll.u32 %v573, 16
        %v636 = vrot.slane %v634, 1
        %v637 = vsel %vm236, %v632, %v636
        %v640 = vld [vmem:[%s1] sm:$0xf]
        %v641 = vld [vmem:[%s1 + $0x4] sm:$0xf]
        %v642 = vld [vmem:[%s1 + $0x8] sm:$0xf]
        %v643 = vld [vmem:[%s1 + $0xc] sm:$0xf]
        %v644 = vld [vmem:[%s1 + $0x10] sm:$0xf]
        %v645 = vld [vmem:[%s1 + $0x14] sm:$0xf]
        %v646 = vld [vmem:[%s1 + $0x18] sm:$0xf]
        %v647 = vld [vmem:[%s1 + $0x1c] sm:$0xf]
        %v648 = vld [vmem:[%s1 + $0x20] sm:$0xf]
        %v649 = vld [vmem:[%s1 + $0x24] sm:$0xf]
        %v650 = vld [vmem:[%s1 + $0x28] sm:$0xf]
        %v651 = vld [vmem:[%s1 + $0x2c] sm:$0xf]
        %v652 = vld [vmem:[%s1 + $0x30] sm:$0xf]
        %v653 = vld [vmem:[%s1 + $0x34] sm:$0xf]
        %v654 = vld [vmem:[%s1 + $0x38] sm:$0xf]
        %v655 = vld [vmem:[%s1 + $0x3c] sm:$0xf]
        %v656 = vld [vmem:[%s1 + $0x40] sm:$0xf]
        %v657 = vld [vmem:[%s1 + $0x44] sm:$0xf]
        %v658 = vld [vmem:[%s1 + $0x48] sm:$0xf]
        %v659 = vld [vmem:[%s1 + $0x4c] sm:$0xf]
        %v660 = vld [vmem:[%s1 + $0x50] sm:$0xf]
        %v661 = vld [vmem:[%s1 + $0x54] sm:$0xf]
        %v662 = vld [vmem:[%s1 + $0x58] sm:$0xf]
        %v663 = vld [vmem:[%s1 + $0x5c] sm:$0xf]
        %v664 = vld [vmem:[%s1 + $0x60] sm:$0xf]
        %v665 = vld [vmem:[%s1 + $0x64] sm:$0xf]
        %v666 = vld [vmem:[%s1 + $0x68] sm:$0xf]
        %v667 = vld [vmem:[%s1 + $0x6c] sm:$0xf]
        %v668 = vld [vmem:[%s1 + $0x70] sm:$0xf]
        %v669 = vld [vmem:[%s1 + $0x74] sm:$0xf]
        %v670 = vld [vmem:[%s1 + $0x78] sm:$0xf]
        %v671 = vld [vmem:[%s1 + $0x7c] sm:$0xf]
        %v672 = vld [vmem:[%s1 + $0x80] sm:$0xf]
        %v673 = vld [vmem:[%s1 + $0x84] sm:$0xf]
        %v674 = vld [vmem:[%s1 + $0x88] sm:$0xf]
        %v675 = vld [vmem:[%s1 + $0x8c] sm:$0xf]
        %v676 = vld [vmem:[%s1 + $0x90] sm:$0xf]
        %v677 = vld [vmem:[%s1 + $0x94] sm:$0xf]
        %v678 = vld [vmem:[%s1 + $0x98] sm:$0xf]
        %v679 = vld [vmem:[%s1 + $0x9c] sm:$0xf]
        %v680 = vld [vmem:[%s1 + $0xa0] sm:$0xf]
        %v681 = vld [vmem:[%s1 + $0xa4] sm:$0xf]
        %v682 = vld [vmem:[%s1 + $0xa8] sm:$0xf]
        %v683 = vld [vmem:[%s1 + $0xac] sm:$0xf]
        %v684 = vld [vmem:[%s1 + $0xb0] sm:$0xf]
        %v685 = vld [vmem:[%s1 + $0xb4] sm:$0xf]
        %v686 = vld [vmem:[%s1 + $0xb8] sm:$0xf]
        %v687 = vld [vmem:[%s1 + $0xbc] sm:$0xf]
        %v688 = vld [vmem:[%s1 + $0xc0] sm:$0xf]
        %v689 = vld [vmem:[%s1 + $0xc4] sm:$0xf]
        %v690 = vld [vmem:[%s1 + $0xc8] sm:$0xf]
        %v691 = vld [vmem:[%s1 + $0xcc] sm:$0xf]
        %v692 = vld [vmem:[%s1 + $0xd0] sm:$0xf]
        %v693 = vld [vmem:[%s1 + $0xd4] sm:$0xf]
        %v694 = vld [vmem:[%s1 + $0xd8] sm:$0xf]
        %v695 = vld [vmem:[%s1 + $0xdc] sm:$0xf]
        %v696 = vld [vmem:[%s1 + $0xe0] sm:$0xf]
        %v697 = vld [vmem:[%s1 + $0xe4] sm:$0xf]
        %v698 = vld [vmem:[%s1 + $0xe8] sm:$0xf]
        %v699 = vld [vmem:[%s1 + $0xec] sm:$0xf]
        %v700 = vld [vmem:[%s1 + $0xf0] sm:$0xf]
        %v701 = vld [vmem:[%s1 + $0xf4] sm:$0xf]
        %v702 = vld [vmem:[%s1 + $0xf8] sm:$0xf]
        %v703 = vld [vmem:[%s1 + $0xfc] sm:$0xf]
        %v704 = vld [vmem:[%s1 + $0x100] sm:$0xf]
        %v705 = vld [vmem:[%s1 + $0x104] sm:$0xf]
        %v706 = vld [vmem:[%s1 + $0x108] sm:$0xf]
        %v707 = vld [vmem:[%s1 + $0x10c] sm:$0xf]
        %v708 = vld [vmem:[%s1 + $0x110] sm:$0xf]
        %v709 = vld [vmem:[%s1 + $0x114] sm:$0xf]
        %v710 = vld [vmem:[%s1 + $0x118] sm:$0xf]
        %v711 = vld [vmem:[%s1 + $0x11c] sm:$0xf]
        %v712 = vld [vmem:[%s1 + $0x120] sm:$0xf]
        %v713 = vld [vmem:[%s1 + $0x124] sm:$0xf]
        %v714 = vld [vmem:[%s1 + $0x128] sm:$0xf]
        %v715 = vld [vmem:[%s1 + $0x12c] sm:$0xf]
        %v716 = vld [vmem:[%s1 + $0x130] sm:$0xf]
        %v717 = vld [vmem:[%s1 + $0x134] sm:$0xf]
        %v718 = vld [vmem:[%s1 + $0x138] sm:$0xf]
        %v719 = vld [vmem:[%s1 + $0x13c] sm:$0xf]
        %v720 = vld [vmem:[%s1 + $0x140] sm:$0xf]
        %v721 = vld [vmem:[%s1 + $0x144] sm:$0xf]
        %v722 = vld [vmem:[%s1 + $0x148] sm:$0xf]
        %v723 = vld [vmem:[%s1 + $0x14c] sm:$0xf]
        %v724 = vld [vmem:[%s1 + $0x150] sm:$0xf]
        %v725 = vld [vmem:[%s1 + $0x154] sm:$0xf]
        %v726 = vld [vmem:[%s1 + $0x158] sm:$0xf]
        %v727 = vld [vmem:[%s1 + $0x15c] sm:$0xf]
        %v728 = vld [vmem:[%s1 + $0x160] sm:$0xf]
        %v729 = vld [vmem:[%s1 + $0x164] sm:$0xf]
        %v730 = vld [vmem:[%s1 + $0x168] sm:$0xf]
        %v731 = vld [vmem:[%s1 + $0x16c] sm:$0xf]
        %v732 = vld [vmem:[%s1 + $0x170] sm:$0xf]
        %v733 = vld [vmem:[%s1 + $0x174] sm:$0xf]
        %v734 = vld [vmem:[%s1 + $0x178] sm:$0xf]
        %v735 = vld [vmem:[%s1 + $0x17c] sm:$0xf]
        %v736 = vld [vmem:[%s1 + $0x180] sm:$0xf]
        %v737 = vld [vmem:[%s1 + $0x184] sm:$0xf]
        %v738 = vld [vmem:[%s1 + $0x188] sm:$0xf]
        %v739 = vld [vmem:[%s1 + $0x18c] sm:$0xf]
        %v840 = vunpack.c.l.b16 %v640
        %v841 = vunpack.c.l.b16 %v641
        %v842 = vunpack.c.l.b16 %v642
        %v843 = vunpack.c.l.b16 %v643
        %v844 = vunpack.c.l.b16 %v644
        %v845 = vunpack.c.l.b16 %v645
        %v846 = vunpack.c.l.b16 %v646
        %v847 = vunpack.c.l.b16 %v647
        %v848 = vunpack.c.l.b16 %v648
        %v849 = vunpack.c.l.b16 %v649
        %v850 = vunpack.c.l.b16 %v650
        %v851 = vunpack.c.l.b16 %v651
        %v852 = vunpack.c.l.b16 %v652
        %v853 = vunpack.c.l.b16 %v653
        %v854 = vunpack.c.l.b16 %v654
        %v855 = vunpack.c.l.b16 %v655
        %v856 = vunpack.c.l.b16 %v656
        %v857 = vunpack.c.l.b16 %v657
        %v858 = vunpack.c.l.b16 %v658
        %v859 = vunpack.c.l.b16 %v659
        %v860 = vunpack.c.l.b16 %v660
        %v861 = vunpack.c.l.b16 %v661
        %v862 = vunpack.c.l.b16 %v662
        %v863 = vunpack.c.l.b16 %v663
        %v864 = vunpack.c.l.b16 %v664
        %v865 = vunpack.c.l.b16 %v665
        %v866 = vunpack.c.l.b16 %v666
        %v867 = vunpack.c.l.b16 %v667
        %v868 = vunpack.c.l.b16 %v668
        %v869 = vunpack.c.l.b16 %v669
        %v870 = vunpack.c.l.b16 %v670
        %v871 = vunpack.c.l.b16 %v671
        %v872 = vunpack.c.l.b16 %v672
        %v873 = vunpack.c.l.b16 %v673
        %v874 = vunpack.c.l.b16 %v674
        %v875 = vunpack.c.l.b16 %v675
        %v876 = vunpack.c.l.b16 %v676
        %v877 = vunpack.c.l.b16 %v677
        %v878 = vunpack.c.l.b16 %v678
        %v879 = vunpack.c.l.b16 %v679
        %v880 = vunpack.c.l.b16 %v680
        %v881 = vunpack.c.l.b16 %v681
        %v882 = vunpack.c.l.b16 %v682
        %v883 = vunpack.c.l.b16 %v683
        %v884 = vunpack.c.l.b16 %v684
        %v885 = vunpack.c.l.b16 %v685
        %v886 = vunpack.c.l.b16 %v686
        %v887 = vunpack.c.l.b16 %v687
        %v888 = vunpack.c.l.b16 %v688
        %v889 = vunpack.c.l.b16 %v689
        %v890 = vunpack.c.l.b16 %v690
        %v891 = vunpack.c.l.b16 %v691
        %v892 = vunpack.c.l.b16 %v692
        %v893 = vunpack.c.l.b16 %v693
        %v894 = vunpack.c.l.b16 %v694
        %v895 = vunpack.c.l.b16 %v695
        %v896 = vunpack.c.l.b16 %v696
        %v897 = vunpack.c.l.b16 %v697
        %v898 = vunpack.c.l.b16 %v698
        %v899 = vunpack.c.l.b16 %v699
        %v900 = vunpack.c.l.b16 %v700
        %v901 = vunpack.c.l.b16 %v701
        %v902 = vunpack.c.l.b16 %v702
        %v903 = vunpack.c.l.b16 %v703
        %v904 = vunpack.c.l.b16 %v704
        %v905 = vunpack.c.l.b16 %v705
        %v906 = vunpack.c.l.b16 %v706
        %v907 = vunpack.c.l.b16 %v707
        %v908 = vunpack.c.l.b16 %v708
        %v909 = vunpack.c.l.b16 %v709
        %v910 = vunpack.c.l.b16 %v710
        %v911 = vunpack.c.l.b16 %v711
        %v912 = vunpack.c.l.b16 %v712
        %v913 = vunpack.c.l.b16 %v713
        %v914 = vunpack.c.l.b16 %v714
        %v915 = vunpack.c.l.b16 %v715
        %v916 = vunpack.c.l.b16 %v716
        %v917 = vunpack.c.l.b16 %v717
        %v918 = vunpack.c.l.b16 %v718
        %v919 = vunpack.c.l.b16 %v719
        %v920 = vunpack.c.l.b16 %v720
        %v921 = vunpack.c.l.b16 %v721
        %v922 = vunpack.c.l.b16 %v722
        %v923 = vunpack.c.l.b16 %v723
        %v924 = vunpack.c.l.b16 %v724
        %v925 = vunpack.c.l.b16 %v725
        %v926 = vunpack.c.l.b16 %v726
        %v927 = vunpack.c.l.b16 %v727
        %v928 = vunpack.c.l.b16 %v728
        %v929 = vunpack.c.l.b16 %v729
        %v930 = vunpack.c.l.b16 %v730
        %v931 = vunpack.c.l.b16 %v731
        %v932 = vunpack.c.l.b16 %v732
        %v933 = vunpack.c.l.b16 %v733
        %v934 = vunpack.c.l.b16 %v734
        %v935 = vunpack.c.l.b16 %v735
        %v936 = vunpack.c.l.b16 %v736
        %v937 = vunpack.c.l.b16 %v737
        %v938 = vunpack.c.l.b16 %v738
        %v939 = vunpack.c.l.b16 %v739
        %v940 = vpack.c.b16 %v841, %v840
        %v941 = vpack.c.b16 %v843, %v842
        %v942 = vpack.c.b16 %v845, %v844
        %v943 = vpack.c.b16 %v847, %v846
        %v944 = vpack.c.b16 %v849, %v848
        %v945 = vpack.c.b16 %v851, %v850
        %v946 = vpack.c.b16 %v853, %v852
        %v947 = vpack.c.b16 %v855, %v854
        %v948 = vpack.c.b16 %v857, %v856
        %v949 = vpack.c.b16 %v859, %v858
        %v950 = vpack.c.b16 %v861, %v860
        %v951 = vpack.c.b16 %v863, %v862
        %v952 = vpack.c.b16 %v865, %v864
        %v953 = vpack.c.b16 %v867, %v866
        %v954 = vpack.c.b16 %v869, %v868
        %v955 = vpack.c.b16 %v871, %v870
        %v956 = vpack.c.b16 %v873, %v872
        %v957 = vpack.c.b16 %v875, %v874
        %v958 = vpack.c.b16 %v877, %v876
        %v959 = vpack.c.b16 %v879, %v878
        %v960 = vpack.c.b16 %v881, %v880
        %v961 = vpack.c.b16 %v883, %v882
        %v962 = vpack.c.b16 %v885, %v884
        %v963 = vpack.c.b16 %v887, %v886
        %v964 = vpack.c.b16 %v889, %v888
        %v965 = vpack.c.b16 %v891, %v890
        %v966 = vpack.c.b16 %v893, %v892
        %v967 = vpack.c.b16 %v895, %v894
        %v968 = vpack.c.b16 %v897, %v896
        %v969 = vpack.c.b16 %v899, %v898
        %v970 = vpack.c.b16 %v901, %v900
        %v971 = vpack.c.b16 %v903, %v902
        %v972 = vpack.c.b16 %v905, %v904
        %v973 = vpack.c.b16 %v907, %v906
        %v974 = vpack.c.b16 %v909, %v908
        %v975 = vpack.c.b16 %v911, %v910
        %v976 = vpack.c.b16 %v913, %v912
        %v977 = vpack.c.b16 %v915, %v914
        %v978 = vpack.c.b16 %v917, %v916
        %v979 = vpack.c.b16 %v919, %v918
        %v980 = vpack.c.b16 %v921, %v920
        %v981 = vpack.c.b16 %v923, %v922
        %v982 = vpack.c.b16 %v925, %v924
        %v983 = vpack.c.b16 %v927, %v926
        %v984 = vpack.c.b16 %v929, %v928
        %v985 = vpack.c.b16 %v931, %v930
        %v986 = vpack.c.b16 %v933, %v932
        %v987 = vpack.c.b16 %v935, %v934
        %v988 = vpack.c.b16 %v937, %v936
        %v989 = vpack.c.b16 %v939, %v938
        %v1041 = vsel %vm417, %v637, 0
        %1043 = vmatprep.subr.bf16.mxu0 0
        %1044 = vmatpush1.bf16.msra.mxu0 %v947
        %1045 = vmatprep.subr.bf16.mxu0 0
        %1046 = vmatpush1.bf16.msra.mxu0 %v946
        %1047 = vmatprep.subr.bf16.mxu0 0
        %1048 = vmatpush1.bf16.msra.mxu0 %v945
        %1049 = vmatprep.subr.bf16.mxu0 0
        %1050 = vmatpush1.bf16.msra.mxu0 %v944
        %1051 = vmatprep.subr.bf16.mxu0 0
        %1052 = vmatpush1.bf16.msra.mxu0 %v943
        %1053 = vmatprep.subr.bf16.mxu0 0
        %1054 = vmatpush1.bf16.msra.mxu0 %v942
        %1055 = vmatprep.subr.bf16.mxu0 0
        %1056 = vmatpush1.bf16.msra.mxu0 %v941
        %1057 = vmatprep.subr.bf16.mxu0 0
        %1058 = vmatpush1.bf16.msra.mxu0 %v940
        %1059 = vmatprep.subr.bf16.mxu0 0
        %1060 = vmatpush2.bf16.msra.mxu0 %v955
        %1061 = vmatprep.subr.bf16.mxu0 0
        %1062 = vmatpush2.bf16.msra.mxu0 %v954
        %1063 = vmatprep.subr.bf16.mxu0 0
        %1064 = vmatpush2.bf16.msra.mxu0 %v953
        %1065 = vmatprep.subr.bf16.mxu0 0
        %1066 = vmatpush2.bf16.msra.mxu0 %v952
        %1067 = vmatprep.subr.bf16.mxu0 0
        %1068 = vmatpush2.bf16.msra.mxu0 %v951
        %1069 = vmatprep.subr.bf16.mxu0 0
        %1070 = vmatpush2.bf16.msra.mxu0 %v950
        %1071 = vmatprep.subr.bf16.mxu0 0
        %1072 = vmatpush2.bf16.msra.mxu0 %v949
        %1073 = vmatprep.subr.bf16.mxu0 0
        %1074 = vmatpush2.bf16.msra.mxu0 %v948
        %1075 = vmatprep.mubr.bf16.mxu0 %v433
        %1076 = vmatmul.mubr.bf16.gmra.mxu0 %v425
        %v1077 = vpop.f32.mrf.mxu0
        %v1078 = vadd.f32 0.0, %v1077
        %v1079 = vpop.f32.mrf.mxu0
        %v1080 = vpop.f32.mrf.mxu0
        %v1081 = vadd.f32 0.0, %v1080
        %v1082 = vpop.f32.mrf.mxu0
        %1083 = vdwg.mxu0
        %1084 = vmatprep.subr.bf16.mxu0 0
        %1085 = vmatpush1.bf16.msra.mxu0 %v963
        %1086 = vmatprep.subr.bf16.mxu0 0
        %1087 = vmatpush1.bf16.msra.mxu0 %v962
        %1088 = vmatprep.subr.bf16.mxu0 0
        %1089 = vmatpush1.bf16.msra.mxu0 %v961
        %1090 = vmatprep.subr.bf16.mxu0 0
        %1091 = vmatpush1.bf16.msra.mxu0 %v960
        %1092 = vmatprep.subr.bf16.mxu0 0
        %1093 = vmatpush1.bf16.msra.mxu0 %v959
        %1094 = vmatprep.subr.bf16.mxu0 0
        %1095 = vmatpush1.bf16.msra.mxu0 %v958
        %1096 = vmatprep.subr.bf16.mxu0 0
        %1097 = vmatpush1.bf16.msra.mxu0 %v957
        %1098 = vmatprep.subr.bf16.mxu0 0
        %1099 = vmatpush1.bf16.msra.mxu0 %v956
        %1100 = vmatprep.subr.bf16.mxu0 0
        %1101 = vmatpush2.bf16.msra.mxu0 %v971
        %1102 = vmatprep.subr.bf16.mxu0 0
        %1103 = vmatpush2.bf16.msra.mxu0 %v970
        %1104 = vmatprep.subr.bf16.mxu0 0
        %1105 = vmatpush2.bf16.msra.mxu0 %v969
        %1106 = vmatprep.subr.bf16.mxu0 0
        %1107 = vmatpush2.bf16.msra.mxu0 %v968
        %1108 = vmatprep.subr.bf16.mxu0 0
        %1109 = vmatpush2.bf16.msra.mxu0 %v967
        %1110 = vmatprep.subr.bf16.mxu0 0
        %1111 = vmatpush2.bf16.msra.mxu0 %v966
        %1112 = vmatprep.subr.bf16.mxu0 0
        %1113 = vmatpush2.bf16.msra.mxu0 %v965
        %1114 = vmatprep.subr.bf16.mxu0 0
        %1115 = vmatpush2.bf16.msra.mxu0 %v964
        %1116 = vmatprep.mubr.bf16.mxu0 %v449
        %1117 = vmatmul.mubr.bf16.gmra.mxu0 %v441
        %v1118 = vpop.f32.mrf.mxu0
        %v1119 = vadd.f32 %v1078, %v1118
        %v1120 = vpop.f32.mrf.mxu0
        %v1121 = vpop.f32.mrf.mxu0
        %v1122 = vadd.f32 %v1081, %v1121
        %v1123 = vpop.f32.mrf.mxu0
        %1124 = vdwg.mxu0
        %1125 = vmatprep.subr.bf16.mxu0 0
        %1126 = vmatpush1.bf16.msra.mxu0 %v979
        %1127 = vmatprep.subr.bf16.mxu0 0
        %1128 = vmatpush1.bf16.msra.mxu0 %v978
        %1129 = vmatprep.subr.bf16.mxu0 0
        %1130 = vmatpush1.bf16.msra.mxu0 %v977
        %1131 = vmatprep.subr.bf16.mxu0 0
        %1132 = vmatpush1.bf16.msra.mxu0 %v976
        %1133 = vmatprep.subr.bf16.mxu0 0
        %1134 = vmatpush1.bf16.msra.mxu0 %v975
        %1135 = vmatprep.subr.bf16.mxu0 0
        %1136 = vmatpush1.bf16.msra.mxu0 %v974
        %1137 = vmatprep.subr.bf16.mxu0 0
        %1138 = vmatpush1.bf16.msra.mxu0 %v973
        %1139 = vmatprep.subr.bf16.mxu0 0
        %1140 = vmatpush1.bf16.msra.mxu0 %v972
        %1141 = vmatprep.subr.bf16.mxu0 0
        %1142 = vmatpush2.bf16.msra.mxu0 %v987
        %1143 = vmatprep.subr.bf16.mxu0 0
        %1144 = vmatpush2.bf16.msra.mxu0 %v986
        %1145 = vmatprep.subr.bf16.mxu0 0
        %1146 = vmatpush2.bf16.msra.mxu0 %v985
        %1147 = vmatprep.subr.bf16.mxu0 0
        %1148 = vmatpush2.bf16.msra.mxu0 %v984
        %1149 = vmatprep.subr.bf16.mxu0 0
        %1150 = vmatpush2.bf16.msra.mxu0 %v983
        %1151 = vmatprep.subr.bf16.mxu0 0
        %1152 = vmatpush2.bf16.msra.mxu0 %v982
        %1153 = vmatprep.subr.bf16.mxu0 0
        %1154 = vmatpush2.bf16.msra.mxu0 %v981
        %1155 = vmatprep.subr.bf16.mxu0 0
        %1156 = vmatpush2.bf16.msra.mxu0 %v980
        %1157 = vmatprep.mubr.bf16.mxu0 %v625
        %1158 = vmatmul.mubr.bf16.gmra.mxu0 %v615
        %v1159 = vpop.f32.mrf.mxu0
        %v1160 = vadd.f32 %v1119, %v1159
        %v1161 = vpop.f32.mrf.mxu0
        %v1162 = vpop.f32.mrf.mxu0
        %v1163 = vadd.f32 %v1122, %v1162
        %v1164 = vpop.f32.mrf.mxu0
        %1165 = vdwg.mxu0
        %1166 = vmatprep.subr.bf16.mxu0 0
        %1167 = vmatpush1.bf16.msra.mxu0 0
        %1168 = vmatprep.subr.bf16.mxu0 0
        %1169 = vmatpush1.bf16.msra.mxu0 0
        %1170 = vmatprep.subr.bf16.mxu0 0
        %1171 = vmatpush1.bf16.msra.mxu0 0
        %1172 = vmatprep.subr.bf16.mxu0 0
        %1173 = vmatpush1.bf16.msra.mxu0 0
        %1174 = vmatprep.subr.bf16.mxu0 0
        %1175 = vmatpush1.bf16.msra.mxu0 0
        %1176 = vmatprep.subr.bf16.mxu0 0
        %1177 = vmatpush1.bf16.msra.mxu0 0
        %1178 = vmatprep.subr.bf16.mxu0 0
        %1179 = vmatpush1.bf16.msra.mxu0 %v989
        %1180 = vmatprep.subr.bf16.mxu0 0
        %1181 = vmatpush1.bf16.msra.mxu0 %v988
        %1182 = vmatprep.subr.bf16.mxu0 0
        %1183 = vmatpush2.bf16.msra.mxu0 0
        %1184 = vmatprep.subr.bf16.mxu0 0
        %1185 = vmatpush2.bf16.msra.mxu0 0
        %1186 = vmatprep.subr.bf16.mxu0 0
        %1187 = vmatpush2.bf16.msra.mxu0 0
        %1188 = vmatprep.subr.bf16.mxu0 0
        %1189 = vmatpush2.bf16.msra.mxu0 0
        %1190 = vmatprep.subr.bf16.mxu0 0
        %1191 = vmatpush2.bf16.msra.mxu0 0
        %1192 = vmatprep.subr.bf16.mxu0 0
        %1193 = vmatpush2.bf16.msra.mxu0 0
        %1194 = vmatprep.subr.bf16.mxu0 0
        %1195 = vmatpush2.bf16.msra.mxu0 0
        %1196 = vmatprep.subr.bf16.mxu0 0
        %1197 = vmatpush2.bf16.msra.mxu0 0
        %1198 = vmatprep.mubr.bf16.mxu0 0
        %1199 = vmatmul.mubr.bf16.gmra.mxu0 %v1041
        %v1200 = vpop.f32.mrf.mxu0
        %v1201 = vadd.f32 %v1160, %v1200
        %v1202 = vpop.f32.mrf.mxu0
        %v1203 = vpop.f32.mrf.mxu0
        %v1204 = vadd.f32 %v1163, %v1203
        %v1205 = vpop.f32.mrf.mxu0
        %1206 = vdwg.mxu0
        %s1207 = sadd.s32 %s178, 5
        %s1208 = smul.u32 %s1207, 3
        %s1209 = smul.addr %s1208, 4
        %s1210 = scalar_lea.vmem %s165, %s1209
        %v1211 = vld [vmem:[%s1210] sm:$0xf]
        %v1212 = vld [vmem:[%s1210 + $0x4] sm:$0xf]
        %v1213 = vld [vmem:[%s1210 + $0x8] sm:$0x1]
        %v1214 = vld [vmem:[%s1210] sm:$0xe]
        %v1215 = vld [vmem:[%s1210 + $0x8] sm:$0x3]
        %v1216 = vld [vmem:[%s1210] sm:$0xc]
        %1217 = vrot.lane.b32.xlu0 %v311, 32
        %v1218 = vpop.permute.xlu0 %1217
        %1219 = vrot.lane.b32.xlu0 %v319, 64
        %v1220 = vpop.permute.xlu0 %1219
        %1221 = vrot.lane.b32.xlu0 %v341, 96
        %v1222 = vpop.permute.xlu0 %1221
        %1223 = vrot.lane.b32.xlu0 %v354, 32
        %v1224 = vpop.permute.xlu0 %1223
        %1225 = vrot.lane.b32.xlu0 %v371, 64
        %v1226 = vpop.permute.xlu0 %1225
        %1227 = vrot.lane.b32.xlu0 %v379, 96
        %v1228 = vpop.permute.xlu0 %1227
        %1229 = vrot.lane.b32.xlu0 %v407, 32
        %v1230 = vpop.permute.xlu0 %1229
        %1231 = vrot.lane.b32.xlu0 %v414, 64
        %v1232 = vpop.permute.xlu0 %1231
        %v1233 = vshrl.u32 %v414, 16
        %v1235 = vshll.u32 %v414, 16
        %v1237 = vrot.slane %v1235, 1
        %v1238 = vor.u32 %v1233, %v1237
        %v1239 = vsel %vm236, %v1238, %v467
        %1240 = vrot.lane.b32.xlu0 %v1239, 96
        %v1241 = vpop.permute.xlu0 %1240
        %v1242 = vrot.slane %v453, 1
        %v1243 = vsel %vm254, %v478, %v1242
        %v1244 = vrot.slane %v458, 1
        %v1245 = vrot.slane %v460, 2
        %v1246 = vor.u32 %v1244, %v1245
        %v1247 = vsel %vm263, %v1246, %v503
        %1248 = vrot.lane.b32.xlu0 %v1247, 32
        %v1249 = vpop.permute.xlu0 %1248
        %v1250 = vrot.slane %v487, 2
        %v1251 = vrot.slane %v477, 2
        %v1252 = vsel %vm286, %v1250, %v1251
        %1253 = vrot.lane.b32.xlu0 %v1252, 64
        %v1254 = vpop.permute.xlu0 %1253
        %1255 = vrot.lane.b32.xlu0 %v513, 96
        %v1256 = vpop.permute.xlu0 %1255
        %v1258 = vsel %vm417, %v294, %v1218
        %v1260 = vsel %vm420, %v1258, %v1220
        %v1262 = vsel %vm423, %v1260, %v1222
        %v1266 = vsel %vm417, %v347, %v1224
        %v1268 = vsel %vm420, %v1266, %v1226
        %v1270 = vsel %vm423, %v1268, %v1228
        %v1274 = vsel %vm417, %v399, %v1230
        %v1276 = vsel %vm420, %v1274, %v1232
        %v1278 = vsel %vm423, %v1276, %v1241
        %v1282 = vsel %vm417, %v1243, %v1249
        %v1284 = vsel %vm420, %v1282, %v1254
        %v1286 = vsel %vm423, %v1284, %v1256
        %1288 = vrot.lane.b32.xlu0 %v542, 32
        %v1289 = vpop.permute.xlu0 %1288
        %1290 = vrot.lane.b32.xlu0 %v543, 32
        %v1291 = vpop.permute.xlu0 %1290
        %1292 = vrot.lane.b32.xlu0 %v554, 64
        %v1293 = vpop.permute.xlu0 %1292
        %1294 = vrot.lane.b32.xlu0 %v553, 64
        %v1295 = vpop.permute.xlu0 %1294
        %1296 = vrot.lane.b32.xlu0 %v578, 96
        %v1297 = vpop.permute.xlu0 %1296
        %1298 = vrot.lane.b32.xlu0 %v573, 96
        %v1299 = vpop.permute.xlu0 %1298
        %v1302 = vunpack.c.l.b16 %v1211
        %v1303 = vunpack.c.l.b16 %v1212
        %v1304 = vpack.c.b16 %v1303, %v1302
        %v1306 = vshrl.u32 %v1304, 16
        %v1308 = vrot.slane %v1306, 7
        %v1309 = vshll.u32 %v1304, 16
        %v1311 = vor.u32 %v1308, %v1309
        %v1313 = vunpack.c.l.b16 %v1213
        %v1314 = vpack.c.b16 %v1313, %v1313
        %1315 = vrot.lane.b32.xlu0 %v1304, 32
        %v1316 = vpop.permute.xlu0 %1315
        %1317 = vrot.lane.b32.xlu0 %v1314, 32
        %v1318 = vpop.permute.xlu0 %1317
        %v1320 = vunpack.c.l.b16 %v1214
        %v1321 = vpack.c.b16 %v1303, %v1320
        %v1323 = vshrl.u32 %v1321, 16
        %v1325 = vshll.u32 %v1321, 16
        %v1327 = vrot.slane %v1325, 1
        %v1328 = vor.u32 %v1323, %v1327
        %v1330 = vshll.u32 %v1314, 16
        %v1332 = vrot.slane %v1330, 1
        %v1333 = vsel %vm236, %v1328, %v1332
        %v1334 = vshrl.u32 %v1314, 16
        %1336 = vrot.lane.b32.xlu0 %v1333, 64
        %v1337 = vpop.permute.xlu0 %1336
        %1338 = vrot.lane.b32.xlu0 %v1334, 64
        %v1339 = vpop.permute.xlu0 %1338
        %v1341 = vunpack.c.l.b16 %v1215
        %v1342 = vpack.c.b16 %v1341, %v1341
        %v1343 = vrot.slane %v1321, 1
        %v1344 = vrot.slane %v1342, 1
        %v1345 = vsel %vm254, %v1343, %v1344
        %1346 = vrot.lane.b32.xlu0 %v1345, 96
        %v1347 = vpop.permute.xlu0 %1346
        %1348 = vrot.lane.b32.xlu0 %v1344, 96
        %v1349 = vpop.permute.xlu0 %1348
        %v1351 = vunpack.c.l.b16 %v1216
        %v1352 = vpack.c.b16 %v1303, %v1351
        %v1354 = vshrl.u32 %v1352, 16
        %v1356 = vrot.slane %v1354, 1
        %v1357 = vshll.u32 %v1352, 16
        %v1359 = vrot.slane %v1357, 2
        %v1360 = vor.u32 %v1356, %v1359
        %v1362 = vshrl.u32 %v1342, 16
        %v1364 = vrot.slane %v1362, 1
        %v1365 = vshll.u32 %v1342, 16
        %v1367 = vrot.slane %v1365, 2
        %v1368 = vor.u32 %v1364, %v1367
        %v1369 = vsel %vm263, %v1360, %v1368
        %v1371 = vsel %vm417, %v513, %v1289
        %v1373 = vsel %vm417, %v523, %v1291
        %v1375 = vsel %vm420, %v1371, %v1293
        %v1377 = vsel %vm420, %v1373, %v1295
        %v1379 = vsel %vm423, %v1375, %v1297
        %v1381 = vsel %vm423, %v1377, %v1299
        %v1384 = vsel %vm417, %v1311, %v1316
        %v1387 = vsel %vm417, %v1308, %v1318
        %v1389 = vsel %vm420, %v1384, %v1337
        %v1391 = vsel %vm420, %v1387, %v1339
        %v1393 = vsel %vm423, %v1389, %v1347
        %v1395 = vsel %vm423, %v1391, %v1349
        %v1396 = vshrl.u32 %v1379, 16
        %v1398 = vshll.u32 %v1379, 16
        %v1400 = vrot.slane %v1398, 1
        %v1401 = vor.u32 %v1396, %v1400
        %v1402 = vshll.u32 %v1381, 16
        %v1404 = vrot.slane %v1402, 1
        %v1405 = vsel %vm236, %v1401, %v1404
        %v1406 = vshrl.u32 %v1393, 16
        %v1408 = vshll.u32 %v1393, 16
        %v1410 = vrot.slane %v1408, 1
        %v1411 = vor.u32 %v1406, %v1410
        %v1412 = vshll.u32 %v1395, 16
        %v1414 = vrot.slane %v1412, 1
        %v1415 = vsel %vm236, %v1411, %v1414
        %v1417 = vshrl.u32 %v1369, 16
        %v1419 = vshll.u32 %v1369, 16
        %v1421 = vrot.slane %v1419, 1
        %v1422 = vor.u32 %v1417, %v1421
        %v1424 = vshll.u32 %v1364, 16
        %v1426 = vrot.slane %v1424, 1
        %v1427 = vsel %vm236, %v1422, %v1426
        %v1431 = vsel %vm417, %v1427, 0
        %1433 = vmatprep.subr.bf16.mxu0 0
        %1434 = vmatpush1.bf16.msra.mxu0 %v947
        %1435 = vmatprep.subr.bf16.mxu0 0
        %1436 = vmatpush1.bf16.msra.mxu0 %v946
        %1437 = vmatprep.subr.bf16.mxu0 0
        %1438 = vmatpush1.bf16.msra.mxu0 %v945
        %1439 = vmatprep.subr.bf16.mxu0 0
        %1440 = vmatpush1.bf16.msra.mxu0 %v944
        %1441 = vmatprep.subr.bf16.mxu0 0
        %1442 = vmatpush1.bf16.msra.mxu0 %v943
        %1443 = vmatprep.subr.bf16.mxu0 0
        %1444 = vmatpush1.bf16.msra.mxu0 %v942
        %1445 = vmatprep.subr.bf16.mxu0 0
        %1446 = vmatpush1.bf16.msra.mxu0 %v941
        %1447 = vmatprep.subr.bf16.mxu0 0
        %1448 = vmatpush1.bf16.msra.mxu0 %v940
        %1449 = vmatprep.subr.bf16.mxu0 0
        %1450 = vmatpush2.bf16.msra.mxu0 %v955
        %1451 = vmatprep.subr.bf16.mxu0 0
        %1452 = vmatpush2.bf16.msra.mxu0 %v954
        %1453 = vmatprep.subr.bf16.mxu0 0
        %1454 = vmatpush2.bf16.msra.mxu0 %v953
        %1455 = vmatprep.subr.bf16.mxu0 0
        %1456 = vmatpush2.bf16.msra.mxu0 %v952
        %1457 = vmatprep.subr.bf16.mxu0 0
        %1458 = vmatpush2.bf16.msra.mxu0 %v951
        %1459 = vmatprep.subr.bf16.mxu0 0
        %1460 = vmatpush2.bf16.msra.mxu0 %v950
        %1461 = vmatprep.subr.bf16.mxu0 0
        %1462 = vmatpush2.bf16.msra.mxu0 %v949
        %1463 = vmatprep.subr.bf16.mxu0 0
        %1464 = vmatpush2.bf16.msra.mxu0 %v948
        %1465 = vmatprep.mubr.bf16.mxu0 %v1270
        %1466 = vmatmul.mubr.bf16.gmra.mxu0 %v1262
        %v1467 = vpop.f32.mrf.mxu0
        %v1468 = vadd.f32 0.0, %v1467
        %v1469 = vpop.f32.mrf.mxu0
        %v1470 = vpop.f32.mrf.mxu0
        %v1471 = vadd.f32 0.0, %v1470
        %v1472 = vpop.f32.mrf.mxu0
        %1473 = vdwg.mxu0
        %1474 = vmatprep.subr.bf16.mxu0 0
        %1475 = vmatpush1.bf16.msra.mxu0 %v963
        %1476 = vmatprep.subr.bf16.mxu0 0
        %1477 = vmatpush1.bf16.msra.mxu0 %v962
        %1478 = vmatprep.subr.bf16.mxu0 0
        %1479 = vmatpush1.bf16.msra.mxu0 %v961
        %1480 = vmatprep.subr.bf16.mxu0 0
        %1481 = vmatpush1.bf16.msra.mxu0 %v960
        %1482 = vmatprep.subr.bf16.mxu0 0
        %1483 = vmatpush1.bf16.msra.mxu0 %v959
        %1484 = vmatprep.subr.bf16.mxu0 0
        %1485 = vmatpush1.bf16.msra.mxu0 %v958
        %1486 = vmatprep.subr.bf16.mxu0 0
        %1487 = vmatpush1.bf16.msra.mxu0 %v957
        %1488 = vmatprep.subr.bf16.mxu0 0
        %1489 = vmatpush1.bf16.msra.mxu0 %v956
        %1490 = vmatprep.subr.bf16.mxu0 0
        %1491 = vmatpush2.bf16.msra.mxu0 %v971
        %1492 = vmatprep.subr.bf16.mxu0 0
        %1493 = vmatpush2.bf16.msra.mxu0 %v970
        %1494 = vmatprep.subr.bf16.mxu0 0
        %1495 = vmatpush2.bf16.msra.mxu0 %v969
        %1496 = vmatprep.subr.bf16.mxu0 0
        %1497 = vmatpush2.bf16.msra.mxu0 %v968
        %1498 = vmatprep.subr.bf16.mxu0 0
        %1499 = vmatpush2.bf16.msra.mxu0 %v967
        %1500 = vmatprep.subr.bf16.mxu0 0
        %1501 = vmatpush2.bf16.msra.mxu0 %v966
        %1502 = vmatprep.subr.bf16.mxu0 0
        %1503 = vmatpush2.bf16.msra.mxu0 %v965
        %1504 = vmatprep.subr.bf16.mxu0 0
        %1505 = vmatpush2.bf16.msra.mxu0 %v964
        %1506 = vmatprep.mubr.bf16.mxu0 %v1286
        %1507 = vmatmul.mubr.bf16.gmra.mxu0 %v1278
        %v1508 = vpop.f32.mrf.mxu0
        %v1509 = vadd.f32 %v1468, %v1508
        %v1510 = vpop.f32.mrf.mxu0
        %v1511 = vpop.f32.mrf.mxu0
        %v1512 = vadd.f32 %v1471, %v1511
        %v1513 = vpop.f32.mrf.mxu0
        %1514 = vdwg.mxu0
        %1515 = vmatprep.subr.bf16.mxu0 0
        %1516 = vmatpush1.bf16.msra.mxu0 %v979
        %1517 = vmatprep.subr.bf16.mxu0 0
        %1518 = vmatpush1.bf16.msra.mxu0 %v978
        %1519 = vmatprep.subr.bf16.mxu0 0
        %1520 = vmatpush1.bf16.msra.mxu0 %v977
        %1521 = vmatprep.subr.bf16.mxu0 0
        %1522 = vmatpush1.bf16.msra.mxu0 %v976
        %1523 = vmatprep.subr.bf16.mxu0 0
        %1524 = vmatpush1.bf16.msra.mxu0 %v975
        %1525 = vmatprep.subr.bf16.mxu0 0
        %1526 = vmatpush1.bf16.msra.mxu0 %v974
        %1527 = vmatprep.subr.bf16.mxu0 0
        %1528 = vmatpush1.bf16.msra.mxu0 %v973
        %1529 = vmatprep.subr.bf16.mxu0 0
        %1530 = vmatpush1.bf16.msra.mxu0 %v972
        %1531 = vmatprep.subr.bf16.mxu0 0
        %1532 = vmatpush2.bf16.msra.mxu0 %v987
        %1533 = vmatprep.subr.bf16.mxu0 0
        %1534 = vmatpush2.bf16.msra.mxu0 %v986
        %1535 = vmatprep.subr.bf16.mxu0 0
        %1536 = vmatpush2.bf16.msra.mxu0 %v985
        %1537 = vmatprep.subr.bf16.mxu0 0
        %1538 = vmatpush2.bf16.msra.mxu0 %v984
        %1539 = vmatprep.subr.bf16.mxu0 0
        %1540 = vmatpush2.bf16.msra.mxu0 %v983
        %1541 = vmatprep.subr.bf16.mxu0 0
        %1542 = vmatpush2.bf16.msra.mxu0 %v982
        %1543 = vmatprep.subr.bf16.mxu0 0
        %1544 = vmatpush2.bf16.msra.mxu0 %v981
        %1545 = vmatprep.subr.bf16.mxu0 0
        %1546 = vmatpush2.bf16.msra.mxu0 %v980
        %1547 = vmatprep.mubr.bf16.mxu0 %v1415
        %1548 = vmatmul.mubr.bf16.gmra.mxu0 %v1405
        %v1549 = vpop.f32.mrf.mxu0
        %v1550 = vadd.f32 %v1509, %v1549
        %v1551 = vpop.f32.mrf.mxu0
        %v1552 = vpop.f32.mrf.mxu0
        %v1553 = vadd.f32 %v1512, %v1552
        %v1554 = vpop.f32.mrf.mxu0
        %1555 = vdwg.mxu0
        %1556 = vmatprep.subr.bf16.mxu0 0
        %1557 = vmatpush1.bf16.msra.mxu0 0
        %1558 = vmatprep.subr.bf16.mxu0 0
        %1559 = vmatpush1.bf16.msra.mxu0 0
        %1560 = vmatprep.subr.bf16.mxu0 0
        %1561 = vmatpush1.bf16.msra.mxu0 0
        %1562 = vmatprep.subr.bf16.mxu0 0
        %1563 = vmatpush1.bf16.msra.mxu0 0
        %1564 = vmatprep.subr.bf16.mxu0 0
        %1565 = vmatpush1.bf16.msra.mxu0 0
        %1566 = vmatprep.subr.bf16.mxu0 0
        %1567 = vmatpush1.bf16.msra.mxu0 0
        %1568 = vmatprep.subr.bf16.mxu0 0
        %1569 = vmatpush1.bf16.msra.mxu0 %v989
        %1570 = vmatprep.subr.bf16.mxu0 0
        %1571 = vmatpush1.bf16.msra.mxu0 %v988
        %1572 = vmatprep.subr.bf16.mxu0 0
        %1573 = vmatpush2.bf16.msra.mxu0 0
        %1574 = vmatprep.subr.bf16.mxu0 0
        %1575 = vmatpush2.bf16.msra.mxu0 0
        %1576 = vmatprep.subr.bf16.mxu0 0
        %1577 = vmatpush2.bf16.msra.mxu0 0
        %1578 = vmatprep.subr.bf16.mxu0 0
        %1579 = vmatpush2.bf16.msra.mxu0 0
        %1580 = vmatprep.subr.bf16.mxu0 0
        %1581 = vmatpush2.bf16.msra.mxu0 0
        %1582 = vmatprep.subr.bf16.mxu0 0
        %1583 = vmatpush2.bf16.msra.mxu0 0
        %1584 = vmatprep.subr.bf16.mxu0 0
        %1585 = vmatpush2.bf16.msra.mxu0 0
        %1586 = vmatprep.subr.bf16.mxu0 0
        %1587 = vmatpush2.bf16.msra.mxu0 0
        %1588 = vmatprep.mubr.bf16.mxu0 0
        %1589 = vmatmul.mubr.bf16.gmra.mxu0 %v1431
        %v1590 = vpop.f32.mrf.mxu0
        %v1591 = vadd.f32 %v1550, %v1590
        %v1592 = vpop.f32.mrf.mxu0
        %v1593 = vpop.f32.mrf.mxu0
        %v1594 = vadd.f32 %v1553, %v1593
        %v1595 = vpop.f32.mrf.mxu0
        %1596 = vdwg.mxu0
        %v1597 = vmax.f32 %v1201, %v1591
        %v1598 = vmax.f32 %v1204, %v1594
        %1599 = vst.msk [vmem:[#allocation2] sm:$0xff] %vm417, %v1597
        %1600 = vst.msk [vmem:[#allocation2 + $0x8] sm:$0xff] %vm417, %v1598
        %v1601 = vld [vmem:[#allocation2] ss:$2 sm:$0xff]
        %s1602 = scalar_lea.vmem [#allocation2], 1
        %v1603 = vld [vmem:[%s1602] ss:$2 sm:$0xff]
        %v1604 = vmax.f32 %v1601, %v1603
        %v1605 = vld [vmem:[%s2] sm:$0x1]
        %v1607 = vlaneseq
        %v1608 = vshrl.u32 %v1607, 7
        %v1609 = vsub.s32 0, %v1608
        %v1610 = vrot.slane %v1605, %v1609
        %v1612 = vadd.f32 %v1604, %v1610
        %v1613 = vpack.c.bf16 %v1612, %v1612
        %s1614 = smul.addr %s173, 4
        %s1615 = scalar_lea.vmem %s170, %s1614
        %vm1616 = vcmask 257024
        %1617 = vst.msk [vmem:[%s1615] sm:$0xf] %vm1616, %v1613
      $region37: #{model_forward.5} parent=31 // loop_footer
        %s177 = sadd.s32 1, %s173
      $region38: #{model_forward.5} parent=31 // loop_footer_branch
        %172 = sbr.rel target = $region34
      $region39: #{model_forward.5} parent=31 // loop_exit
        _
      %p1618 = scmp.lt.s32.totalorder %s14, 1
      %s1619 = scalar_select %p1618, %s14, 1
      %s1620 = smul.addr %s1619, 8
      %s1621 = smul.addr %s1620, 4
      %s1622 = scalar_lea.vmem %s3, %s1621
      // Predicated region
      $region40: #{model_forward.5} parent=31 // pred_check
        %p1623 = pneg %p100
      $region41: #{model_forward.5} parent=31 // pred_check_branch
        %1625 = sbr.rel (%p1623) target = $region43
      $region42: #{model_forward.5} parent=31 // pred_region
        _
      $region43: #{model_forward.5} parent=31 // pred_fallthru
        _
    $region32: #{model_forward.5} parent=5 // pred_fallthru
      _
    %p1626 = scmp.le.s32.totalorder 2, %s9
    // Predicated region
    $region44: #{model_forward.5} parent=5 // pred_check
      %p1627 = pneg %p1626
    $region45: #{model_forward.5} parent=5 // pred_check_branch
      %1629 = sbr.rel (%p1627) target = $region47
    $region46: #{model_forward.5} parent=5 // pred_region
      %s1630 = ssub.s32 %s9, 2
      // Predicated region
      $region48: #{model_forward.5} parent=46 // pred_check
        %p1631 = pneg %p106
      $region49: #{model_forward.5} parent=46 // pred_check_branch
        %1633 = sbr.rel (%p1631) target = $region51
      $region50: #{model_forward.5} parent=46 // pred_region
        %p1634 = scmp.lt.s32.totalorder %s15, 1
        %s1635 = scalar_select %p1634, %s15, 1
        %s1636 = smul.addr %s1635, 8
        %s1637 = smul.addr %s1636, 4
        %s1638 = scalar_lea.vmem %s3, %s1637
      $region51: #{model_forward.5} parent=46 // pred_fallthru
        _
    $region47: #{model_forward.5} parent=5 // pred_fallthru
      _
  $region6: #{model_forward.5} parent=0 // loop_footer
    %s13 = sadd.s32 1, %s9
  $region7: #{model_forward.5} parent=0 // loop_footer_branch
    %8 = sbr.rel target = $region3
  $region8: #{model_forward.5} parent=0 // loop_exit
    _

// kernel: model_forward.6
$region0: #{model_forward.6}
  #allocation0 [shape = 'u32[]', space=smem, size = 0x4, offset = 0x4, fixed_abs, tag = 'smem constant byte address 0x4 - core index']
  #allocation1 [shape = 'u32[144,128]{1,0:T(1,128)}', space=vmem, size = 0x12000, scoped, tag = 'internal scratch']
  #allocation2 [shape = 'f32[8,64]{1,0:T(8,128)}', space=vmem, size = 0x1000, scoped, tag = 'scratch operand']
  %s0 = inlined_call_operand.vmem [shape: bf16[2,12,12,32], index: 0, kind: input, shape index: {}]
  %s1 = inlined_call_operand.vmem [shape: bf16[800,64], index: 1, kind: input, shape index: {}]
  %s2 = inlined_call_operand.vmem [shape: f32[1,64], index: 2, kind: input, shape index: {}]
  %s3 = inlined_call_operand.vmem [shape: bf16[2,4,4,64], index: 3, kind: output, shape index: {}]
  %s4 = sld [smem:[#allocation0]]
  $region52: #{model_forward.6} parent=0
    _
  %s6 = ssub.s32 1, %s4
  %s7 = scalar_select 0, %s6, %s4
  loop: start=0, step=1, limit=4
  $region2: #{model_forward.6} parent=0 // loop_pre_header
    _
  $region3: #{model_forward.6} parent=0 // loop_header
    %s9 = sphi 0, %s13
    %p10 = scmp.ge.s32.totalorder %s9, 4
    %s19 = sphi 0, %s21
    %s22 = sphi 0, %s19
    %s23 = sphi 0, %s22
    %s39 = sphi 0, %s23
    %s43 = sphi 0, %s43
    %s45 = sphi 0, %s43
    %s46 = sphi 0, %s45
    %s60 = sphi 0, %s46
    %s64 = sphi 0, %s64
    %s66 = sphi 0, %s64
    %s67 = sphi 0, %s66
    %s81 = sphi 0, %s67
    %s87 = sphi 0, %s89
    %s90 = sphi 0, %s87
    %s91 = sphi 0, %s90
    %s107 = sphi 0, %s91
  $region4: #{model_forward.6} parent=0 // loop_header_branch
    %12 = sbr.rel (%p10) target = $region8
  $region5: #{model_forward.6} parent=0 // loop_body
    %s14 = ssub.s32 %s9, 1
    %s15 = ssub.s32 %s9, 2
    %s16 = sadd.s32 %s9, 1
    %s17 = ssub.s32 %s9, %s16
    %p18 = scmp.eq.s32.totalorder %s17, 0
    %s20 = sadd.s32 %s19, 1
    %s21 = scalar_select %p18, %s19, %s20
    %p24 = pneg %p18
    %p25 = scmp.eq.s32.totalorder %s9, 1
    %p26 = por %p24, %p25
    %p27 = scmp.ne.s32.totalorder %s19, %s22
    %p28 = scmp.eq.s32.totalorder %s9, 0
    %p29 = por %p27, %p28
    %p30 = scmp.ne.s32.totalorder %s19, %s22
    %p31 = scmp.eq.s32.totalorder %s14, 1
    %p32 = por %p30, %p31
    %p33 = scmp.ne.s32.totalorder %s22, %s23
    %p34 = scmp.eq.s32.totalorder %s14, 0
    %p35 = por %p33, %p34
    %p36 = scmp.ne.s32.totalorder %s22, %s23
    %p37 = scmp.eq.s32.totalorder %s15, 1
    %p38 = por %p36, %p37
    %p40 = scmp.ne.s32.totalorder %s23, %s39
    %p41 = scmp.eq.s32.totalorder %s15, 0
    %p42 = por %p40, %p41
    %s44 = sadd.s32 %s43, 1
    %p47 = scmp.eq.s32.totalorder %s9, 1
    %p48 = scmp.ne.s32.totalorder %s43, %s45
    %p49 = scmp.eq.s32.totalorder %s9, 0
    %p50 = por %p48, %p49
    %p51 = scmp.ne.s32.totalorder %s43, %s45
    %p52 = scmp.eq.s32.totalorder %s14, 1
    %p53 = por %p51, %p52
    %p54 = scmp.ne.s32.totalorder %s45, %s46
    %p55 = scmp.eq.s32.totalorder %s14, 0
    %p56 = por %p54, %p55
    %p57 = scmp.ne.s32.totalorder %s45, %s46
    %p58 = scmp.eq.s32.totalorder %s15, 1
    %p59 = por %p57, %p58
    %p61 = scmp.ne.s32.totalorder %s46, %s60
    %p62 = scmp.eq.s32.totalorder %s15, 0
    %p63 = por %p61, %p62
    %s65 = sadd.s32 %s64, 1
    %p68 = scmp.eq.s32.totalorder %s9, 1
    %p69 = scmp.ne.s32.totalorder %s64, %s66
    %p70 = scmp.eq.s32.totalorder %s9, 0
    %p71 = por %p69, %p70
    %p72 = scmp.ne.s32.totalorder %s64, %s66
    %p73 = scmp.eq.s32.totalorder %s14, 1
    %p74 = por %p72, %p73
    %p75 = scmp.ne.s32.totalorder %s66, %s67
    %p76 = scmp.eq.s32.totalorder %s14, 0
    %p77 = por %p75, %p76
    %p78 = scmp.ne.s32.totalorder %s66, %s67
    %p79 = scmp.eq.s32.totalorder %s15, 1
    %p80 = por %p78, %p79
    %p82 = scmp.ne.s32.totalorder %s67, %s81
    %p83 = scmp.eq.s32.totalorder %s15, 0
    %p84 = por %p82, %p83
    %s85 = ssub.s32 %s9, %s16
    %p86 = scmp.eq.s32.totalorder %s85, 0
    %s88 = sadd.s32 %s87, 1
    %s89 = scalar_select %p86, %s87, %s88
    %p92 = pneg %p86
    %p93 = scmp.eq.s32.totalorder %s9, 1
    %p94 = por %p92, %p93
    %p95 = scmp.ne.s32.totalorder %s87, %s90
    %p96 = scmp.eq.s32.totalorder %s9, 0
    %p97 = por %p95, %p96
    %p98 = scmp.ne.s32.totalorder %s87, %s90
    %p99 = scmp.eq.s32.totalorder %s14, 1
    %p100 = por %p98, %p99
    %p101 = scmp.ne.s32.totalorder %s90, %s91
    %p102 = scmp.eq.s32.totalorder %s14, 0
    %p103 = por %p101, %p102
    %p104 = scmp.ne.s32.totalorder %s90, %s91
    %p105 = scmp.eq.s32.totalorder %s15, 1
    %p106 = por %p104, %p105
    %p108 = scmp.ne.s32.totalorder %s91, %s107
    %p109 = scmp.eq.s32.totalorder %s15, 0
    %p110 = por %p108, %p109
    %p111 = scmp.le.s32.totalorder 1, %s9
    %p112 = scmp.lt.s32.totalorder %s9, 3
    %p113 = pnand %p111, %p112
    %p114 = pneg %p113
    // Predicated region
    $region9: #{model_forward.6} parent=5 // pred_check
      _
    $region10: #{model_forward.6} parent=5 // pred_check_branch
      %116 = sbr.rel (%p113) target = $region12
    $region11: #{model_forward.6} parent=5 // pred_region
      %s117 = ssub.s32 %s9, 1
      // Predicated region
      $region13: #{model_forward.6} parent=11 // pred_check
        %p118 = pneg %p56
      $region14: #{model_forward.6} parent=11 // pred_check_branch
        %120 = sbr.rel (%p118) target = $region16
      $region15: #{model_forward.6} parent=11 // pred_region
        _
      $region16: #{model_forward.6} parent=11 // pred_fallthru
        _
      // Predicated region
      $region17: #{model_forward.6} parent=11 // pred_check
        %p121 = pneg %p77
      $region18: #{model_forward.6} parent=11 // pred_check_branch
        %123 = sbr.rel (%p121) target = $region20
      $region19: #{model_forward.6} parent=11 // pred_region
        _
      $region20: #{model_forward.6} parent=11 // pred_fallthru
        _
    $region12: #{model_forward.6} parent=5 // pred_fallthru
      _
    %p124 = scmp.lt.s32.totalorder %s9, 2
    // Predicated region
    $region21: #{model_forward.6} parent=5 // pred_check
      %p125 = pneg %p124
    $region22: #{model_forward.6} parent=5 // pred_check_branch
      %127 = sbr.rel (%p125) target = $region24
    $region23: #{model_forward.6} parent=5 // pred_region
      // Predicated region
      $region25: #{model_forward.6} parent=23 // pred_check
        %p128 = pneg %p29
      $region26: #{model_forward.6} parent=23 // pred_check_branch
        %130 = sbr.rel (%p128) target = $region28
      $region27: #{model_forward.6} parent=23 // pred_region
        %p131 = scmp.lt.s32.totalorder %s9, 1
        %s132 = scalar_select %p131, %s9, 1
        %s133 = smul.addr %s132, 24
        %s134 = smul.addr %s133, 4
        %s135 = scalar_lea.vmem %s0, %s134
      $region28: #{model_forward.6} parent=23 // pred_fallthru
        _
    $region24: #{model_forward.6} parent=5 // pred_fallthru
      _
    %p136 = scmp.le.s32.totalorder 1, %s9
    %p137 = scmp.lt.s32.totalorder %s9, 3
    %p138 = pnand %p136, %p137
    %p139 = pneg %p138
    // Predicated region
    $region29: #{model_forward.6} parent=5 // pred_check
      _
    $region30: #{model_forward.6} parent=5 // pred_check_branch
      %141 = sbr.rel (%p138) target = $region32
    $region31: #{model_forward.6} parent=5 // pred_region
      %s142 = ssub.s32 %s9, 1
      %p143 = scmp.lt.s32.totalorder %s14, 1
      %s144 = scalar_select %p143, %s14, 1
      %s145 = smul.addr %s144, 24
      %s146 = smul.addr %s145, 4
      %s147 = scalar_lea.vmem %s0, %s146
      %p148 = pneg %p35
      %p149 = pneg %p32
      %p150 = pneg %p56
      %p151 = pneg %p53
      %p152 = pneg %p77
      %p153 = pneg %p74
      %p154 = pneg %p103
      %p155 = pneg %p100
      %p156 = scmp.lt.s32.totalorder %s14, 1
      %s157 = scalar_select %p156, %s14, 1
      %s158 = smul.addr %s157, 4
      %s159 = smul.addr %s158, 2
      %s160 = scalar_lea.vmem %s3, %s159
      %p161 = scmp.lt.s32.totalorder %s14, 1
      %s162 = scalar_select %p161, %s14, 1
      %s163 = smul.addr %s162, 24
      %s164 = smul.addr %s163, 4
      %s165 = scalar_lea.vmem %s0, %s164
      %p166 = scmp.lt.s32.totalorder %s14, 1
      %s167 = scalar_select %p166, %s14, 1
      %s168 = smul.addr %s167, 4
      %s169 = smul.addr %s168, 2
      %s170 = scalar_lea.vmem %s3, %s169
      loop: start=0, step=1, limit=4
      $region33: #{model_forward.6} parent=31 // loop_pre_header
        _
      $region34: #{model_forward.6} parent=31 // loop_header
        %s173 = sphi 0, %s177
        %p174 = scmp.ge.s32.totalorder %s173, 4
      $region35: #{model_forward.6} parent=31 // loop_header_branch
        %176 = sbr.rel (%p174) target = $region39
      $region36: #{model_forward.6} parent=31 // loop_body
        %s178 = smul.u32 %s173, 2
        %s179 = smul.u32 %s178, 2
        %s180 = smul.addr %s179, 4
        %s181 = scalar_lea.vmem %s165, %s180
        %v182 = vld [vmem:[%s181] sm:$0xf]
        %v183 = vld [vmem:[%s181 + $0x4] sm:$0x1]
        %v184 = vld [vmem:[%s181] sm:$0xe]
        %v185 = vld [vmem:[%s181 + $0x4] sm:$0x3]
        %v186 = vld [vmem:[%s181] sm:$0xc]
        %s187 = sadd.s32 %s178, 1
        %s188 = smul.u32 %s187, 2
        %s189 = smul.addr %s188, 4
        %s190 = scalar_lea.vmem %s165, %s189
        %v191 = vld [vmem:[%s190] sm:$0xf]
        %v192 = vld [vmem:[%s190 + $0x4] sm:$0x1]
        %v193 = vld [vmem:[%s190] sm:$0xe]
        %v194 = vld [vmem:[%s190 + $0x4] sm:$0x3]
        %v195 = vld [vmem:[%s190] sm:$0xc]
        %s196 = sadd.s32 %s178, 2
        %s197 = smul.u32 %s196, 2
        %s198 = smul.addr %s197, 4
        %s199 = scalar_lea.vmem %s165, %s198
        %v200 = vld [vmem:[%s199] sm:$0xf]
        %v201 = vld [vmem:[%s199 + $0x4] sm:$0x1]
        %v202 = vld [vmem:[%s199] sm:$0xe]
        %v203 = vld [vmem:[%s199 + $0x4] sm:$0x3]
        %v204 = vld [vmem:[%s199] sm:$0xc]
        %s205 = sadd.s32 %s178, 3
        %s206 = smul.u32 %s205, 2
        %s207 = smul.addr %s206, 4
        %s208 = scalar_lea.vmem %s165, %s207
        %v209 = vld [vmem:[%s208] sm:$0xf]
        %v210 = vld [vmem:[%s208 + $0x4] sm:$0x1]
        %v211 = vld [vmem:[%s208] sm:$0xe]
        %v212 = vld [vmem:[%s208 + $0x4] sm:$0x3]
        %v213 = vld [vmem:[%s208] sm:$0xc]
        %s214 = sadd.s32 %s178, 4
        %s215 = smul.u32 %s214, 2
        %s216 = smul.addr %s215, 4
        %s217 = scalar_lea.vmem %s165, %s216
        %v218 = vld [vmem:[%s217] sm:$0xf]
        %v219 = vld [vmem:[%s217 + $0x4] sm:$0x1]
        %v220 = vld [vmem:[%s217] sm:$0xe]
        %v221 = vld [vmem:[%s217 + $0x4] sm:$0x3]
        %v222 = vld [vmem:[%s217] sm:$0xc]
        %v225 = vunpack.c.l.b16 %v182
        %v226 = vunpack.c.l.b16 %v183
        %v227 = vpack.c.b16 %v226, %v225
        %v229 = vshrl.u32 %v227, 16
        %v231 = vshll.u32 %v227, 16
        %v233 = vrot.slane %v231, 1
        %v234 = vor.u32 %v229, %v233
        %235 = vrot.lane.b32.xlu0 %v234, 32
        %v236 = vpop.permute.xlu0 %235
        %v238 = vunpack.c.l.b16 %v184
        %v239 = vpack.c.b16 %v226, %v238
        %v240 = vrot.slane %v239, 1
        %241 = vrot.lane.b32.xlu0 %v240, 64
        %v242 = vpop.permute.xlu0 %241
        %v244 = vunpack.c.l.b16 %v185
        %v245 = vpack.c.b16 %v244, %v238
        %v247 = vshrl.u32 %v245, 16
        %v249 = vrot.slane %v247, 1
        %v250 = vshll.u32 %v245, 16
        %v252 = vrot.slane %v250, 2
        %v253 = vor.u32 %v249, %v252
        %254 = vrot.lane.b32.xlu0 %v253, 96
        %v255 = vpop.permute.xlu0 %254
        %v257 = vunpack.c.l.b16 %v186
        %v258 = vpack.c.b16 %v244, %v257
        %v259 = vrot.slane %v258, 2
        %v261 = vunpack.c.l.b16 %v191
        %v262 = vpack.c.b16 %v261, %v261
        %263 = vrot.lane.b32.xlu0 %v262, 32
        %v264 = vpop.permute.xlu0 %263
        %v266 = vunpack.c.l.b16 %v192
        %v267 = vpack.c.b16 %v266, %v261
        %v269 = vshrl.u32 %v267, 16
        %v271 = vshll.u32 %v267, 16
        %v273 = vrot.slane %v271, 1
        %v274 = vor.u32 %v269, %v273
        %275 = vrot.lane.b32.xlu0 %v274, 64
        %v276 = vpop.permute.xlu0 %275
        %v278 = vunpack.c.l.b16 %v193
        %v279 = vpack.c.b16 %v266, %v278
        %v280 = vrot.slane %v279, 1
        %281 = vrot.lane.b32.xlu0 %v280, 96
        %v282 = vpop.permute.xlu0 %281
        %v284 = vunpack.c.l.b16 %v194
        %v285 = vpack.c.b16 %v284, %v278
        %v287 = vshrl.u32 %v285, 16
        %v289 = vrot.slane %v287, 1
        %v290 = vshll.u32 %v285, 16
        %v292 = vrot.slane %v290, 2
        %v293 = vor.u32 %v289, %v292
        %v295 = vunpack.c.l.b16 %v195
        %v296 = vpack.c.b16 %v284, %v295
        %v297 = vrot.slane %v296, 2
        %298 = vrot.lane.b32.xlu0 %v297, 32
        %v299 = vpop.permute.xlu0 %298
        %v301 = vunpack.c.l.b16 %v200
        %v302 = vpack.c.b16 %v301, %v301
        %303 = vrot.lane.b32.xlu0 %v302, 64
        %v304 = vpop.permute.xlu0 %303
        %v306 = vunpack.c.l.b16 %v201
        %v307 = vpack.c.b16 %v306, %v301
        %v309 = vshrl.u32 %v307, 16
        %v311 = vshll.u32 %v307, 16
        %v313 = vrot.slane %v311, 1
        %v314 = vor.u32 %v309, %v313
        %315 = vrot.lane.b32.xlu0 %v314, 96
        %v316 = vpop.permute.xlu0 %315
        %v318 = vunpack.c.l.b16 %v202
        %v319 = vpack.c.b16 %v306, %v318
        %v320 = vrot.slane %v319, 1
        %v322 = vunpack.c.l.b16 %v203
        %v323 = vpack.c.b16 %v322, %v318
        %v325 = vshrl.u32 %v323, 16
        %v327 = vrot.slane %v325, 1
        %v328 = vshll.u32 %v323, 16
        %v330 = vrot.slane %v328, 2
        %v331 = vor.u32 %v327, %v330
        %332 = vrot.lane.b32.xlu0 %v331, 32
        %v333 = vpop.permute.xlu0 %332
        %v335 = vunpack.c.l.b16 %v204
        %v336 = vpack.c.b16 %v322, %v335
        %v337 = vrot.slane %v336, 2
        %338 = vrot.lane.b32.xlu0 %v337, 64
        %v339 = vpop.permute.xlu0 %338
        %v341 = vunpack.c.l.b16 %v209
        %v342 = vpack.c.b16 %v341, %v341
        %343 = vrot.lane.b32.xlu0 %v342, 96
        %v344 = vpop.permute.xlu0 %343
        %vm345 = vcmask 261120
        %v348 = vsel %vm345, %v182, %v236
        %vm349 = vcmask 523264
        %v351 = vsel %vm349, %v348, %v242
        %vm352 = vcmask 785408
        %v354 = vsel %vm352, %v351, %v255
        %v358 = vsel %vm345, %v259, %v264
        %v360 = vsel %vm349, %v358, %v276
        %v362 = vsel %vm352, %v360, %v282
        %v366 = vsel %vm345, %v293, %v299
        %v368 = vsel %vm349, %v366, %v304
        %v370 = vsel %vm352, %v368, %v316
        %v374 = vsel %vm345, %v320, %v333
        %v376 = vsel %vm349, %v374, %v339
        %v378 = vsel %vm352, %v376, %v344
        %v381 = vunpack.c.l.b16 %v210
        %v382 = vpack.c.b16 %v381, %v341
        %v384 = vunpack.c.l.b16 %v211
        %v385 = vpack.c.b16 %v381, %v384
        %v387 = vshrl.u32 %v385, 16
        %v389 = vshll.u32 %v385, 16
        %v391 = vrot.slane %v389, 1
        %v392 = vor.u32 %v387, %v391
        %393 = vrot.lane.b32.xlu0 %v392, 32
        %v394 = vpop.permute.xlu0 %393
        %v396 = vunpack.c.l.b16 %v212
        %v397 = vpack.c.b16 %v396, %v384
        %v398 = vrot.slane %v397, 1
        %399 = vrot.lane.b32.xlu0 %v398, 64
        %v400 = vpop.permute.xlu0 %399
        %v402 = vunpack.c.l.b16 %v213
        %v403 = vpack.c.b16 %v396, %v402
        %v405 = vshrl.u32 %v403, 16
        %v407 = vrot.slane %v405, 1
        %v408 = vshll.u32 %v403, 16
        %v410 = vrot.slane %v408, 2
        %v411 = vor.u32 %v407, %v410
        %412 = vrot.lane.b32.xlu0 %v411, 96
        %v413 = vpop.permute.xlu0 %412
        %v415 = vunpack.c.l.b16 %v218
        %v416 = vpack.c.b16 %v415, %v415
        %v418 = vshrl.u32 %v416, 16
        %v420 = vrot.slane %v418, 7
        %v421 = vshll.u32 %v416, 16
        %v423 = vor.u32 %v420, %v421
        %v425 = vunpack.c.l.b16 %v219
        %v426 = vpack.c.b16 %v425, %v415
        %427 = vrot.lane.b32.xlu0 %v426, 32
        %v428 = vpop.permute.xlu0 %427
        %v430 = vunpack.c.l.b16 %v220
        %v431 = vpack.c.b16 %v425, %v430
        %v433 = vshrl.u32 %v431, 16
        %v435 = vshll.u32 %v431, 16
        %v437 = vrot.slane %v435, 1
        %v438 = vor.u32 %v433, %v437
        %439 = vrot.lane.b32.xlu0 %v438, 64
        %v440 = vpop.permute.xlu0 %439
        %v442 = vunpack.c.l.b16 %v221
        %v443 = vpack.c.b16 %v442, %v430
        %v444 = vrot.slane %v443, 1
        %445 = vrot.lane.b32.xlu0 %v444, 96
        %v446 = vpop.permute.xlu0 %445
        %v448 = vunpack.c.l.b16 %v222
        %v449 = vpack.c.b16 %v442, %v448
        %v451 = vshrl.u32 %v449, 16
        %v453 = vrot.slane %v451, 1
        %v454 = vshll.u32 %v449, 16
        %v456 = vrot.slane %v454, 2
        %v457 = vor.u32 %v453, %v456
        %v460 = vsel %vm345, %v382, %v394
        %v462 = vsel %vm349, %v460, %v400
        %v464 = vsel %vm352, %v462, %v413
        %v467 = vsel %vm345, %v423, %v428
        %v469 = vsel %vm349, %v467, %v440
        %v471 = vsel %vm352, %v469, %v446
        %v472 = vshrl.u32 %v464, 16
        %v474 = vshll.u32 %v464, 16
        %v476 = vrot.slane %v474, 1
        %v477 = vor.u32 %v472, %v476
        %v478 = vshrl.u32 %v471, 16
        %v480 = vshll.u32 %v471, 16
        %v482 = vrot.slane %v480, 1
        %v483 = vor.u32 %v478, %v482
        %v485 = vshrl.u32 %v457, 16
        %v487 = vshll.u32 %v457, 16
        %v489 = vrot.slane %v487, 1
        %v490 = vor.u32 %v485, %v489
        %v493 = vld [vmem:[%s1] sm:$0xf]
        %v494 = vld [vmem:[%s1 + $0x4] sm:$0xf]
        %v495 = vld [vmem:[%s1 + $0x8] sm:$0xf]
        %v496 = vld [vmem:[%s1 + $0xc] sm:$0xf]
        %v497 = vld [vmem:[%s1 + $0x10] sm:$0xf]
        %v498 = vld [vmem:[%s1 + $0x14] sm:$0xf]
        %v499 = vld [vmem:[%s1 + $0x18] sm:$0xf]
        %v500 = vld [vmem:[%s1 + $0x1c] sm:$0xf]
        %v501 = vld [vmem:[%s1 + $0x20] sm:$0xf]
        %v502 = vld [vmem:[%s1 + $0x24] sm:$0xf]
        %v503 = vld [vmem:[%s1 + $0x28] sm:$0xf]
        %v504 = vld [vmem:[%s1 + $0x2c] sm:$0xf]
        %v505 = vld [vmem:[%s1 + $0x30] sm:$0xf]
        %v506 = vld [vmem:[%s1 + $0x34] sm:$0xf]
        %v507 = vld [vmem:[%s1 + $0x38] sm:$0xf]
        %v508 = vld [vmem:[%s1 + $0x3c] sm:$0xf]
        %v509 = vld [vmem:[%s1 + $0x40] sm:$0xf]
        %v510 = vld [vmem:[%s1 + $0x44] sm:$0xf]
        %v511 = vld [vmem:[%s1 + $0x48] sm:$0xf]
        %v512 = vld [vmem:[%s1 + $0x4c] sm:$0xf]
        %v513 = vld [vmem:[%s1 + $0x50] sm:$0xf]
        %v514 = vld [vmem:[%s1 + $0x54] sm:$0xf]
        %v515 = vld [vmem:[%s1 + $0x58] sm:$0xf]
        %v516 = vld [vmem:[%s1 + $0x5c] sm:$0xf]
        %v517 = vld [vmem:[%s1 + $0x60] sm:$0xf]
        %v518 = vld [vmem:[%s1 + $0x64] sm:$0xf]
        %v519 = vld [vmem:[%s1 + $0x68] sm:$0xf]
        %v520 = vld [vmem:[%s1 + $0x6c] sm:$0xf]
        %v521 = vld [vmem:[%s1 + $0x70] sm:$0xf]
        %v522 = vld [vmem:[%s1 + $0x74] sm:$0xf]
        %v523 = vld [vmem:[%s1 + $0x78] sm:$0xf]
        %v524 = vld [vmem:[%s1 + $0x7c] sm:$0xf]
        %v525 = vld [vmem:[%s1 + $0x80] sm:$0xf]
        %v526 = vld [vmem:[%s1 + $0x84] sm:$0xf]
        %v527 = vld [vmem:[%s1 + $0x88] sm:$0xf]
        %v528 = vld [vmem:[%s1 + $0x8c] sm:$0xf]
        %v529 = vld [vmem:[%s1 + $0x90] sm:$0xf]
        %v530 = vld [vmem:[%s1 + $0x94] sm:$0xf]
        %v531 = vld [vmem:[%s1 + $0x98] sm:$0xf]
        %v532 = vld [vmem:[%s1 + $0x9c] sm:$0xf]
        %v533 = vld [vmem:[%s1 + $0xa0] sm:$0xf]
        %v534 = vld [vmem:[%s1 + $0xa4] sm:$0xf]
        %v535 = vld [vmem:[%s1 + $0xa8] sm:$0xf]
        %v536 = vld [vmem:[%s1 + $0xac] sm:$0xf]
        %v537 = vld [vmem:[%s1 + $0xb0] sm:$0xf]
        %v538 = vld [vmem:[%s1 + $0xb4] sm:$0xf]
        %v539 = vld [vmem:[%s1 + $0xb8] sm:$0xf]
        %v540 = vld [vmem:[%s1 + $0xbc] sm:$0xf]
        %v541 = vld [vmem:[%s1 + $0xc0] sm:$0xf]
        %v542 = vld [vmem:[%s1 + $0xc4] sm:$0xf]
        %v543 = vld [vmem:[%s1 + $0xc8] sm:$0xf]
        %v544 = vld [vmem:[%s1 + $0xcc] sm:$0xf]
        %v545 = vld [vmem:[%s1 + $0xd0] sm:$0xf]
        %v546 = vld [vmem:[%s1 + $0xd4] sm:$0xf]
        %v547 = vld [vmem:[%s1 + $0xd8] sm:$0xf]
        %v548 = vld [vmem:[%s1 + $0xdc] sm:$0xf]
        %v549 = vld [vmem:[%s1 + $0xe0] sm:$0xf]
        %v550 = vld [vmem:[%s1 + $0xe4] sm:$0xf]
        %v551 = vld [vmem:[%s1 + $0xe8] sm:$0xf]
        %v552 = vld [vmem:[%s1 + $0xec] sm:$0xf]
        %v553 = vld [vmem:[%s1 + $0xf0] sm:$0xf]
        %v554 = vld [vmem:[%s1 + $0xf4] sm:$0xf]
        %v555 = vld [vmem:[%s1 + $0xf8] sm:$0xf]
        %v556 = vld [vmem:[%s1 + $0xfc] sm:$0xf]
        %v557 = vld [vmem:[%s1 + $0x100] sm:$0xf]
        %v558 = vld [vmem:[%s1 + $0x104] sm:$0xf]
        %v559 = vld [vmem:[%s1 + $0x108] sm:$0xf]
        %v560 = vld [vmem:[%s1 + $0x10c] sm:$0xf]
        %v561 = vld [vmem:[%s1 + $0x110] sm:$0xf]
        %v562 = vld [vmem:[%s1 + $0x114] sm:$0xf]
        %v563 = vld [vmem:[%s1 + $0x118] sm:$0xf]
        %v564 = vld [vmem:[%s1 + $0x11c] sm:$0xf]
        %v565 = vld [vmem:[%s1 + $0x120] sm:$0xf]
        %v566 = vld [vmem:[%s1 + $0x124] sm:$0xf]
        %v567 = vld [vmem:[%s1 + $0x128] sm:$0xf]
        %v568 = vld [vmem:[%s1 + $0x12c] sm:$0xf]
        %v569 = vld [vmem:[%s1 + $0x130] sm:$0xf]
        %v570 = vld [vmem:[%s1 + $0x134] sm:$0xf]
        %v571 = vld [vmem:[%s1 + $0x138] sm:$0xf]
        %v572 = vld [vmem:[%s1 + $0x13c] sm:$0xf]
        %v573 = vld [vmem:[%s1 + $0x140] sm:$0xf]
        %v574 = vld [vmem:[%s1 + $0x144] sm:$0xf]
        %v575 = vld [vmem:[%s1 + $0x148] sm:$0xf]
        %v576 = vld [vmem:[%s1 + $0x14c] sm:$0xf]
        %v577 = vld [vmem:[%s1 + $0x150] sm:$0xf]
        %v578 = vld [vmem:[%s1 + $0x154] sm:$0xf]
        %v579 = vld [vmem:[%s1 + $0x158] sm:$0xf]
        %v580 = vld [vmem:[%s1 + $0x15c] sm:$0xf]
        %v581 = vld [vmem:[%s1 + $0x160] sm:$0xf]
        %v582 = vld [vmem:[%s1 + $0x164] sm:$0xf]
        %v583 = vld [vmem:[%s1 + $0x168] sm:$0xf]
        %v584 = vld [vmem:[%s1 + $0x16c] sm:$0xf]
        %v585 = vld [vmem:[%s1 + $0x170] sm:$0xf]
        %v586 = vld [vmem:[%s1 + $0x174] sm:$0xf]
        %v587 = vld [vmem:[%s1 + $0x178] sm:$0xf]
        %v588 = vld [vmem:[%s1 + $0x17c] sm:$0xf]
        %v589 = vld [vmem:[%s1 + $0x180] sm:$0xf]
        %v590 = vld [vmem:[%s1 + $0x184] sm:$0xf]
        %v591 = vld [vmem:[%s1 + $0x188] sm:$0xf]
        %v592 = vld [vmem:[%s1 + $0x18c] sm:$0xf]
        %v693 = vunpack.c.l.b16 %v493
        %v694 = vunpack.c.l.b16 %v494
        %v695 = vunpack.c.l.b16 %v495
        %v696 = vunpack.c.l.b16 %v496
        %v697 = vunpack.c.l.b16 %v497
        %v698 = vunpack.c.l.b16 %v498
        %v699 = vunpack.c.l.b16 %v499
        %v700 = vunpack.c.l.b16 %v500
        %v701 = vunpack.c.l.b16 %v501
        %v702 = vunpack.c.l.b16 %v502
        %v703 = vunpack.c.l.b16 %v503
        %v704 = vunpack.c.l.b16 %v504
        %v705 = vunpack.c.l.b16 %v505
        %v706 = vunpack.c.l.b16 %v506
        %v707 = vunpack.c.l.b16 %v507
        %v708 = vunpack.c.l.b16 %v508
        %v709 = vunpack.c.l.b16 %v509
        %v710 = vunpack.c.l.b16 %v510
        %v711 = vunpack.c.l.b16 %v511
        %v712 = vunpack.c.l.b16 %v512
        %v713 = vunpack.c.l.b16 %v513
        %v714 = vunpack.c.l.b16 %v514
        %v715 = vunpack.c.l.b16 %v515
        %v716 = vunpack.c.l.b16 %v516
        %v717 = vunpack.c.l.b16 %v517
        %v718 = vunpack.c.l.b16 %v518
        %v719 = vunpack.c.l.b16 %v519
        %v720 = vunpack.c.l.b16 %v520
        %v721 = vunpack.c.l.b16 %v521
        %v722 = vunpack.c.l.b16 %v522
        %v723 = vunpack.c.l.b16 %v523
        %v724 = vunpack.c.l.b16 %v524
        %v725 = vunpack.c.l.b16 %v525
        %v726 = vunpack.c.l.b16 %v526
        %v727 = vunpack.c.l.b16 %v527
        %v728 = vunpack.c.l.b16 %v528
        %v729 = vunpack.c.l.b16 %v529
        %v730 = vunpack.c.l.b16 %v530
        %v731 = vunpack.c.l.b16 %v531
        %v732 = vunpack.c.l.b16 %v532
        %v733 = vunpack.c.l.b16 %v533
        %v734 = vunpack.c.l.b16 %v534
        %v735 = vunpack.c.l.b16 %v535
        %v736 = vunpack.c.l.b16 %v536
        %v737 = vunpack.c.l.b16 %v537
        %v738 = vunpack.c.l.b16 %v538
        %v739 = vunpack.c.l.b16 %v539
        %v740 = vunpack.c.l.b16 %v540
        %v741 = vunpack.c.l.b16 %v541
        %v742 = vunpack.c.l.b16 %v542
        %v743 = vunpack.c.l.b16 %v543
        %v744 = vunpack.c.l.b16 %v544
        %v745 = vunpack.c.l.b16 %v545
        %v746 = vunpack.c.l.b16 %v546
        %v747 = vunpack.c.l.b16 %v547
        %v748 = vunpack.c.l.b16 %v548
        %v749 = vunpack.c.l.b16 %v549
        %v750 = vunpack.c.l.b16 %v550
        %v751 = vunpack.c.l.b16 %v551
        %v752 = vunpack.c.l.b16 %v552
        %v753 = vunpack.c.l.b16 %v553
        %v754 = vunpack.c.l.b16 %v554
        %v755 = vunpack.c.l.b16 %v555
        %v756 = vunpack.c.l.b16 %v556
        %v757 = vunpack.c.l.b16 %v557
        %v758 = vunpack.c.l.b16 %v558
        %v759 = vunpack.c.l.b16 %v559
        %v760 = vunpack.c.l.b16 %v560
        %v761 = vunpack.c.l.b16 %v561
        %v762 = vunpack.c.l.b16 %v562
        %v763 = vunpack.c.l.b16 %v563
        %v764 = vunpack.c.l.b16 %v564
        %v765 = vunpack.c.l.b16 %v565
        %v766 = vunpack.c.l.b16 %v566
        %v767 = vunpack.c.l.b16 %v567
        %v768 = vunpack.c.l.b16 %v568
        %v769 = vunpack.c.l.b16 %v569
        %v770 = vunpack.c.l.b16 %v570
        %v771 = vunpack.c.l.b16 %v571
        %v772 = vunpack.c.l.b16 %v572
        %v773 = vunpack.c.l.b16 %v573
        %v774 = vunpack.c.l.b16 %v574
        %v775 = vunpack.c.l.b16 %v575
        %v776 = vunpack.c.l.b16 %v576
        %v777 = vunpack.c.l.b16 %v577
        %v778 = vunpack.c.l.b16 %v578
        %v779 = vunpack.c.l.b16 %v579
        %v780 = vunpack.c.l.b16 %v580
        %v781 = vunpack.c.l.b16 %v581
        %v782 = vunpack.c.l.b16 %v582
        %v783 = vunpack.c.l.b16 %v583
        %v784 = vunpack.c.l.b16 %v584
        %v785 = vunpack.c.l.b16 %v585
        %v786 = vunpack.c.l.b16 %v586
        %v787 = vunpack.c.l.b16 %v587
        %v788 = vunpack.c.l.b16 %v588
        %v789 = vunpack.c.l.b16 %v589
        %v790 = vunpack.c.l.b16 %v590
        %v791 = vunpack.c.l.b16 %v591
        %v792 = vunpack.c.l.b16 %v592
        %v793 = vpack.c.b16 %v694, %v693
        %v794 = vpack.c.b16 %v696, %v695
        %v795 = vpack.c.b16 %v698, %v697
        %v796 = vpack.c.b16 %v700, %v699
        %v797 = vpack.c.b16 %v702, %v701
        %v798 = vpack.c.b16 %v704, %v703
        %v799 = vpack.c.b16 %v706, %v705
        %v800 = vpack.c.b16 %v708, %v707
        %v801 = vpack.c.b16 %v710, %v709
        %v802 = vpack.c.b16 %v712, %v711
        %v803 = vpack.c.b16 %v714, %v713
        %v804 = vpack.c.b16 %v716, %v715
        %v805 = vpack.c.b16 %v718, %v717
        %v806 = vpack.c.b16 %v720, %v719
        %v807 = vpack.c.b16 %v722, %v721
        %v808 = vpack.c.b16 %v724, %v723
        %v809 = vpack.c.b16 %v726, %v725
        %v810 = vpack.c.b16 %v728, %v727
        %v811 = vpack.c.b16 %v730, %v729
        %v812 = vpack.c.b16 %v732, %v731
        %v813 = vpack.c.b16 %v734, %v733
        %v814 = vpack.c.b16 %v736, %v735
        %v815 = vpack.c.b16 %v738, %v737
        %v816 = vpack.c.b16 %v740, %v739
        %v817 = vpack.c.b16 %v742, %v741
        %v818 = vpack.c.b16 %v744, %v743
        %v819 = vpack.c.b16 %v746, %v745
        %v820 = vpack.c.b16 %v748, %v747
        %v821 = vpack.c.b16 %v750, %v749
        %v822 = vpack.c.b16 %v752, %v751
        %v823 = vpack.c.b16 %v754, %v753
        %v824 = vpack.c.b16 %v756, %v755
        %v825 = vpack.c.b16 %v758, %v757
        %v826 = vpack.c.b16 %v760, %v759
        %v827 = vpack.c.b16 %v762, %v761
        %v828 = vpack.c.b16 %v764, %v763
        %v829 = vpack.c.b16 %v766, %v765
        %v830 = vpack.c.b16 %v768, %v767
        %v831 = vpack.c.b16 %v770, %v769
        %v832 = vpack.c.b16 %v772, %v771
        %v833 = vpack.c.b16 %v774, %v773
        %v834 = vpack.c.b16 %v776, %v775
        %v835 = vpack.c.b16 %v778, %v777
        %v836 = vpack.c.b16 %v780, %v779
        %v837 = vpack.c.b16 %v782, %v781
        %v838 = vpack.c.b16 %v784, %v783
        %v839 = vpack.c.b16 %v786, %v785
        %v840 = vpack.c.b16 %v788, %v787
        %v841 = vpack.c.b16 %v790, %v789
        %v842 = vpack.c.b16 %v792, %v791
        %v894 = vsel %vm345, %v490, 0
        %896 = vmatprep.subr.bf16.mxu0 0
        %897 = vmatpush1.bf16.msra.mxu0 %v800
        %898 = vmatprep.subr.bf16.mxu0 0
        %899 = vmatpush1.bf16.msra.mxu0 %v799
        %900 = vmatprep.subr.bf16.mxu0 0
        %901 = vmatpush1.bf16.msra.mxu0 %v798
        %902 = vmatprep.subr.bf16.mxu0 0
        %903 = vmatpush1.bf16.msra.mxu0 %v797
        %904 = vmatprep.subr.bf16.mxu0 0
        %905 = vmatpush1.bf16.msra.mxu0 %v796
        %906 = vmatprep.subr.bf16.mxu0 0
        %907 = vmatpush1.bf16.msra.mxu0 %v795
        %908 = vmatprep.subr.bf16.mxu0 0
        %909 = vmatpush1.bf16.msra.mxu0 %v794
        %910 = vmatprep.subr.bf16.mxu0 0
        %911 = vmatpush1.bf16.msra.mxu0 %v793
        %912 = vmatprep.subr.bf16.mxu0 0
        %913 = vmatpush2.bf16.msra.mxu0 %v808
        %914 = vmatprep.subr.bf16.mxu0 0
        %915 = vmatpush2.bf16.msra.mxu0 %v807
        %916 = vmatprep.subr.bf16.mxu0 0
        %917 = vmatpush2.bf16.msra.mxu0 %v806
        %918 = vmatprep.subr.bf16.mxu0 0
        %919 = vmatpush2.bf16.msra.mxu0 %v805
        %920 = vmatprep.subr.bf16.mxu0 0
        %921 = vmatpush2.bf16.msra.mxu0 %v804
        %922 = vmatprep.subr.bf16.mxu0 0
        %923 = vmatpush2.bf16.msra.mxu0 %v803
        %924 = vmatprep.subr.bf16.mxu0 0
        %925 = vmatpush2.bf16.msra.mxu0 %v802
        %926 = vmatprep.subr.bf16.mxu0 0
        %927 = vmatpush2.bf16.msra.mxu0 %v801
        %928 = vmatprep.mubr.bf16.mxu0 %v362
        %929 = vmatmul.mubr.bf16.gmra.mxu0 %v354
        %v930 = vpop.f32.mrf.mxu0
        %v931 = vadd.f32 0.0, %v930
        %v932 = vpop.f32.mrf.mxu0
        %v933 = vpop.f32.mrf.mxu0
        %v934 = vpop.f32.mrf.mxu0
        %935 = vdwg.mxu0
        %936 = vmatprep.subr.bf16.mxu0 0
        %937 = vmatpush1.bf16.msra.mxu0 %v816
        %938 = vmatprep.subr.bf16.mxu0 0
        %939 = vmatpush1.bf16.msra.mxu0 %v815
        %940 = vmatprep.subr.bf16.mxu0 0
        %941 = vmatpush1.bf16.msra.mxu0 %v814
        %942 = vmatprep.subr.bf16.mxu0 0
        %943 = vmatpush1.bf16.msra.mxu0 %v813
        %944 = vmatprep.subr.bf16.mxu0 0
        %945 = vmatpush1.bf16.msra.mxu0 %v812
        %946 = vmatprep.subr.bf16.mxu0 0
        %947 = vmatpush1.bf16.msra.mxu0 %v811
        %948 = vmatprep.subr.bf16.mxu0 0
        %949 = vmatpush1.bf16.msra.mxu0 %v810
        %950 = vmatprep.subr.bf16.mxu0 0
        %951 = vmatpush1.bf16.msra.mxu0 %v809
        %952 = vmatprep.subr.bf16.mxu0 0
        %953 = vmatpush2.bf16.msra.mxu0 %v824
        %954 = vmatprep.subr.bf16.mxu0 0
        %955 = vmatpush2.bf16.msra.mxu0 %v823
        %956 = vmatprep.subr.bf16.mxu0 0
        %957 = vmatpush2.bf16.msra.mxu0 %v822
        %958 = vmatprep.subr.bf16.mxu0 0
        %959 = vmatpush2.bf16.msra.mxu0 %v821
        %960 = vmatprep.subr.bf16.mxu0 0
        %961 = vmatpush2.bf16.msra.mxu0 %v820
        %962 = vmatprep.subr.bf16.mxu0 0
        %963 = vmatpush2.bf16.msra.mxu0 %v819
        %964 = vmatprep.subr.bf16.mxu0 0
        %965 = vmatpush2.bf16.msra.mxu0 %v818
        %966 = vmatprep.subr.bf16.mxu0 0
        %967 = vmatpush2.bf16.msra.mxu0 %v817
        %968 = vmatprep.mubr.bf16.mxu0 %v378
        %969 = vmatmul.mubr.bf16.gmra.mxu0 %v370
        %v970 = vpop.f32.mrf.mxu0
        %v971 = vadd.f32 %v931, %v970
        %v972 = vpop.f32.mrf.mxu0
        %v973 = vpop.f32.mrf.mxu0
        %v974 = vpop.f32.mrf.mxu0
        %975 = vdwg.mxu0
        %976 = vmatprep.subr.bf16.mxu0 0
        %977 = vmatpush1.bf16.msra.mxu0 %v832
        %978 = vmatprep.subr.bf16.mxu0 0
        %979 = vmatpush1.bf16.msra.mxu0 %v831
        %980 = vmatprep.subr.bf16.mxu0 0
        %981 = vmatpush1.bf16.msra.mxu0 %v830
        %982 = vmatprep.subr.bf16.mxu0 0
        %983 = vmatpush1.bf16.msra.mxu0 %v829
        %984 = vmatprep.subr.bf16.mxu0 0
        %985 = vmatpush1.bf16.msra.mxu0 %v828
        %986 = vmatprep.subr.bf16.mxu0 0
        %987 = vmatpush1.bf16.msra.mxu0 %v827
        %988 = vmatprep.subr.bf16.mxu0 0
        %989 = vmatpush1.bf16.msra.mxu0 %v826
        %990 = vmatprep.subr.bf16.mxu0 0
        %991 = vmatpush1.bf16.msra.mxu0 %v825
        %992 = vmatprep.subr.bf16.mxu0 0
        %993 = vmatpush2.bf16.msra.mxu0 %v840
        %994 = vmatprep.subr.bf16.mxu0 0
        %995 = vmatpush2.bf16.msra.mxu0 %v839
        %996 = vmatprep.subr.bf16.mxu0 0
        %997 = vmatpush2.bf16.msra.mxu0 %v838
        %998 = vmatprep.subr.bf16.mxu0 0
        %999 = vmatpush2.bf16.msra.mxu0 %v837
        %1000 = vmatprep.subr.bf16.mxu0 0
        %1001 = vmatpush2.bf16.msra.mxu0 %v836
        %1002 = vmatprep.subr.bf16.mxu0 0
        %1003 = vmatpush2.bf16.msra.mxu0 %v835
        %1004 = vmatprep.subr.bf16.mxu0 0
        %1005 = vmatpush2.bf16.msra.mxu0 %v834
        %1006 = vmatprep.subr.bf16.mxu0 0
        %1007 = vmatpush2.bf16.msra.mxu0 %v833
        %1008 = vmatprep.mubr.bf16.mxu0 %v483
        %1009 = vmatmul.mubr.bf16.gmra.mxu0 %v477
        %v1010 = vpop.f32.mrf.mxu0
        %v1011 = vadd.f32 %v971, %v1010
        %v1012 = vpop.f32.mrf.mxu0
        %v1013 = vpop.f32.mrf.mxu0
        %v1014 = vpop.f32.mrf.mxu0
        %1015 = vdwg.mxu0
        %1016 = vmatprep.subr.bf16.mxu0 0
        %1017 = vmatpush1.bf16.msra.mxu0 0
        %1018 = vmatprep.subr.bf16.mxu0 0
        %1019 = vmatpush1.bf16.msra.mxu0 0
        %1020 = vmatprep.subr.bf16.mxu0 0
        %1021 = vmatpush1.bf16.msra.mxu0 0
        %1022 = vmatprep.subr.bf16.mxu0 0
        %1023 = vmatpush1.bf16.msra.mxu0 0
        %1024 = vmatprep.subr.bf16.mxu0 0
        %1025 = vmatpush1.bf16.msra.mxu0 0
        %1026 = vmatprep.subr.bf16.mxu0 0
        %1027 = vmatpush1.bf16.msra.mxu0 0
        %1028 = vmatprep.subr.bf16.mxu0 0
        %1029 = vmatpush1.bf16.msra.mxu0 %v842
        %1030 = vmatprep.subr.bf16.mxu0 0
        %1031 = vmatpush1.bf16.msra.mxu0 %v841
        %1032 = vmatprep.subr.bf16.mxu0 0
        %1033 = vmatpush2.bf16.msra.mxu0 0
        %1034 = vmatprep.subr.bf16.mxu0 0
        %1035 = vmatpush2.bf16.msra.mxu0 0
        %1036 = vmatprep.subr.bf16.mxu0 0
        %1037 = vmatpush2.bf16.msra.mxu0 0
        %1038 = vmatprep.subr.bf16.mxu0 0
        %1039 = vmatpush2.bf16.msra.mxu0 0
        %1040 = vmatprep.subr.bf16.mxu0 0
        %1041 = vmatpush2.bf16.msra.mxu0 0
        %1042 = vmatprep.subr.bf16.mxu0 0
        %1043 = vmatpush2.bf16.msra.mxu0 0
        %1044 = vmatprep.subr.bf16.mxu0 0
        %1045 = vmatpush2.bf16.msra.mxu0 0
        %1046 = vmatprep.subr.bf16.mxu0 0
        %1047 = vmatpush2.bf16.msra.mxu0 0
        %1048 = vmatprep.mubr.bf16.mxu0 0
        %1049 = vmatmul.mubr.bf16.gmra.mxu0 %v894
        %v1050 = vpop.f32.mrf.mxu0
        %v1051 = vadd.f32 %v1011, %v1050
        %v1052 = vpop.f32.mrf.mxu0
        %v1053 = vpop.f32.mrf.mxu0
        %v1054 = vpop.f32.mrf.mxu0
        %1055 = vdwg.mxu0
        %s1056 = sadd.s32 %s178, 5
        %s1057 = smul.u32 %s1056, 2
        %s1058 = smul.addr %s1057, 4
        %s1059 = scalar_lea.vmem %s165, %s1058
        %v1060 = vld [vmem:[%s1059] sm:$0xf]
        %v1061 = vld [vmem:[%s1059 + $0x4] sm:$0x1]
        %v1062 = vld [vmem:[%s1059] sm:$0xe]
        %v1063 = vld [vmem:[%s1059 + $0x4] sm:$0x3]
        %v1064 = vld [vmem:[%s1059] sm:$0xc]
        %1065 = vrot.lane.b32.xlu0 %v274, 32
        %v1066 = vpop.permute.xlu0 %1065
        %1067 = vrot.lane.b32.xlu0 %v280, 64
        %v1068 = vpop.permute.xlu0 %1067
        %1069 = vrot.lane.b32.xlu0 %v293, 96
        %v1070 = vpop.permute.xlu0 %1069
        %1071 = vrot.lane.b32.xlu0 %v302, 32
        %v1072 = vpop.permute.xlu0 %1071
        %1073 = vrot.lane.b32.xlu0 %v314, 64
        %v1074 = vpop.permute.xlu0 %1073
        %1075 = vrot.lane.b32.xlu0 %v320, 96
        %v1076 = vpop.permute.xlu0 %1075
        %1077 = vrot.lane.b32.xlu0 %v337, 32
        %v1078 = vpop.permute.xlu0 %1077
        %1079 = vrot.lane.b32.xlu0 %v342, 64
        %v1080 = vpop.permute.xlu0 %1079
        %v1081 = vshrl.u32 %v382, 16
        %v1083 = vshll.u32 %v382, 16
        %v1085 = vrot.slane %v1083, 1
        %v1086 = vor.u32 %v1081, %v1085
        %1087 = vrot.lane.b32.xlu0 %v1086, 96
        %v1088 = vpop.permute.xlu0 %1087
        %v1089 = vrot.slane %v385, 1
        %v1091 = vshrl.u32 %v397, 16
        %v1093 = vrot.slane %v1091, 1
        %v1094 = vshll.u32 %v397, 16
        %v1096 = vrot.slane %v1094, 2
        %v1097 = vor.u32 %v1093, %v1096
        %1098 = vrot.lane.b32.xlu0 %v1097, 32
        %v1099 = vpop.permute.xlu0 %1098
        %v1100 = vrot.slane %v403, 2
        %1101 = vrot.lane.b32.xlu0 %v1100, 64
        %v1102 = vpop.permute.xlu0 %1101
        %1103 = vrot.lane.b32.xlu0 %v416, 96
        %v1104 = vpop.permute.xlu0 %1103
        %v1107 = vsel %vm345, %v191, %v1066
        %v1109 = vsel %vm349, %v1107, %v1068
        %v1111 = vsel %vm352, %v1109, %v1070
        %v1115 = vsel %vm345, %v297, %v1072
        %v1117 = vsel %vm349, %v1115, %v1074
        %v1119 = vsel %vm352, %v1117, %v1076
        %v1123 = vsel %vm345, %v331, %v1078
        %v1125 = vsel %vm349, %v1123, %v1080
        %v1127 = vsel %vm352, %v1125, %v1088
        %v1131 = vsel %vm345, %v1089, %v1099
        %v1133 = vsel %vm349, %v1131, %v1102
        %v1135 = vsel %vm352, %v1133, %v1104
        %1137 = vrot.lane.b32.xlu0 %v438, 32
        %v1138 = vpop.permute.xlu0 %1137
        %1139 = vrot.lane.b32.xlu0 %v444, 64
        %v1140 = vpop.permute.xlu0 %1139
        %1141 = vrot.lane.b32.xlu0 %v457, 96
        %v1142 = vpop.permute.xlu0 %1141
        %v1144 = vunpack.c.l.b16 %v1060
        %v1145 = vpack.c.b16 %v1144, %v1144
        %v1147 = vshrl.u32 %v1145, 16
        %v1149 = vrot.slane %v1147, 7
        %v1150 = vshll.u32 %v1145, 16
        %v1152 = vor.u32 %v1149, %v1150
        %v1154 = vunpack.c.l.b16 %v1061
        %v1155 = vpack.c.b16 %v1154, %v1144
        %1156 = vrot.lane.b32.xlu0 %v1155, 32
        %v1157 = vpop.permute.xlu0 %1156
        %v1159 = vunpack.c.l.b16 %v1062
        %v1160 = vpack.c.b16 %v1154, %v1159
        %v1162 = vshrl.u32 %v1160, 16
        %v1164 = vshll.u32 %v1160, 16
        %v1166 = vrot.slane %v1164, 1
        %v1167 = vor.u32 %v1162, %v1166
        %1168 = vrot.lane.b32.xlu0 %v1167, 64
        %v1169 = vpop.permute.xlu0 %1168
        %v1171 = vunpack.c.l.b16 %v1063
        %v1172 = vpack.c.b16 %v1171, %v1159
        %v1173 = vrot.slane %v1172, 1
        %1174 = vrot.lane.b32.xlu0 %v1173, 96
        %v1175 = vpop.permute.xlu0 %1174
        %v1177 = vunpack.c.l.b16 %v1064
        %v1178 = vpack.c.b16 %v1171, %v1177
        %v1180 = vshrl.u32 %v1178, 16
        %v1182 = vrot.slane %v1180, 1
        %v1183 = vshll.u32 %v1178, 16
        %v1185 = vrot.slane %v1183, 2
        %v1186 = vor.u32 %v1182, %v1185
        %v1189 = vsel %vm345, %v426, %v1138
        %v1191 = vsel %vm349, %v1189, %v1140
        %v1193 = vsel %vm352, %v1191, %v1142
        %v1196 = vsel %vm345, %v1152, %v1157
        %v1198 = vsel %vm349, %v1196, %v1169
        %v1200 = vsel %vm352, %v1198, %v1175
        %v1201 = vshrl.u32 %v1193, 16
        %v1203 = vshll.u32 %v1193, 16
        %v1205 = vrot.slane %v1203, 1
        %v1206 = vor.u32 %v1201, %v1205
        %v1207 = vshrl.u32 %v1200, 16
        %v1209 = vshll.u32 %v1200, 16
        %v1211 = vrot.slane %v1209, 1
        %v1212 = vor.u32 %v1207, %v1211
        %v1214 = vshrl.u32 %v1186, 16
        %v1216 = vshll.u32 %v1186, 16
        %v1218 = vrot.slane %v1216, 1
        %v1219 = vor.u32 %v1214, %v1218
        %v1223 = vsel %vm345, %v1219, 0
        %1225 = vmatprep.subr.bf16.mxu0 0
        %1226 = vmatpush1.bf16.msra.mxu0 %v800
        %1227 = vmatprep.subr.bf16.mxu0 0
        %1228 = vmatpush1.bf16.msra.mxu0 %v799
        %1229 = vmatprep.subr.bf16.mxu0 0
        %1230 = vmatpush1.bf16.msra.mxu0 %v798
        %1231 = vmatprep.subr.bf16.mxu0 0
        %1232 = vmatpush1.bf16.msra.mxu0 %v797
        %1233 = vmatprep.subr.bf16.mxu0 0
        %1234 = vmatpush1.bf16.msra.mxu0 %v796
        %1235 = vmatprep.subr.bf16.mxu0 0
        %1236 = vmatpush1.bf16.msra.mxu0 %v795
        %1237 = vmatprep.subr.bf16.mxu0 0
        %1238 = vmatpush1.bf16.msra.mxu0 %v794
        %1239 = vmatprep.subr.bf16.mxu0 0
        %1240 = vmatpush1.bf16.msra.mxu0 %v793
        %1241 = vmatprep.subr.bf16.mxu0 0
        %1242 = vmatpush2.bf16.msra.mxu0 %v808
        %1243 = vmatprep.subr.bf16.mxu0 0
        %1244 = vmatpush2.bf16.msra.mxu0 %v807
        %1245 = vmatprep.subr.bf16.mxu0 0
        %1246 = vmatpush2.bf16.msra.mxu0 %v806
        %1247 = vmatprep.subr.bf16.mxu0 0
        %1248 = vmatpush2.bf16.msra.mxu0 %v805
        %1249 = vmatprep.subr.bf16.mxu0 0
        %1250 = vmatpush2.bf16.msra.mxu0 %v804
        %1251 = vmatprep.subr.bf16.mxu0 0
        %1252 = vmatpush2.bf16.msra.mxu0 %v803
        %1253 = vmatprep.subr.bf16.mxu0 0
        %1254 = vmatpush2.bf16.msra.mxu0 %v802
        %1255 = vmatprep.subr.bf16.mxu0 0
        %1256 = vmatpush2.bf16.msra.mxu0 %v801
        %1257 = vmatprep.mubr.bf16.mxu0 %v1119
        %1258 = vmatmul.mubr.bf16.gmra.mxu0 %v1111
        %v1259 = vpop.f32.mrf.mxu0
        %v1260 = vadd.f32 0.0, %v1259
        %v1261 = vpop.f32.mrf.mxu0
        %v1262 = vpop.f32.mrf.mxu0
        %v1263 = vpop.f32.mrf.mxu0
        %1264 = vdwg.mxu0
        %1265 = vmatprep.subr.bf16.mxu0 0
        %1266 = vmatpush1.bf16.msra.mxu0 %v816
        %1267 = vmatprep.subr.bf16.mxu0 0
        %1268 = vmatpush1.bf16.msra.mxu0 %v815
        %1269 = vmatprep.subr.bf16.mxu0 0
        %1270 = vmatpush1.bf16.msra.mxu0 %v814
        %1271 = vmatprep.subr.bf16.mxu0 0
        %1272 = vmatpush1.bf16.msra.mxu0 %v813
        %1273 = vmatprep.subr.bf16.mxu0 0
        %1274 = vmatpush1.bf16.msra.mxu0 %v812
        %1275 = vmatprep.subr.bf16.mxu0 0
        %1276 = vmatpush1.bf16.msra.mxu0 %v811
        %1277 = vmatprep.subr.bf16.mxu0 0
        %1278 = vmatpush1.bf16.msra.mxu0 %v810
        %1279 = vmatprep.subr.bf16.mxu0 0
        %1280 = vmatpush1.bf16.msra.mxu0 %v809
        %1281 = vmatprep.subr.bf16.mxu0 0
        %1282 = vmatpush2.bf16.msra.mxu0 %v824
        %1283 = vmatprep.subr.bf16.mxu0 0
        %1284 = vmatpush2.bf16.msra.mxu0 %v823
        %1285 = vmatprep.subr.bf16.mxu0 0
        %1286 = vmatpush2.bf16.msra.mxu0 %v822
        %1287 = vmatprep.subr.bf16.mxu0 0
        %1288 = vmatpush2.bf16.msra.mxu0 %v821
        %1289 = vmatprep.subr.bf16.mxu0 0
        %1290 = vmatpush2.bf16.msra.mxu0 %v820
        %1291 = vmatprep.subr.bf16.mxu0 0
        %1292 = vmatpush2.bf16.msra.mxu0 %v819
        %1293 = vmatprep.subr.bf16.mxu0 0
        %1294 = vmatpush2.bf16.msra.mxu0 %v818
        %1295 = vmatprep.subr.bf16.mxu0 0
        %1296 = vmatpush2.bf16.msra.mxu0 %v817
        %1297 = vmatprep.mubr.bf16.mxu0 %v1135
        %1298 = vmatmul.mubr.bf16.gmra.mxu0 %v1127
        %v1299 = vpop.f32.mrf.mxu0
        %v1300 = vadd.f32 %v1260, %v1299
        %v1301 = vpop.f32.mrf.mxu0
        %v1302 = vpop.f32.mrf.mxu0
        %v1303 = vpop.f32.mrf.mxu0
        %1304 = vdwg.mxu0
        %1305 = vmatprep.subr.bf16.mxu0 0
        %1306 = vmatpush1.bf16.msra.mxu0 %v832
        %1307 = vmatprep.subr.bf16.mxu0 0
        %1308 = vmatpush1.bf16.msra.mxu0 %v831
        %1309 = vmatprep.subr.bf16.mxu0 0
        %1310 = vmatpush1.bf16.msra.mxu0 %v830
        %1311 = vmatprep.subr.bf16.mxu0 0
        %1312 = vmatpush1.bf16.msra.mxu0 %v829
        %1313 = vmatprep.subr.bf16.mxu0 0
        %1314 = vmatpush1.bf16.msra.mxu0 %v828
        %1315 = vmatprep.subr.bf16.mxu0 0
        %1316 = vmatpush1.bf16.msra.mxu0 %v827
        %1317 = vmatprep.subr.bf16.mxu0 0
        %1318 = vmatpush1.bf16.msra.mxu0 %v826
        %1319 = vmatprep.subr.bf16.mxu0 0
        %1320 = vmatpush1.bf16.msra.mxu0 %v825
        %1321 = vmatprep.subr.bf16.mxu0 0
        %1322 = vmatpush2.bf16.msra.mxu0 %v840
        %1323 = vmatprep.subr.bf16.mxu0 0
        %1324 = vmatpush2.bf16.msra.mxu0 %v839
        %1325 = vmatprep.subr.bf16.mxu0 0
        %1326 = vmatpush2.bf16.msra.mxu0 %v838
        %1327 = vmatprep.subr.bf16.mxu0 0
        %1328 = vmatpush2.bf16.msra.mxu0 %v837
        %1329 = vmatprep.subr.bf16.mxu0 0
        %1330 = vmatpush2.bf16.msra.mxu0 %v836
        %1331 = vmatprep.subr.bf16.mxu0 0
        %1332 = vmatpush2.bf16.msra.mxu0 %v835
        %1333 = vmatprep.subr.bf16.mxu0 0
        %1334 = vmatpush2.bf16.msra.mxu0 %v834
        %1335 = vmatprep.subr.bf16.mxu0 0
        %1336 = vmatpush2.bf16.msra.mxu0 %v833
        %1337 = vmatprep.mubr.bf16.mxu0 %v1212
        %1338 = vmatmul.mubr.bf16.gmra.mxu0 %v1206
        %v1339 = vpop.f32.mrf.mxu0
        %v1340 = vadd.f32 %v1300, %v1339
        %v1341 = vpop.f32.mrf.mxu0
        %v1342 = vpop.f32.mrf.mxu0
        %v1343 = vpop.f32.mrf.mxu0
        %1344 = vdwg.mxu0
        %1345 = vmatprep.subr.bf16.mxu0 0
        %1346 = vmatpush1.bf16.msra.mxu0 0
        %1347 = vmatprep.subr.bf16.mxu0 0
        %1348 = vmatpush1.bf16.msra.mxu0 0
        %1349 = vmatprep.subr.bf16.mxu0 0
        %1350 = vmatpush1.bf16.msra.mxu0 0
        %1351 = vmatprep.subr.bf16.mxu0 0
        %1352 = vmatpush1.bf16.msra.mxu0 0
        %1353 = vmatprep.subr.bf16.mxu0 0
        %1354 = vmatpush1.bf16.msra.mxu0 0
        %1355 = vmatprep.subr.bf16.mxu0 0
        %1356 = vmatpush1.bf16.msra.mxu0 0
        %1357 = vmatprep.subr.bf16.mxu0 0
        %1358 = vmatpush1.bf16.msra.mxu0 %v842
        %1359 = vmatprep.subr.bf16.mxu0 0
        %1360 = vmatpush1.bf16.msra.mxu0 %v841
        %1361 = vmatprep.subr.bf16.mxu0 0
        %1362 = vmatpush2.bf16.msra.mxu0 0
        %1363 = vmatprep.subr.bf16.mxu0 0
        %1364 = vmatpush2.bf16.msra.mxu0 0
        %1365 = vmatprep.subr.bf16.mxu0 0
        %1366 = vmatpush2.bf16.msra.mxu0 0
        %1367 = vmatprep.subr.bf16.mxu0 0
        %1368 = vmatpush2.bf16.msra.mxu0 0
        %1369 = vmatprep.subr.bf16.mxu0 0
        %1370 = vmatpush2.bf16.msra.mxu0 0
        %1371 = vmatprep.subr.bf16.mxu0 0
        %1372 = vmatpush2.bf16.msra.mxu0 0
        %1373 = vmatprep.subr.bf16.mxu0 0
        %1374 = vmatpush2.bf16.msra.mxu0 0
        %1375 = vmatprep.subr.bf16.mxu0 0
        %1376 = vmatpush2.bf16.msra.mxu0 0
        %1377 = vmatprep.mubr.bf16.mxu0 0
        %1378 = vmatmul.mubr.bf16.gmra.mxu0 %v1223
        %v1379 = vpop.f32.mrf.mxu0
        %v1380 = vadd.f32 %v1340, %v1379
        %v1381 = vpop.f32.mrf.mxu0
        %v1382 = vpop.f32.mrf.mxu0
        %v1383 = vpop.f32.mrf.mxu0
        %1384 = vdwg.mxu0
        %v1385 = vmax.f32 %v1051, %v1380
        %1386 = vst.msk [vmem:[#allocation2] sm:$0xff] %vm349, %v1385
        %v1387 = vld [vmem:[#allocation2] ss:$2 sm:$0xf]
        %s1388 = scalar_lea.vmem [#allocation2], 1
        %v1389 = vld [vmem:[%s1388] ss:$2 sm:$0xf]
        %v1390 = vmax.f32 %v1387, %v1389
        %v1391 = vld [vmem:[%s2] sm:$0x1]
        %v1393 = vlaneseq
        %v1394 = vshrl.u32 %v1393, 7
        %v1395 = vsub.s32 0, %v1394
        %v1396 = vrot.slane %v1391, %v1395
        %v1398 = vadd.f32 %v1390, %v1396
        %v1399 = vpack.c.bf16 %v1398, %v1398
        %s1400 = smul.addr %s173, 2
        %s1401 = scalar_lea.vmem %s170, %s1400
        %vm1402 = vcmask 517120
        %1403 = vst.msk [vmem:[%s1401] sm:$0x3] %vm1402, %v1399
      $region37: #{model_forward.6} parent=31 // loop_footer
        %s177 = sadd.s32 1, %s173
      $region38: #{model_forward.6} parent=31 // loop_footer_branch
        %172 = sbr.rel target = $region34
      $region39: #{model_forward.6} parent=31 // loop_exit
        _
      %p1404 = scmp.lt.s32.totalorder %s14, 1
      %s1405 = scalar_select %p1404, %s14, 1
      %s1406 = smul.addr %s1405, 4
      %s1407 = smul.addr %s1406, 2
      %s1408 = scalar_lea.vmem %s3, %s1407
      // Predicated region
      $region40: #{model_forward.6} parent=31 // pred_check
        %p1409 = pneg %p100
      $region41: #{model_forward.6} parent=31 // pred_check_branch
        %1411 = sbr.rel (%p1409) target = $region43
      $region42: #{model_forward.6} parent=31 // pred_region
        _
      $region43: #{model_forward.6} parent=31 // pred_fallthru
        _
    $region32: #{model_forward.6} parent=5 // pred_fallthru
      _
    %p1412 = scmp.le.s32.totalorder 2, %s9
    // Predicated region
    $region44: #{model_forward.6} parent=5 // pred_check
      %p1413 = pneg %p1412
    $region45: #{model_forward.6} parent=5 // pred_check_branch
      %1415 = sbr.rel (%p1413) target = $region47
    $region46: #{model_forward.6} parent=5 // pred_region
      %s1416 = ssub.s32 %s9, 2
      // Predicated region
      $region48: #{model_forward.6} parent=46 // pred_check
        %p1417 = pneg %p106
      $region49: #{model_forward.6} parent=46 // pred_check_branch
        %1419 = sbr.rel (%p1417) target = $region51
      $region50: #{model_forward.6} parent=46 // pred_region
        %p1420 = scmp.lt.s32.totalorder %s15, 1
        %s1421 = scalar_select %p1420, %s15, 1
        %s1422 = smul.addr %s1421, 4
        %s1423 = smul.addr %s1422, 2
        %s1424 = scalar_lea.vmem %s3, %s1423
      $region51: #{model_forward.6} parent=46 // pred_fallthru
        _
    $region47: #{model_forward.6} parent=5 // pred_fallthru
      _
  $region6: #{model_forward.6} parent=0 // loop_footer
    %s13 = sadd.s32 1, %s9
  $region7: #{model_forward.6} parent=0 // loop_footer_branch
    %8 = sbr.rel target = $region3
  $region8: #{model_forward.6} parent=0 // loop_exit
    _

// kernel: model_forward.7
$region0: #{model_forward.7}
  #allocation0 [shape = 'u32[]', space=smem, size = 0x4, offset = 0x4, fixed_abs, tag = 'smem constant byte address 0x4 - core index']
  #allocation1 [shape = 'u32[144,128]{1,0:T(1,128)}', space=vmem, size = 0x12000, scoped, tag = 'internal scratch']
  %s0 = inlined_call_operand.vmem [shape: bf16[2,1024], index: 0, kind: input, shape index: {}]
  %s1 = inlined_call_operand.vmem [shape: bf16[1024,64], index: 1, kind: input, shape index: {}]
  %s2 = inlined_call_operand.vmem [shape: f32[1,64], index: 2, kind: input, shape index: {}]
  %s3 = inlined_call_operand.vmem [shape: f32[64,10], index: 3, kind: input, shape index: {}]
  %s4 = inlined_call_operand.vmem [shape: f32[1,10], index: 4, kind: input, shape index: {}]
  %s5 = inlined_call_operand.hbm [shape: f32[2,10], index: 5, kind: output, shape index: {}]
  %s6 = sld [smem:[#allocation0]]
  $region30: #{model_forward.7} parent=0
    _
  %s8 = ssub.s32 1, %s6
  %s9 = scalar_select 0, %s8, %s6
  $region1: #{model_forward.7} parent=0
    #allocation2 [shape = 'u8[1024]{0}', space=vmem, size = 0x400, scoped, tag = 'output window, operand 0, single buffered']
    #allocation3 [shape = 's32[1]{0}', space=sflag, size = 0x4, scoped, tag = 'scoped memory for model_forward.7']
    %10 = vsyncpa [#allocation3], 0
    // Predicated region
    $region2: #{model_forward.7} parent=1 // pred_check
      _
    $region3: #{model_forward.7} parent=1 // pred_check_branch
      %12 = sbr.rel (0) target = $region5
    $region4: #{model_forward.7} parent=1 // pred_region
      _
    $region5: #{model_forward.7} parent=1 // pred_fallthru
      _
    // Predicated region
    $region6: #{model_forward.7} parent=1 // pred_check
      _
    $region7: #{model_forward.7} parent=1 // pred_check_branch
      %14 = sbr.rel (0) target = $region9
    $region8: #{model_forward.7} parent=1 // pred_region
      _
    $region9: #{model_forward.7} parent=1 // pred_fallthru
      _
    // Predicated region
    $region10: #{model_forward.7} parent=1 // pred_check
      _
    $region11: #{model_forward.7} parent=1 // pred_check_branch
      %16 = sbr.rel (0) target = $region13
    $region12: #{model_forward.7} parent=1 // pred_region
      _
    $region13: #{model_forward.7} parent=1 // pred_fallthru
      _
    // Predicated region
    $region14: #{model_forward.7} parent=1 // pred_check
      _
    $region15: #{model_forward.7} parent=1 // pred_check_branch
      %18 = sbr.rel (0) target = $region17
    $region16: #{model_forward.7} parent=1 // pred_region
      _
    $region17: #{model_forward.7} parent=1 // pred_fallthru
      _
    // Predicated region
    $region18: #{model_forward.7} parent=1 // pred_check
      _
    $region19: #{model_forward.7} parent=1 // pred_check_branch
      %20 = sbr.rel (0) target = $region21
    $region20: #{model_forward.7} parent=1 // pred_region
      _
    $region21: #{model_forward.7} parent=1 // pred_fallthru
      _
    %v22 = vld [vmem:[%s0] sm:$0xff]
    %v23 = vld [vmem:[%s1] sm:$0xf]
    %v24 = vld [vmem:[%s1 + $0x4] sm:$0xf]
    %v25 = vld [vmem:[%s1 + $0x8] sm:$0xf]
    %v26 = vld [vmem:[%s1 + $0xc] sm:$0xf]
    %v27 = vld [vmem:[%s1 + $0x10] sm:$0xf]
    %v28 = vld [vmem:[%s1 + $0x14] sm:$0xf]
    %v29 = vld [vmem:[%s1 + $0x18] sm:$0xf]
    %v30 = vld [vmem:[%s1 + $0x1c] sm:$0xf]
    %v31 = vld [vmem:[%s1 + $0x20] sm:$0xf]
    %v32 = vld [vmem:[%s1 + $0x24] sm:$0xf]
    %v33 = vld [vmem:[%s1 + $0x28] sm:$0xf]
    %v34 = vld [vmem:[%s1 + $0x2c] sm:$0xf]
    %v35 = vld [vmem:[%s1 + $0x30] sm:$0xf]
    %v36 = vld [vmem:[%s1 + $0x34] sm:$0xf]
    %v37 = vld [vmem:[%s1 + $0x38] sm:$0xf]
    %v38 = vld [vmem:[%s1 + $0x3c] sm:$0xf]
    %v39 = vld [vmem:[%s1 + $0x40] sm:$0xf]
    %v40 = vld [vmem:[%s1 + $0x44] sm:$0xf]
    %v41 = vld [vmem:[%s1 + $0x48] sm:$0xf]
    %v42 = vld [vmem:[%s1 + $0x4c] sm:$0xf]
    %v43 = vld [vmem:[%s1 + $0x50] sm:$0xf]
    %v44 = vld [vmem:[%s1 + $0x54] sm:$0xf]
    %v45 = vld [vmem:[%s1 + $0x58] sm:$0xf]
    %v46 = vld [vmem:[%s1 + $0x5c] sm:$0xf]
    %v47 = vld [vmem:[%s1 + $0x60] sm:$0xf]
    %v48 = vld [vmem:[%s1 + $0x64] sm:$0xf]
    %v49 = vld [vmem:[%s1 + $0x68] sm:$0xf]
    %v50 = vld [vmem:[%s1 + $0x6c] sm:$0xf]
    %v51 = vld [vmem:[%s1 + $0x70] sm:$0xf]
    %v52 = vld [vmem:[%s1 + $0x74] sm:$0xf]
    %v53 = vld [vmem:[%s1 + $0x78] sm:$0xf]
    %v54 = vld [vmem:[%s1 + $0x7c] sm:$0xf]
    %v55 = vld [vmem:[%s1 + $0x80] sm:$0xf]
    %v56 = vld [vmem:[%s1 + $0x84] sm:$0xf]
    %v57 = vld [vmem:[%s1 + $0x88] sm:$0xf]
    %v58 = vld [vmem:[%s1 + $0x8c] sm:$0xf]
    %v59 = vld [vmem:[%s1 + $0x90] sm:$0xf]
    %v60 = vld [vmem:[%s1 + $0x94] sm:$0xf]
    %v61 = vld [vmem:[%s1 + $0x98] sm:$0xf]
    %v62 = vld [vmem:[%s1 + $0x9c] sm:$0xf]
    %v63 = vld [vmem:[%s1 + $0xa0] sm:$0xf]
    %v64 = vld [vmem:[%s1 + $0xa4] sm:$0xf]
    %v65 = vld [vmem:[%s1 + $0xa8] sm:$0xf]
    %v66 = vld [vmem:[%s1 + $0xac] sm:$0xf]
    %v67 = vld [vmem:[%s1 + $0xb0] sm:$0xf]
    %v68 = vld [vmem:[%s1 + $0xb4] sm:$0xf]
    %v69 = vld [vmem:[%s1 + $0xb8] sm:$0xf]
    %v70 = vld [vmem:[%s1 + $0xbc] sm:$0xf]
    %v71 = vld [vmem:[%s1 + $0xc0] sm:$0xf]
    %v72 = vld [vmem:[%s1 + $0xc4] sm:$0xf]
    %v73 = vld [vmem:[%s1 + $0xc8] sm:$0xf]
    %v74 = vld [vmem:[%s1 + $0xcc] sm:$0xf]
    %v75 = vld [vmem:[%s1 + $0xd0] sm:$0xf]
    %v76 = vld [vmem:[%s1 + $0xd4] sm:$0xf]
    %v77 = vld [vmem:[%s1 + $0xd8] sm:$0xf]
    %v78 = vld [vmem:[%s1 + $0xdc] sm:$0xf]
    %v79 = vld [vmem:[%s1 + $0xe0] sm:$0xf]
    %v80 = vld [vmem:[%s1 + $0xe4] sm:$0xf]
    %v81 = vld [vmem:[%s1 + $0xe8] sm:$0xf]
    %v82 = vld [vmem:[%s1 + $0xec] sm:$0xf]
    %v83 = vld [vmem:[%s1 + $0xf0] sm:$0xf]
    %v84 = vld [vmem:[%s1 + $0xf4] sm:$0xf]
    %v85 = vld [vmem:[%s1 + $0xf8] sm:$0xf]
    %v86 = vld [vmem:[%s1 + $0xfc] sm:$0xf]
    %v87 = vld [vmem:[%s1 + $0x100] sm:$0xf]
    %v88 = vld [vmem:[%s1 + $0x104] sm:$0xf]
    %v89 = vld [vmem:[%s1 + $0x108] sm:$0xf]
    %v90 = vld [vmem:[%s1 + $0x10c] sm:$0xf]
    %v91 = vld [vmem:[%s1 + $0x110] sm:$0xf]
    %v92 = vld [vmem:[%s1 + $0x114] sm:$0xf]
    %v93 = vld [vmem:[%s1 + $0x118] sm:$0xf]
    %v94 = vld [vmem:[%s1 + $0x11c] sm:$0xf]
    %v95 = vld [vmem:[%s1 + $0x120] sm:$0xf]
    %v96 = vld [vmem:[%s1 + $0x124] sm:$0xf]
    %v97 = vld [vmem:[%s1 + $0x128] sm:$0xf]
    %v98 = vld [vmem:[%s1 + $0x12c] sm:$0xf]
    %v99 = vld [vmem:[%s1 + $0x130] sm:$0xf]
    %v100 = vld [vmem:[%s1 + $0x134] sm:$0xf]
    %v101 = vld [vmem:[%s1 + $0x138] sm:$0xf]
    %v102 = vld [vmem:[%s1 + $0x13c] sm:$0xf]
    %v103 = vld [vmem:[%s1 + $0x140] sm:$0xf]
    %v104 = vld [vmem:[%s1 + $0x144] sm:$0xf]
    %v105 = vld [vmem:[%s1 + $0x148] sm:$0xf]
    %v106 = vld [vmem:[%s1 + $0x14c] sm:$0xf]
    %v107 = vld [vmem:[%s1 + $0x150] sm:$0xf]
    %v108 = vld [vmem:[%s1 + $0x154] sm:$0xf]
    %v109 = vld [vmem:[%s1 + $0x158] sm:$0xf]
    %v110 = vld [vmem:[%s1 + $0x15c] sm:$0xf]
    %v111 = vld [vmem:[%s1 + $0x160] sm:$0xf]
    %v112 = vld [vmem:[%s1 + $0x164] sm:$0xf]
    %v113 = vld [vmem:[%s1 + $0x168] sm:$0xf]
    %v114 = vld [vmem:[%s1 + $0x16c] sm:$0xf]
    %v115 = vld [vmem:[%s1 + $0x170] sm:$0xf]
    %v116 = vld [vmem:[%s1 + $0x174] sm:$0xf]
    %v117 = vld [vmem:[%s1 + $0x178] sm:$0xf]
    %v118 = vld [vmem:[%s1 + $0x17c] sm:$0xf]
    %v119 = vld [vmem:[%s1 + $0x180] sm:$0xf]
    %v120 = vld [vmem:[%s1 + $0x184] sm:$0xf]
    %v121 = vld [vmem:[%s1 + $0x188] sm:$0xf]
    %v122 = vld [vmem:[%s1 + $0x18c] sm:$0xf]
    %v123 = vld [vmem:[%s1 + $0x190] sm:$0xf]
    %v124 = vld [vmem:[%s1 + $0x194] sm:$0xf]
    %v125 = vld [vmem:[%s1 + $0x198] sm:$0xf]
    %v126 = vld [vmem:[%s1 + $0x19c] sm:$0xf]
    %v127 = vld [vmem:[%s1 + $0x1a0] sm:$0xf]
    %v128 = vld [vmem:[%s1 + $0x1a4] sm:$0xf]
    %v129 = vld [vmem:[%s1 + $0x1a8] sm:$0xf]
    %v130 = vld [vmem:[%s1 + $0x1ac] sm:$0xf]
    %v131 = vld [vmem:[%s1 + $0x1b0] sm:$0xf]
    %v132 = vld [vmem:[%s1 + $0x1b4] sm:$0xf]
    %v133 = vld [vmem:[%s1 + $0x1b8] sm:$0xf]
    %v134 = vld [vmem:[%s1 + $0x1bc] sm:$0xf]
    %v135 = vld [vmem:[%s1 + $0x1c0] sm:$0xf]
    %v136 = vld [vmem:[%s1 + $0x1c4] sm:$0xf]
    %v137 = vld [vmem:[%s1 + $0x1c8] sm:$0xf]
    %v138 = vld [vmem:[%s1 + $0x1cc] sm:$0xf]
    %v139 = vld [vmem:[%s1 + $0x1d0] sm:$0xf]
    %v140 = vld [vmem:[%s1 + $0x1d4] sm:$0xf]
    %v141 = vld [vmem:[%s1 + $0x1d8] sm:$0xf]
    %v142 = vld [vmem:[%s1 + $0x1dc] sm:$0xf]
    %v143 = vld [vmem:[%s1 + $0x1e0] sm:$0xf]
    %v144 = vld [vmem:[%s1 + $0x1e4] sm:$0xf]
    %v145 = vld [vmem:[%s1 + $0x1e8] sm:$0xf]
    %v146 = vld [vmem:[%s1 + $0x1ec] sm:$0xf]
    %v147 = vld [vmem:[%s1 + $0x1f0] sm:$0xf]
    %v148 = vld [vmem:[%s1 + $0x1f4] sm:$0xf]
    %v149 = vld [vmem:[%s1 + $0x1f8] sm:$0xf]
    %v150 = vld [vmem:[%s1 + $0x1fc] sm:$0xf]
    %v151 = vld [vmem:[%s2] sm:$0x1]
    %v153 = vlaneseq
    %v154 = vshrl.u32 %v153, 7
    %v155 = vsub.s32 0, %v154
    %v156 = vrot.slane %v151, %v155
    %v159 = vcombine.high %v22, %v22
    %v161 = vunpack.c.l.s4 1966171168
    %v162 = vunpack.c.0.s8 %v161
    %v163 = vlaneseq
    %v164 = vshrl.u32 %v163, 7
    %v165 = vsub.s32 %v162, %v164
    %v166 = vrot.slane %v22, %v165
    %v168 = vunpack.c.l.s4 1966171168
    %v169 = vunpack.c.0.s8 %v168
    %v170 = vlaneseq
    %v171 = vshrl.u32 %v170, 7
    %v172 = vsub.s32 %v169, %v171
    %v173 = vrot.slane %v159, %v172
    %v174 = vcombine.high %v166, %v166
    %v175 = vcombine.high %v173, %v173
    %v177 = vunpack.c.l.s4 1966171168
    %v178 = vunpack.c.0.s8 %v177
    %v179 = vlaneseq
    %v180 = vshrl.u32 %v179, 7
    %v181 = vsub.s32 %v178, %v180
    %v182 = vrot.slane %v166, %v181
    %v184 = vunpack.c.l.s4 1966171168
    %v185 = vunpack.c.0.s8 %v184
    %v186 = vlaneseq
    %v187 = vshrl.u32 %v186, 7
    %v188 = vsub.s32 %v185, %v187
    %v189 = vrot.slane %v173, %v188
    %v191 = vunpack.c.l.s4 1966171168
    %v192 = vunpack.c.0.s8 %v191
    %v193 = vlaneseq
    %v194 = vshrl.u32 %v193, 7
    %v195 = vsub.s32 %v192, %v194
    %v196 = vrot.slane %v174, %v195
    %v198 = vunpack.c.l.s4 1966171168
    %v199 = vunpack.c.0.s8 %v198
    %v200 = vlaneseq
    %v201 = vshrl.u32 %v200, 7
    %v202 = vsub.s32 %v199, %v201
    %v203 = vrot.slane %v175, %v202
    %v204 = vcombine.high %v182, %v182
    %v205 = vcombine.high %v189, %v189
    %v206 = vcombine.high %v196, %v196
    %v207 = vcombine.high %v203, %v203
    %v344 = vunpack.c.l.b16 %v23
    %v345 = vunpack.c.l.b16 %v24
    %v346 = vunpack.c.l.b16 %v25
    %v347 = vunpack.c.l.b16 %v26
    %v348 = vunpack.c.l.b16 %v27
    %v349 = vunpack.c.l.b16 %v28
    %v350 = vunpack.c.l.b16 %v29
    %v351 = vunpack.c.l.b16 %v30
    %v352 = vunpack.c.l.b16 %v31
    %v353 = vunpack.c.l.b16 %v32
    %v354 = vunpack.c.l.b16 %v33
    %v355 = vunpack.c.l.b16 %v34
    %v356 = vunpack.c.l.b16 %v35
    %v357 = vunpack.c.l.b16 %v36
    %v358 = vunpack.c.l.b16 %v37
    %v359 = vunpack.c.l.b16 %v38
    %v360 = vunpack.c.l.b16 %v39
    %v361 = vunpack.c.l.b16 %v40
    %v362 = vunpack.c.l.b16 %v41
    %v363 = vunpack.c.l.b16 %v42
    %v364 = vunpack.c.l.b16 %v43
    %v365 = vunpack.c.l.b16 %v44
    %v366 = vunpack.c.l.b16 %v45
    %v367 = vunpack.c.l.b16 %v46
    %v368 = vunpack.c.l.b16 %v47
    %v369 = vunpack.c.l.b16 %v48
    %v370 = vunpack.c.l.b16 %v49
    %v371 = vunpack.c.l.b16 %v50
    %v372 = vunpack.c.l.b16 %v51
    %v373 = vunpack.c.l.b16 %v52
    %v374 = vunpack.c.l.b16 %v53
    %v375 = vunpack.c.l.b16 %v54
    %v376 = vunpack.c.l.b16 %v55
    %v377 = vunpack.c.l.b16 %v56
    %v378 = vunpack.c.l.b16 %v57
    %v379 = vunpack.c.l.b16 %v58
    %v380 = vunpack.c.l.b16 %v59
    %v381 = vunpack.c.l.b16 %v60
    %v382 = vunpack.c.l.b16 %v61
    %v383 = vunpack.c.l.b16 %v62
    %v384 = vunpack.c.l.b16 %v63
    %v385 = vunpack.c.l.b16 %v64
    %v386 = vunpack.c.l.b16 %v65
    %v387 = vunpack.c.l.b16 %v66
    %v388 = vunpack.c.l.b16 %v67
    %v389 = vunpack.c.l.b16 %v68
    %v390 = vunpack.c.l.b16 %v69
    %v391 = vunpack.c.l.b16 %v70
    %v392 = vunpack.c.l.b16 %v71
    %v393 = vunpack.c.l.b16 %v72
    %v394 = vunpack.c.l.b16 %v73
    %v395 = vunpack.c.l.b16 %v74
    %v396 = vunpack.c.l.b16 %v75
    %v397 = vunpack.c.l.b16 %v76
    %v398 = vunpack.c.l.b16 %v77
    %v399 = vunpack.c.l.b16 %v78
    %v400 = vunpack.c.l.b16 %v79
    %v401 = vunpack.c.l.b16 %v80
    %v402 = vunpack.c.l.b16 %v81
    %v403 = vunpack.c.l.b16 %v82
    %v404 = vunpack.c.l.b16 %v83
    %v405 = vunpack.c.l.b16 %v84
    %v406 = vunpack.c.l.b16 %v85
    %v407 = vunpack.c.l.b16 %v86
    %v408 = vunpack.c.l.b16 %v87
    %v409 = vunpack.c.l.b16 %v88
    %v410 = vunpack.c.l.b16 %v89
    %v411 = vunpack.c.l.b16 %v90
    %v412 = vunpack.c.l.b16 %v91
    %v413 = vunpack.c.l.b16 %v92
    %v414 = vunpack.c.l.b16 %v93
    %v415 = vunpack.c.l.b16 %v94
    %v416 = vunpack.c.l.b16 %v95
    %v417 = vunpack.c.l.b16 %v96
    %v418 = vunpack.c.l.b16 %v97
    %v419 = vunpack.c.l.b16 %v98
    %v420 = vunpack.c.l.b16 %v99
    %v421 = vunpack.c.l.b16 %v100
    %v422 = vunpack.c.l.b16 %v101
    %v423 = vunpack.c.l.b16 %v102
    %v424 = vunpack.c.l.b16 %v103
    %v425 = vunpack.c.l.b16 %v104
    %v426 = vunpack.c.l.b16 %v105
    %v427 = vunpack.c.l.b16 %v106
    %v428 = vunpack.c.l.b16 %v107
    %v429 = vunpack.c.l.b16 %v108
    %v430 = vunpack.c.l.b16 %v109
    %v431 = vunpack.c.l.b16 %v110
    %v432 = vunpack.c.l.b16 %v111
    %v433 = vunpack.c.l.b16 %v112
    %v434 = vunpack.c.l.b16 %v113
    %v435 = vunpack.c.l.b16 %v114
    %v436 = vunpack.c.l.b16 %v115
    %v437 = vunpack.c.l.b16 %v116
    %v438 = vunpack.c.l.b16 %v117
    %v439 = vunpack.c.l.b16 %v118
    %v440 = vunpack.c.l.b16 %v119
    %v441 = vunpack.c.l.b16 %v120
    %v442 = vunpack.c.l.b16 %v121
    %v443 = vunpack.c.l.b16 %v122
    %v444 = vunpack.c.l.b16 %v123
    %v445 = vunpack.c.l.b16 %v124
    %v446 = vunpack.c.l.b16 %v125
    %v447 = vunpack.c.l.b16 %v126
    %v448 = vunpack.c.l.b16 %v127
    %v449 = vunpack.c.l.b16 %v128
    %v450 = vunpack.c.l.b16 %v129
    %v451 = vunpack.c.l.b16 %v130
    %v452 = vunpack.c.l.b16 %v131
    %v453 = vunpack.c.l.b16 %v132
    %v454 = vunpack.c.l.b16 %v133
    %v455 = vunpack.c.l.b16 %v134
    %v456 = vunpack.c.l.b16 %v135
    %v457 = vunpack.c.l.b16 %v136
    %v458 = vunpack.c.l.b16 %v137
    %v459 = vunpack.c.l.b16 %v138
    %v460 = vunpack.c.l.b16 %v139
    %v461 = vunpack.c.l.b16 %v140
    %v462 = vunpack.c.l.b16 %v141
    %v463 = vunpack.c.l.b16 %v142
    %v464 = vunpack.c.l.b16 %v143
    %v465 = vunpack.c.l.b16 %v144
    %v466 = vunpack.c.l.b16 %v145
    %v467 = vunpack.c.l.b16 %v146
    %v468 = vunpack.c.l.b16 %v147
    %v469 = vunpack.c.l.b16 %v148
    %v470 = vunpack.c.l.b16 %v149
    %v471 = vunpack.c.l.b16 %v150
    %v472 = vpack.c.b16 %v345, %v344
    %v473 = vpack.c.b16 %v347, %v346
    %v474 = vpack.c.b16 %v349, %v348
    %v475 = vpack.c.b16 %v351, %v350
    %v476 = vpack.c.b16 %v353, %v352
    %v477 = vpack.c.b16 %v355, %v354
    %v478 = vpack.c.b16 %v357, %v356
    %v479 = vpack.c.b16 %v359, %v358
    %v480 = vpack.c.b16 %v361, %v360
    %v481 = vpack.c.b16 %v363, %v362
    %v482 = vpack.c.b16 %v365, %v364
    %v483 = vpack.c.b16 %v367, %v366
    %v484 = vpack.c.b16 %v369, %v368
    %v485 = vpack.c.b16 %v371, %v370
    %v486 = vpack.c.b16 %v373, %v372
    %v487 = vpack.c.b16 %v375, %v374
    %v488 = vpack.c.b16 %v377, %v376
    %v489 = vpack.c.b16 %v379, %v378
    %v490 = vpack.c.b16 %v381, %v380
    %v491 = vpack.c.b16 %v383, %v382
    %v492 = vpack.c.b16 %v385, %v384
    %v493 = vpack.c.b16 %v387, %v386
    %v494 = vpack.c.b16 %v389, %v388
    %v495 = vpack.c.b16 %v391, %v390
    %v496 = vpack.c.b16 %v393, %v392
    %v497 = vpack.c.b16 %v395, %v394
    %v498 = vpack.c.b16 %v397, %v396
    %v499 = vpack.c.b16 %v399, %v398
    %v500 = vpack.c.b16 %v401, %v400
    %v501 = vpack.c.b16 %v403, %v402
    %v502 = vpack.c.b16 %v405, %v404
    %v503 = vpack.c.b16 %v407, %v406
    %v504 = vpack.c.b16 %v409, %v408
    %v505 = vpack.c.b16 %v411, %v410
    %v506 = vpack.c.b16 %v413, %v412
    %v507 = vpack.c.b16 %v415, %v414
    %v508 = vpack.c.b16 %v417, %v416
    %v509 = vpack.c.b16 %v419, %v418
    %v510 = vpack.c.b16 %v421, %v420
    %v511 = vpack.c.b16 %v423, %v422
    %v512 = vpack.c.b16 %v425, %v424
    %v513 = vpack.c.b16 %v427, %v426
    %v514 = vpack.c.b16 %v429, %v428
    %v515 = vpack.c.b16 %v431, %v430
    %v516 = vpack.c.b16 %v433, %v432
    %v517 = vpack.c.b16 %v435, %v434
    %v518 = vpack.c.b16 %v437, %v436
    %v519 = vpack.c.b16 %v439, %v438
    %v520 = vpack.c.b16 %v441, %v440
    %v521 = vpack.c.b16 %v443, %v442
    %v522 = vpack.c.b16 %v445, %v444
    %v523 = vpack.c.b16 %v447, %v446
    %v524 = vpack.c.b16 %v449, %v448
    %v525 = vpack.c.b16 %v451, %v450
    %v526 = vpack.c.b16 %v453, %v452
    %v527 = vpack.c.b16 %v455, %v454
    %v528 = vpack.c.b16 %v457, %v456
    %v529 = vpack.c.b16 %v459, %v458
    %v530 = vpack.c.b16 %v461, %v460
    %v531 = vpack.c.b16 %v463, %v462
    %v532 = vpack.c.b16 %v465, %v464
    %v533 = vpack.c.b16 %v467, %v466
    %v534 = vpack.c.b16 %v469, %v468
    %v535 = vpack.c.b16 %v471, %v470
    %600 = vmatprep.subr.bf16.mxu0 0
    %601 = vmatpush1.bf16.msra.mxu0 %v479
    %602 = vmatprep.subr.bf16.mxu0 0
    %603 = vmatpush1.bf16.msra.mxu0 %v478
    %604 = vmatprep.subr.bf16.mxu0 0
    %605 = vmatpush1.bf16.msra.mxu0 %v477
    %606 = vmatprep.subr.bf16.mxu0 0
    %607 = vmatpush1.bf16.msra.mxu0 %v476
    %608 = vmatprep.subr.bf16.mxu0 0
    %609 = vmatpush1.bf16.msra.mxu0 %v475
    %610 = vmatprep.subr.bf16.mxu0 0
    %611 = vmatpush1.bf16.msra.mxu0 %v474
    %612 = vmatprep.subr.bf16.mxu0 0
    %613 = vmatpush1.bf16.msra.mxu0 %v473
    %614 = vmatprep.subr.bf16.mxu0 0
    %615 = vmatpush1.bf16.msra.mxu0 %v472
    %616 = vmatprep.subr.bf16.mxu0 0
    %617 = vmatpush2.bf16.msra.mxu0 %v487
    %618 = vmatprep.subr.bf16.mxu0 0
    %619 = vmatpush2.bf16.msra.mxu0 %v486
    %620 = vmatprep.subr.bf16.mxu0 0
    %621 = vmatpush2.bf16.msra.mxu0 %v485
    %622 = vmatprep.subr.bf16.mxu0 0
    %623 = vmatpush2.bf16.msra.mxu0 %v484
    %624 = vmatprep.subr.bf16.mxu0 0
    %625 = vmatpush2.bf16.msra.mxu0 %v483
    %626 = vmatprep.subr.bf16.mxu0 0
    %627 = vmatpush2.bf16.msra.mxu0 %v482
    %628 = vmatprep.subr.bf16.mxu0 0
    %629 = vmatpush2.bf16.msra.mxu0 %v481
    %630 = vmatprep.subr.bf16.mxu0 0
    %631 = vmatpush2.bf16.msra.mxu0 %v480
    %632 = vmatprep.mubr.bf16.mxu0 %v196
    %633 = vmatmul.mubr.bf16.gmra.mxu0 %v182
    %v634 = vpop.f32.mrf.mxu0
    %v635 = vadd.f32 %v156, %v634
    %v636 = vpop.f32.mrf.mxu0
    %v637 = vpop.f32.mrf.mxu0
    %v638 = vpop.f32.mrf.mxu0
    %639 = vdwg.mxu0
    %640 = vmatprep.subr.bf16.mxu0 0
    %641 = vmatpush1.bf16.msra.mxu0 %v495
    %642 = vmatprep.subr.bf16.mxu0 0
    %643 = vmatpush1.bf16.msra.mxu0 %v494
    %644 = vmatprep.subr.bf16.mxu0 0
    %645 = vmatpush1.bf16.msra.mxu0 %v493
    %646 = vmatprep.subr.bf16.mxu0 0
    %647 = vmatpush1.bf16.msra.mxu0 %v492
    %648 = vmatprep.subr.bf16.mxu0 0
    %649 = vmatpush1.bf16.msra.mxu0 %v491
    %650 = vmatprep.subr.bf16.mxu0 0
    %651 = vmatpush1.bf16.msra.mxu0 %v490
    %652 = vmatprep.subr.bf16.mxu0 0
    %653 = vmatpush1.bf16.msra.mxu0 %v489
    %654 = vmatprep.subr.bf16.mxu0 0
    %655 = vmatpush1.bf16.msra.mxu0 %v488
    %656 = vmatprep.subr.bf16.mxu0 0
    %657 = vmatpush2.bf16.msra.mxu0 %v503
    %658 = vmatprep.subr.bf16.mxu0 0
    %659 = vmatpush2.bf16.msra.mxu0 %v502
    %660 = vmatprep.subr.bf16.mxu0 0
    %661 = vmatpush2.bf16.msra.mxu0 %v501
    %662 = vmatprep.subr.bf16.mxu0 0
    %663 = vmatpush2.bf16.msra.mxu0 %v500
    %664 = vmatprep.subr.bf16.mxu0 0
    %665 = vmatpush2.bf16.msra.mxu0 %v499
    %666 = vmatprep.subr.bf16.mxu0 0
    %667 = vmatpush2.bf16.msra.mxu0 %v498
    %668 = vmatprep.subr.bf16.mxu0 0
    %669 = vmatpush2.bf16.msra.mxu0 %v497
    %670 = vmatprep.subr.bf16.mxu0 0
    %671 = vmatpush2.bf16.msra.mxu0 %v496
    %672 = vmatprep.mubr.bf16.mxu0 %v206
    %673 = vmatmul.mubr.bf16.gmra.mxu0 %v204
    %v674 = vpop.f32.mrf.mxu0
    %v675 = vadd.f32 %v635, %v674
    %v676 = vpop.f32.mrf.mxu0
    %v677 = vpop.f32.mrf.mxu0
    %v678 = vpop.f32.mrf.mxu0
    %679 = vdwg.mxu0
    %680 = vmatprep.subr.bf16.mxu0 0
    %681 = vmatpush1.bf16.msra.mxu0 %v511
    %682 = vmatprep.subr.bf16.mxu0 0
    %683 = vmatpush1.bf16.msra.mxu0 %v510
    %684 = vmatprep.subr.bf16.mxu0 0
    %685 = vmatpush1.bf16.msra.mxu0 %v509
    %686 = vmatprep.subr.bf16.mxu0 0
    %687 = vmatpush1.bf16.msra.mxu0 %v508
    %688 = vmatprep.subr.bf16.mxu0 0
    %689 = vmatpush1.bf16.msra.mxu0 %v507
    %690 = vmatprep.subr.bf16.mxu0 0
    %691 = vmatpush1.bf16.msra.mxu0 %v506
    %692 = vmatprep.subr.bf16.mxu0 0
    %693 = vmatpush1.bf16.msra.mxu0 %v505
    %694 = vmatprep.subr.bf16.mxu0 0
    %695 = vmatpush1.bf16.msra.mxu0 %v504
    %696 = vmatprep.subr.bf16.mxu0 0
    %697 = vmatpush2.bf16.msra.mxu0 %v519
    %698 = vmatprep.subr.bf16.mxu0 0
    %699 = vmatpush2.bf16.msra.mxu0 %v518
    %700 = vmatprep.subr.bf16.mxu0 0
    %701 = vmatpush2.bf16.msra.mxu0 %v517
    %702 = vmatprep.subr.bf16.mxu0 0
    %703 = vmatpush2.bf16.msra.mxu0 %v516
    %704 = vmatprep.subr.bf16.mxu0 0
    %705 = vmatpush2.bf16.msra.mxu0 %v515
    %706 = vmatprep.subr.bf16.mxu0 0
    %707 = vmatpush2.bf16.msra.mxu0 %v514
    %708 = vmatprep.subr.bf16.mxu0 0
    %709 = vmatpush2.bf16.msra.mxu0 %v513
    %710 = vmatprep.subr.bf16.mxu0 0
    %711 = vmatpush2.bf16.msra.mxu0 %v512
    %712 = vmatprep.mubr.bf16.mxu0 %v203
    %713 = vmatmul.mubr.bf16.gmra.mxu0 %v189
    %v714 = vpop.f32.mrf.mxu0
    %v715 = vadd.f32 %v675, %v714
    %v716 = vpop.f32.mrf.mxu0
    %v717 = vpop.f32.mrf.mxu0
    %v718 = vpop.f32.mrf.mxu0
    %719 = vdwg.mxu0
    %720 = vmatprep.subr.bf16.mxu0 0
    %721 = vmatpush1.bf16.msra.mxu0 %v527
    %722 = vmatprep.subr.bf16.mxu0 0
    %723 = vmatpush1.bf16.msra.mxu0 %v526
    %724 = vmatprep.subr.bf16.mxu0 0
    %725 = vmatpush1.bf16.msra.mxu0 %v525
    %726 = vmatprep.subr.bf16.mxu0 0
    %727 = vmatpush1.bf16.msra.mxu0 %v524
    %728 = vmatprep.subr.bf16.mxu0 0
    %729 = vmatpush1.bf16.msra.mxu0 %v523
    %730 = vmatprep.subr.bf16.mxu0 0
    %731 = vmatpush1.bf16.msra.mxu0 %v522
    %732 = vmatprep.subr.bf16.mxu0 0
    %733 = vmatpush1.bf16.msra.mxu0 %v521
    %734 = vmatprep.subr.bf16.mxu0 0
    %735 = vmatpush1.bf16.msra.mxu0 %v520
    %736 = vmatprep.subr.bf16.mxu0 0
    %737 = vmatpush2.bf16.msra.mxu0 %v535
    %738 = vmatprep.subr.bf16.mxu0 0
    %739 = vmatpush2.bf16.msra.mxu0 %v534
    %740 = vmatprep.subr.bf16.mxu0 0
    %741 = vmatpush2.bf16.msra.mxu0 %v533
    %742 = vmatprep.subr.bf16.mxu0 0
    %743 = vmatpush2.bf16.msra.mxu0 %v532
    %744 = vmatprep.subr.bf16.mxu0 0
    %745 = vmatpush2.bf16.msra.mxu0 %v531
    %746 = vmatprep.subr.bf16.mxu0 0
    %747 = vmatpush2.bf16.msra.mxu0 %v530
    %748 = vmatprep.subr.bf16.mxu0 0
    %749 = vmatpush2.bf16.msra.mxu0 %v529
    %750 = vmatprep.subr.bf16.mxu0 0
    %751 = vmatpush2.bf16.msra.mxu0 %v528
    %752 = vmatprep.mubr.bf16.mxu0 %v207
    %753 = vmatmul.mubr.bf16.gmra.mxu0 %v205
    %v754 = vpop.f32.mrf.mxu0
    %v755 = vadd.f32 %v715, %v754
    %v756 = vpop.f32.mrf.mxu0
    %v757 = vpop.f32.mrf.mxu0
    %v758 = vpop.f32.mrf.mxu0
    %759 = vdwg.mxu0
    %v760 = vld [vmem:[%s3] sm:$0xff]
    %v761 = vld [vmem:[%s3 + $0x8] sm:$0xff]
    %v762 = vld [vmem:[%s3 + $0x10] sm:$0xff]
    %v763 = vld [vmem:[%s3 + $0x18] sm:$0xff]
    %v764 = vld [vmem:[%s3 + $0x20] sm:$0xff]
    %v765 = vld [vmem:[%s3 + $0x28] sm:$0xff]
    %v766 = vld [vmem:[%s3 + $0x30] sm:$0xff]
    %v767 = vld [vmem:[%s3 + $0x38] sm:$0xff]
    %v768 = vld [vmem:[%s4] sm:$0x1]
    %v770 = vlaneseq
    %v771 = vshrl.u32 %v770, 7
    %v772 = vsub.s32 0, %v771
    %v773 = vrot.slane %v768, %v772
    %vm775 = vcmask 523264
    %v777 = vsel %vm775, %v755, 0
    %779 = vmatprep.subr.mxu0 0.0
    %780 = vmatpush1.msra.mxu0 0.0
    %781 = vmatprep.subr.mxu0 0.0
    %782 = vmatpush1.msra.mxu0 0.0
    %783 = vmatprep.subr.mxu0 0.0
    %784 = vmatpush1.msra.mxu0 0.0
    %785 = vmatprep.subr.mxu0 0.0
    %786 = vmatpush1.msra.mxu0 0.0
    %787 = vmatprep.subr.mxu0 0.0
    %788 = vmatpush1.msra.mxu0 0.0
    %789 = vmatprep.subr.mxu0 0.0
    %790 = vmatpush1.msra.mxu0 0.0
    %791 = vmatprep.subr.mxu0 0.0
    %792 = vmatpush1.msra.mxu0 0.0
    %793 = vmatprep.subr.mxu0 0.0
    %794 = vmatpush1.msra.mxu0 0.0
    %795 = vmatprep.subr.mxu0 0.0
    %796 = vmatpush1.msra.mxu0 %v767
    %797 = vmatprep.subr.mxu0 0.0
    %798 = vmatpush1.msra.mxu0 %v766
    %799 = vmatprep.subr.mxu0 0.0
    %800 = vmatpush1.msra.mxu0 %v765
    %801 = vmatprep.subr.mxu0 0.0
    %802 = vmatpush1.msra.mxu0 %v764
    %803 = vmatprep.subr.mxu0 0.0
    %804 = vmatpush1.msra.mxu0 %v763
    %805 = vmatprep.subr.mxu0 0.0
    %806 = vmatpush1.msra.mxu0 %v762
    %807 = vmatprep.subr.mxu0 0.0
    %808 = vmatpush1.msra.mxu0 %v761
    %809 = vmatprep.subr.mxu0 0.0
    %810 = vmatpush1.msra.mxu0 %v760
    %811 = vmatprep.subr.mxu0 0.0
    %812 = vmatpush2.msra.mxu0 0.0
    %813 = vmatprep.subr.mxu0 0.0
    %814 = vmatpush2.msra.mxu0 0.0
    %815 = vmatprep.subr.mxu0 0.0
    %816 = vmatpush2.msra.mxu0 0.0
    %817 = vmatprep.subr.mxu0 0.0
    %818 = vmatpush2.msra.mxu0 0.0
    %819 = vmatprep.subr.mxu0 0.0
    %820 = vmatpush2.msra.mxu0 0.0
    %821 = vmatprep.subr.mxu0 0.0
    %822 = vmatpush2.msra.mxu0 0.0
    %823 = vmatprep.subr.mxu0 0.0
    %824 = vmatpush2.msra.mxu0 0.0
    %825 = vmatprep.subr.mxu0 0.0
    %826 = vmatpush2.msra.mxu0 0.0
    %827 = vmatprep.subr.mxu0 0.0
    %828 = vmatpush2.msra.mxu0 0.0
    %829 = vmatprep.subr.mxu0 0.0
    %830 = vmatpush2.msra.mxu0 0.0
    %831 = vmatprep.subr.mxu0 0.0
    %832 = vmatpush2.msra.mxu0 0.0
    %833 = vmatprep.subr.mxu0 0.0
    %834 = vmatpush2.msra.mxu0 0.0
    %835 = vmatprep.subr.mxu0 0.0
    %836 = vmatpush2.msra.mxu0 0.0
    %837 = vmatprep.subr.mxu0 0.0
    %838 = vmatpush2.msra.mxu0 0.0
    %839 = vmatprep.subr.mxu0 0.0
    %840 = vmatpush2.msra.mxu0 0.0
    %841 = vmatprep.subr.mxu0 0.0
    %842 = vmatpush2.msra.mxu0 0.0
    %843 = vmatprep.mubr.f32.mxu0 0.0
    %844 = vmatmul.mubr.f32.gmra.mxu0 %v777
    %v845 = vpop.f32.mrf.mxu0
    %v846 = vadd.f32 %v773, %v845
    %v847 = vpop.f32.mrf.mxu0
    %848 = vdwg.mxu0
    %vm849 = vcmask 74752
    %850 = vst.msk [vmem:[#allocation2] sm:$0x3] %vm849, %v846
    // Predicated region
    $region22: #{model_forward.7} parent=1 // pred_check
      _
    $region23: #{model_forward.7} parent=1 // pred_check_branch
      %852 = sbr.rel (0) target = $region25
    $region24: #{model_forward.7} parent=1 // pred_region
      %s854 = ssub.s32 32, 32
      %855 = vsyncadd [#allocation3], %s854
      %s857 = sshll.u32 [#allocation2], 4
      %s858 = int_to_ptr.vmem [resolvable:$true] %s857
      %860 = dma.vmem_to_hbm [thread:$0]  %s858, 32, %s5, [#allocation3]
    $region25: #{model_forward.7} parent=1 // pred_fallthru
      _
    // Predicated region
    $region26: #{model_forward.7} parent=1 // pred_check
      _
    $region27: #{model_forward.7} parent=1 // pred_check_branch
      %862 = sbr.rel (0) target = $region29
    $region28: #{model_forward.7} parent=1 // pred_region
      %863 = dma.done [#allocation3], 32
    $region29: #{model_forward.7} parent=1 // pred_fallthru
      _
    %864 = vsyncpa [#allocation3], 1

</llo_original>
